<compile_context>
chip_gen: v6e
topology: v6e:2x2x1
jax: 0.10.0
libtpu: 0.0.40
codegen_flags: <defaults>
</compile_context>

<pallas_src>
import functools

import jax
import jax.numpy as jnp
from jax.experimental import pallas as pl
from jax.experimental.pallas import tpu as pltpu

_EPS = 1e-5
_ROW_TARGET = 1024                    # rows (sublanes) per grid step
_COL_TARGET = 4096                    # max folded-weight lanes per grid step (kernel 1)
_VMEM_LIMIT = 32 * 1024 * 1024        # >= every generation's scoped default


def _pick_block(n_units, unit_rows, row_target, align=8):
    """Largest divisor d of n_units with d*unit_rows <= row_target and
    (d*unit_rows) % align == 0.  Falls back to the full extent (always a legal
    Pallas block shape) when nothing aligned fits."""
    if n_units * unit_rows <= row_target:
        return n_units
    limit = max(1, row_target // max(1, unit_rows))
    best = None
    for d in range(1, min(limit, n_units) + 1):
        if n_units % d == 0 and (d * unit_rows) % align == 0:
            best = d
    return best if best is not None else n_units


def _pick_col_block(total, target):
    """Largest divisor of total that is a multiple of 128 and <= target (for the
    folded-weight column tiling in kernel 1); falls back to the full extent."""
    if total <= target:
        return total
    best = None
    for d in range(128, min(total, target) + 1, 128):
        if total % d == 0:
            best = d
    return best if best is not None else total


# ----------------------------------------------------------------------------
# Kernel 1: fused GCN  -- one deep matmul (adjacency folded into the weights)
# ----------------------------------------------------------------------------
def _gcn_kernel(x_ref, w_ref, b_ref, g_ref):
    # x_ref: (TB, V*Cin) f32   rows = (n,t) pairs, lanes = (v, ci)
    # w_ref: (V*Cin, CB) f32   A (x) Wg  +  I (x) Wdown, BN folded
    # b_ref: (1, CB)     f32   adjacency-folded gcn bias + down bias + gcn BN shift
    # g_ref: (TB, CB)    bf16  g = relu(x @ Wbig + b), lane-dense (V*C wide)
    y = jnp.dot(x_ref[...], w_ref[...], preferred_element_type=jnp.float32)
    g_ref[...] = jnp.maximum(y + b_ref[...], 0.0).astype(g_ref.dtype)


# ----------------------------------------------------------------------------
# Kernel 2: fused TCN (9,1) conv + 1x1-conv residual + bias + ReLU
# ----------------------------------------------------------------------------
def _tcn_kernel(g_ref, x_ref, w_ref, b_ref, o_ref, gpad_ref, *,
                ksize, TT, T, V, C, Cin):
    # g_ref:   (1, T*V, C)       bf16  whole sample (resident across the i axis)
    # x_ref:   (1, TT*V, Cin)    f32   input chunk (residual 1x1 conv, fused in slab)
    # w_ref:   (ksize*C+Cin, C)  bf16  [temporal taps ; residual 1x1], BN folded
    # b_ref:   (1, C)            f32   bt_f + br_f
    # o_ref:   (1, TT*V, C)      f32
    # gpad_ref:((T+2*pad)*V, C)  bf16  scratch, persists across the i axis
    i = pl.program_id(1)
    pad = (ksize - 1) // 2
    R = TT * V
    halo = pad * V

    @pl.when(i == 0)
    def _():
        # Build the zero-padded, sample-resident copy of g once per sample.
        # This replaces the wrapper-side jnp.pad (a full HBM read+write of g)
        # with a cheap VMEM-local DMA.
        zeros = jnp.zeros((halo, C), gpad_ref.dtype)
        gpad_ref[pl.ds(0, halo), :] = zeros
        gpad_ref[pl.ds(halo + T * V, halo), :] = zeros
        pltpu.sync_copy(g_ref.at[0], gpad_ref.at[pl.ds(halo, T * V), :])

    start = i * R
    if R % 8 == 0:                     # only hint when actually true (V alignment)
        start = pl.multiple_of(start, 8)
    gsup = gpad_ref[pl.ds(start, R + 2 * halo), :]        # ((TT+2*pad)*V, C)

    # One deep matmul: the 9 shifted tap windows plus the residual input are
    # concatenated on the lane axis -> contraction depth ksize*C + Cin, instead
    # of 9 shallow C-deep dots with VALU accumulation.
    taps = [gsup[dt * V: dt * V + R, :] for dt in range(ksize)]
    slab = jnp.concatenate(taps + [x_ref[0].astype(gpad_ref.dtype)], axis=1)
    acc = jnp.dot(slab, w_ref[...], preferred_element_type=jnp.float32)
    o_ref[0] = jnp.maximum(acc + b_ref[...], 0.0).astype(o_ref.dtype)


# ----------------------------------------------------------------------------
# BN folding + deterministic synthetic params
# ----------------------------------------------------------------------------
def fold_bn(w, b, gamma, beta, eps=_EPS):
    s = gamma / jnp.sqrt(1.0 + eps)      # eval-mode BN, running mean 0 / var 1
    return w * s[None, :], b * s + beta


def init_params(key, cin, cout, K, V, ksize=9):
    ks = jax.random.split(key, 16)
    std = 0.1
    p = {}
    p["A"] = jax.random.normal(ks[0], (K, V, V), jnp.float32) * 0.2
    p["wg"] = jax.random.normal(ks[1], (cin, K * cout), jnp.float32) * std
    p["bg"] = jax.random.normal(ks[2], (K * cout,), jnp.float32) * std
    p["gamma_g"] = 1.0 + 0.1 * jax.random.normal(ks[3], (cout,), jnp.float32)
    p["beta_g"] = 0.1 * jax.random.normal(ks[4], (cout,), jnp.float32)
    p["wd"] = jax.random.normal(ks[5], (cin, cout), jnp.float32) * std
    p["bd"] = jax.random.normal(ks[6], (cout,), jnp.float32) * std
    p["gamma_d"] = 1.0 + 0.1 * jax.random.normal(ks[7], (cout,), jnp.float32)
    p["beta_d"] = 0.1 * jax.random.normal(ks[8], (cout,), jnp.float32)
    p["wt"] = jax.random.normal(ks[9], (ksize * cout, cout), jnp.float32) * std
    p["bt"] = jax.random.normal(ks[10], (cout,), jnp.float32) * std
    p["gamma_t"] = 1.0 + 0.1 * jax.random.normal(ks[11], (cout,), jnp.float32)
    p["beta_t"] = 0.1 * jax.random.normal(ks[12], (cout,), jnp.float32)
    p["wr"] = jax.random.normal(ks[13], (cin, cout), jnp.float32) * std
    p["br"] = jax.random.normal(ks[14], (cout,), jnp.float32) * std
    p["gamma_r"] = 1.0 + 0.1 * jax.random.normal(ks[15], (cout,), jnp.float32)
    p["beta_r"] = 0.1 * jax.random.normal(ks[0], (cout,), jnp.float32)
    return p


# ----------------------------------------------------------------------------
# STGKNBlock forward
# ----------------------------------------------------------------------------
def stgkn_block_forward(x, p, K, ksize=9, eps=_EPS):
    # x: (N, C_in, T, V) -- PyTorch NCHW convention
    N, Cin, T, V = x.shape
    C = p["gamma_g"].shape[0]
    pad = (ksize - 1) // 2
    NT = N * T

    # NCHW -> NHWC once.  When stacking STGKN blocks, keep activations NHWC
    # between blocks and drop this + the final transpose (they are full HBM passes).
    x_nhwc = jnp.transpose(x, (0, 2, 3, 1))              # (N, T, V, Cin)
    x2 = x_nhwc.reshape(NT, V * Cin)                     # rows (n,t), lanes (v,ci)
    x3 = x_nhwc.reshape(N, T * V, Cin)                   # rows (t,v) per sample

    # ---- fold eval-mode BN into the convs ----
    # TODO(synk): real checkpoints need s=gamma/sqrt(running_var+eps) and
    #             shift=beta-mean*s; training-mode batch stats not implemented.
    s_g = p["gamma_g"] / jnp.sqrt(1.0 + eps)
    wg_f = p["wg"] * jnp.tile(s_g, K)[None, :]           # gcn columns ordered (k, c)
    bg_f = p["bg"] * jnp.tile(s_g, K)
    wd_f, bd_f = fold_bn(p["wd"], p["bd"], p["gamma_d"], p["beta_d"], eps)
    wt_f, bt_f = fold_bn(p["wt"], p["bt"], p["gamma_t"], p["beta_t"], eps)
    wr_f, br_f = fold_bn(p["wr"], p["br"], p["gamma_r"], p["beta_r"], eps)

    # ---- fold the adjacency (and the 'down' 1x1) into one big weight ----
    #   Wbig[(v,ci),(w,c)] = sum_k A_k[v,w]*Wg_k[ci,c] + delta(v,w)*Wd[ci,c]
    # (trades ~(V*Cin/(K*Cin+K*V))x more FLOPs for a single deep, MXU-saturating
    #  matmul with a lane-dense V*C output; columns are tiled for large V*C).
    wg_k = wg_f.reshape(Cin, K, C)
    w_big = jnp.einsum("kvw,ikc->viwc", p["A"], wg_k)
    w_big = w_big + jnp.einsum("vw,ic->viwc", jnp.eye(V, dtype=jnp.float32), wd_f)
    w_big = w_big.reshape(V * Cin, V * C)
    b_big = (jnp.einsum("kw,kc->wc", p["A"].sum(axis=1), bg_f.reshape(K, C))
             + (bd_f + p["beta_g"])[None, :]).reshape(1, V * C)

    # ---------------- kernel 1: fused GCN ----------------
    TB = _pick_block(NT, 1, _ROW_TARGET, align=16)       # bf16 output => 16-row align
    CB = _pick_col_block(V * C, _COL_TARGET)
    g2 = pl.pallas_call(
        _gcn_kernel,
        out_shape=jax.ShapeDtypeStruct((NT, V * C), jnp.bfloat16),
        grid=(NT // TB, (V * C) // CB),
        in_specs=[
            pl.BlockSpec((TB, V * Cin), lambda i, j: (i, 0)),
            pl.BlockSpec((V * Cin, CB), lambda i, j: (0, j)),
            pl.BlockSpec((1, CB), lambda i, j: (0, j)),
        ],
        out_specs=pl.BlockSpec((TB, CB), lambda i, j: (i, j)),
        compiler_params=pltpu.CompilerParams(
            dimension_semantics=("parallel", "parallel"),
            vmem_limit_bytes=_VMEM_LIMIT),
    )(x2, w_big, b_big)

    # ---------------- kernel 2: fused TCN + residual + ReLU ----------------
    g3 = g2.reshape(N, T * V, C)                         # free row-major reshape
    w2 = jnp.concatenate([wt_f, wr_f], axis=0).astype(jnp.bfloat16)  # (ksize*C+Cin, C)
    b2 = (bt_f + br_f).reshape(1, C)

    TT = _pick_block(T, V, _ROW_TARGET, align=8)
    out3 = pl.pallas_call(
        functools.partial(_tcn_kernel, ksize=ksize, TT=TT, T=T, V=V, C=C, Cin=Cin),
        out_shape=jax.ShapeDtypeStruct((N, T * V, C), jnp.float32),
        grid=(N, T // TT),
        in_specs=[
            pl.BlockSpec((1, T * V, C), lambda n, i: (n, 0, 0)),
            pl.BlockSpec((1, TT * V, Cin), lambda n, i: (n, i, 0)),
            pl.BlockSpec((ksize * C + Cin, C), lambda n, i: (0, 0)),
            pl.BlockSpec((1, C), lambda n, i: (0, 0)),
        ],
        out_specs=pl.BlockSpec((1, TT * V, C), lambda n, i: (n, i, 0)),
        scratch_shapes=[pltpu.VMEM(((T + 2 * pad) * V, C), jnp.bfloat16)],
        compiler_params=pltpu.CompilerParams(
            # the inner axis carries the per-sample padded-g scratch -> "arbitrary";
            # the sample axis is free to shard across v7x's two TensorCores.
            dimension_semantics=("parallel", "arbitrary"),
            vmem_limit_bytes=_VMEM_LIMIT),
    )(g3, x3, w2, b2)

    out4 = out3.reshape(N, T, V, C)
    return jnp.transpose(out4, (0, 3, 1, 2))             # (N, C_out, T, V)


# ----------------------------------------------------------------------------
# Pure-JAX reference (NCHW, unfolded BN) for verification
# ----------------------------------------------------------------------------
def reference_forward(x, p, K, ksize=9, eps=_EPS):
    N, Cin, T, V = x.shape
    Cout = p["gamma_g"].shape[0]
    pad = (ksize - 1) // 2

    def bn(y, gamma, beta):
        s = gamma / jnp.sqrt(1.0 + eps)
        return y * s[None, :, None, None] + beta[None, :, None, None]

    def conv1x1(y, w, b):
        return jnp.einsum("nitv,io->notv", y, w) + b[None, :, None, None]

    res = bn(conv1x1(x, p["wr"], p["br"]), p["gamma_r"], p["beta_r"])

    y = conv1x1(x, p["wg"], p["bg"])
    y = y.reshape(N, K, Cout, T, V)
    z = jnp.einsum("nkctv,kvw->nctw", y, p["A"])
    z = bn(z, p["gamma_g"], p["beta_g"])
    down = bn(conv1x1(x, p["wd"], p["bd"]), p["gamma_d"], p["beta_d"])
    g = jax.nn.relu(z + down)

    gpad = jnp.pad(g, ((0, 0), (0, 0), (pad, pad), (0, 0)))
    wt = p["wt"].reshape(ksize, Cout, Cout)
    t = sum(jnp.einsum("nitv,io->notv", gpad[:, :, dt:dt + T], wt[dt])
            for dt in range(ksize)) + p["bt"][None, :, None, None]
    t = bn(t, p["gamma_t"], p["beta_t"])
    return jax.nn.relu(t + res)


if __name__ == "__main__":
    # Small but non-trivial: 2 temporal chunks in kernel 2 exercise both halo ends
    # and the scratch reuse across the inner grid axis.
    N, Cin, Cout, T, V, K = 2, 4, 8, 128, 16, 3
    key = jax.random.PRNGKey(0)
    kx, kp = jax.random.split(key)
    x = jax.random.normal(kx, (N, Cin, T, V), jnp.float32)
    params = init_params(kp, Cin, Cout, K, V)

    fwd = jax.jit(stgkn_block_forward, static_argnames=("K", "ksize"))
    out = fwd(x, params, K=K)
    out = jax.block_until_ready(out)

    ref = reference_forward(x, params, K)
    assert out.shape == (N, Cout, T, V), out.shape
    max_err = float(jnp.max(jnp.abs(out - ref)))
    # tolerance accounts for the intentional bf16 inter-kernel activation storage
    assert jnp.allclose(out, ref, atol=2e-2, rtol=2e-2), f"max abs err {max_err}"
    print("KERNEL_OK")
</pallas_src>

<mosaic_0001>
module attributes {stable_mosaic.version = 11 : i64} {
  func.func @_gcn_kernel(%arg0: i32, %arg1: i32, %arg2: memref<256x64xf32, #tpu.memory_space<vmem>>, %arg3: memref<64x128xf32, #tpu.memory_space<vmem>>, %arg4: memref<1x128xf32, #tpu.memory_space<vmem>>, %arg5: memref<256x128xbf16, #tpu.memory_space<vmem>>) attributes {dimension_semantics = [#tpu.dimension_semantics<parallel>, #tpu.dimension_semantics<parallel>], iteration_bounds = array<i64: 1, 1>, scalar_prefetch = 0 : i64, scratch_operands = 0 : i64, tpu.core_type = #tpu.core_type<tc>, window_params = [{transform_indices = @transform_0, window_bounds = array<i64: 256, 64>}, {transform_indices = @transform_1, window_bounds = array<i64: 64, 128>}, {transform_indices = @transform_2, window_bounds = array<i64: 1, 128>}, {transform_indices = @transform_3, window_bounds = array<i64: 256, 128>}]} {
    %c0 = arith.constant 0 : index
    %c0_0 = arith.constant 0 : index
    %0 = vector.load %arg2[%c0, %c0_0] : memref<256x64xf32, #tpu.memory_space<vmem>>, vector<256x64xf32>
    %c0_1 = arith.constant 0 : index
    %c0_2 = arith.constant 0 : index
    %1 = vector.load %arg3[%c0_1, %c0_2] : memref<64x128xf32, #tpu.memory_space<vmem>>, vector<64x128xf32>
    %cst = arith.constant dense<0.000000e+00> : vector<256x128xf32>
    %2 = tpu.matmul %0, %1, %cst {dimension_numbers = #tpu.dot_dimension_numbers<[1], [0], [0], [1], [0, 0, 1, 1], [], []>} : vector<256x64xf32>, vector<64x128xf32>, vector<256x128xf32> -> vector<256x128xf32>
    %c0_3 = arith.constant 0 : index
    %c0_4 = arith.constant 0 : index
    %3 = vector.load %arg4[%c0_3, %c0_4] : memref<1x128xf32, #tpu.memory_space<vmem>>, vector<1x128xf32>
    %4 = vector.broadcast %3 : vector<1x128xf32> to vector<256x128xf32>
    %5 = arith.addf %2, %4 : vector<256x128xf32>
    %cst_5 = arith.constant 0.000000e+00 : f32
    %6 = vector.broadcast %cst_5 : f32 to vector<256x128xf32>
    %7 = arith.maximumf %5, %6 : vector<256x128xf32>
    %8 = arith.truncf %7 : vector<256x128xf32> to vector<256x128xbf16>
    %c0_6 = arith.constant 0 : index
    %c0_7 = arith.constant 0 : index
    %9 = vector.load %arg5[%c0_6, %c0_7] : memref<256x128xbf16, #tpu.memory_space<vmem>>, vector<256x128xbf16>
    tpu.vector_store %arg5[%c0_6, %c0_7], %8 {strides = array<i32>} : memref<256x128xbf16, #tpu.memory_space<vmem>>, vector<256x128xbf16>,
    return
  }
  func.func @transform_0(%arg0: i32, %arg1: i32) -> (i32, i32) {
    %c0_i32 = arith.constant 0 : i32
    %c0_i32_0 = arith.constant 0 : i32
    return %arg0, %c0_i32 : i32, i32
  }
  func.func @transform_1(%arg0: i32, %arg1: i32) -> (i32, i32) {
    %c0_i32 = arith.constant 0 : i32
    %c0_i32_0 = arith.constant 0 : i32
    return %c0_i32, %arg1 : i32, i32
  }
  func.func @transform_2(%arg0: i32, %arg1: i32) -> (i32, i32) {
    %c0_i32 = arith.constant 0 : i32
    %c0_i32_0 = arith.constant 0 : i32
    return %c0_i32, %arg1 : i32, i32
  }
  func.func @transform_3(%arg0: i32, %arg1: i32) -> (i32, i32) {
    %c0_i32 = arith.constant 0 : i32
    return %arg0, %arg1 : i32, i32
  }
}

module attributes {stable_mosaic.version = 11 : i64} {
  func.func @_tcn_kernel(%arg0: i32, %arg1: i32, %arg2: memref<1x2048x8xbf16, #tpu.memory_space<vmem>>, %arg3: memref<1x1024x4xf32, #tpu.memory_space<vmem>>, %arg4: memref<76x8xbf16, #tpu.memory_space<vmem>>, %arg5: memref<1x8xf32, #tpu.memory_space<vmem>>, %arg6: memref<1x1024x8xf32, #tpu.memory_space<vmem>>, %arg7: memref<2176x8xbf16, #tpu.memory_space<vmem>>) attributes {dimension_semantics = [#tpu.dimension_semantics<parallel>, #tpu.dimension_semantics<arbitrary>], iteration_bounds = array<i64: 2, 2>, scalar_prefetch = 0 : i64, scratch_operands = 1 : i64, tpu.core_type = #tpu.core_type<tc>, window_params = [{transform_indices = @transform_0, window_bounds = array<i64: 1, 2048, 8>}, {transform_indices = @transform_1, window_bounds = array<i64: 1, 1024, 4>}, {pipeline_mode = #tpu.pipeline_mode<synchronous>, transform_indices = @transform_2, window_bounds = array<i64: 76, 8>}, {pipeline_mode = #tpu.pipeline_mode<synchronous>, transform_indices = @transform_3, window_bounds = array<i64: 1, 8>}, {transform_indices = @transform_4, window_bounds = array<i64: 1, 1024, 8>}]} {
    %c0_i32 = arith.constant 0 : i32
    %0 = arith.cmpi eq, %arg1, %c0_i32 : i32
    %1 = arith.extui %0 : i1 to i32
    %c0_i32_0 = arith.constant 0 : i32
    %2 = arith.cmpi ne, %1, %c0_i32_0 : i32
    scf.if %2 {
      %cst_12 = arith.constant 0.000000e+00 : bf16
      %30 = vector.broadcast %cst_12 : bf16 to vector<64x8xbf16>
      %c0_13 = arith.constant 0 : index
      %c0_14 = arith.constant 0 : index
      %31 = vector.load %arg7[%c0_13, %c0_14] : memref<2176x8xbf16, #tpu.memory_space<vmem>>, vector<64x8xbf16>
      tpu.vector_store %arg7[%c0_13, %c0_14], %30 {strides = array<i32>} : memref<2176x8xbf16, #tpu.memory_space<vmem>>, vector<64x8xbf16>,
      %c2112 = arith.constant 2112 : index
      %c0_15 = arith.constant 0 : index
      %32 = vector.load %arg7[%c2112, %c0_15] : memref<2176x8xbf16, #tpu.memory_space<vmem>>, vector<64x8xbf16>
      tpu.vector_store %arg7[%c2112, %c0_15], %30 {strides = array<i32>} : memref<2176x8xbf16, #tpu.memory_space<vmem>>, vector<64x8xbf16>,
      %c0_i32_16 = arith.constant 0 : i32
      "tpu.region"() ({
        %33 = tpu.sem_alloc : memref<!tpu.dma_semaphore, #tpu.memory_space<semaphore_mem>>
        %c0_i32_17 = arith.constant 0 : i32
        %c0_i32_18 = arith.constant 0 : i32
        %34 = tpu.memref_slice %arg2[%c0_i32_16, %c0_i32_17, %c0_i32_18] : memref<1x2048x8xbf16, #tpu.memory_space<vmem>> -> memref<1x2048x8xbf16, #tpu.memory_space<vmem>>
        %35 = tpu.memref_squeeze %34 : memref<1x2048x8xbf16, #tpu.memory_space<vmem>> -> memref<2048x8xbf16, #tpu.memory_space<vmem>>
        %c64_i32 = arith.constant 64 : i32
        %c0_i32_19 = arith.constant 0 : i32
        %36 = tpu.memref_slice %arg7[%c64_i32, %c0_i32_19] : memref<2176x8xbf16, #tpu.memory_space<vmem>> -> memref<2048x8xbf16, #tpu.memory_space<vmem>>
        tpu.enqueue_dma source(%35 : memref<2048x8xbf16, #tpu.memory_space<vmem>>) target(%36 : memref<2048x8xbf16, #tpu.memory_space<vmem>>) target_semaphore(%33 : memref<!tpu.dma_semaphore, #tpu.memory_space<semaphore_mem>>)
        %c0_i32_20 = arith.constant 0 : i32
        %c0_i32_21 = arith.constant 0 : i32
        %37 = tpu.memref_slice %arg2[%c0_i32_16, %c0_i32_20, %c0_i32_21] : memref<1x2048x8xbf16, #tpu.memory_space<vmem>> -> memref<1x2048x8xbf16, #tpu.memory_space<vmem>>
        %38 = tpu.memref_squeeze %37 : memref<1x2048x8xbf16, #tpu.memory_space<vmem>> -> memref<2048x8xbf16, #tpu.memory_space<vmem>>
        %c64_i32_22 = arith.constant 64 : i32
        %c0_i32_23 = arith.constant 0 : i32
        %39 = tpu.memref_slice %arg7[%c64_i32_22, %c0_i32_23] : memref<2176x8xbf16, #tpu.memory_space<vmem>> -> memref<2048x8xbf16, #tpu.memory_space<vmem>>
        tpu.wait_dma2 semaphore(%33 : memref<!tpu.dma_semaphore, #tpu.memory_space<semaphore_mem>>) src(%38 : memref<2048x8xbf16, #tpu.memory_space<vmem>>) dst(%39 : memref<2048x8xbf16, #tpu.memory_space<vmem>>)
        tpu.yield
      }) : () -> ()
    } else {
    }
    %c1024_i32 = arith.constant 1024 : i32
    %3 = arith.muli %arg1, %c1024_i32 : i32
    %4 = tpu.assume_multiple %3, 8 : i32
    %5 = arith.index_cast %4 : i32 to index
    %c0 = arith.constant 0 : index
    %6 = vector.load %arg7[%5, %c0] : memref<2176x8xbf16, #tpu.memory_space<vmem>>, vector<1152x8xbf16>
    %7 = vector.extract_strided_slice %6 {offsets = [0, 0], sizes = [1024, 8], strides = [1, 1]} : vector<1152x8xbf16> to vector<1024x8xbf16>
    %8 = vector.extract_strided_slice %6 {offsets = [16, 0], sizes = [1024, 8], strides = [1, 1]} : vector<1152x8xbf16> to vector<1024x8xbf16>
    %9 = vector.extract_strided_slice %6 {offsets = [32, 0], sizes = [1024, 8], strides = [1, 1]} : vector<1152x8xbf16> to vector<1024x8xbf16>
    %10 = vector.extract_strided_slice %6 {offsets = [48, 0], sizes = [1024, 8], strides = [1, 1]} : vector<1152x8xbf16> to vector<1024x8xbf16>
    %11 = vector.extract_strided_slice %6 {offsets = [64, 0], sizes = [1024, 8], strides = [1, 1]} : vector<1152x8xbf16> to vector<1024x8xbf16>
    %12 = vector.extract_strided_slice %6 {offsets = [80, 0], sizes = [1024, 8], strides = [1, 1]} : vector<1152x8xbf16> to vector<1024x8xbf16>
    %13 = vector.extract_strided_slice %6 {offsets = [96, 0], sizes = [1024, 8], strides = [1, 1]} : vector<1152x8xbf16> to vector<1024x8xbf16>
    %14 = vector.extract_strided_slice %6 {offsets = [112, 0], sizes = [1024, 8], strides = [1, 1]} : vector<1152x8xbf16> to vector<1024x8xbf16>
    %15 = vector.extract_strided_slice %6 {offsets = [128, 0], sizes = [1024, 8], strides = [1, 1]} : vector<1152x8xbf16> to vector<1024x8xbf16>
    %c0_1 = arith.constant 0 : index
    %c0_2 = arith.constant 0 : index
    %c0_3 = arith.constant 0 : index
    %16 = vector.load %arg3[%c0_1, %c0_2, %c0_3] : memref<1x1024x4xf32, #tpu.memory_space<vmem>>, vector<1x1024x4xf32>
    %17 = vector.shape_cast %16 : vector<1x1024x4xf32> to vector<1024x4xf32>
    %18 = arith.truncf %17 : vector<1024x4xf32> to vector<1024x4xbf16>
    %19 = tpu.concatenate %7, %8, %9, %10, %11, %12, %13, %14, %15, %18 in 1 : vector<1024x8xbf16>, vector<1024x8xbf16>, vector<1024x8xbf16>, vector<1024x8xbf16>, vector<1024x8xbf16>, vector<1024x8xbf16>, vector<1024x8xbf16>, vector<1024x8xbf16>, vector<1024x8xbf16>, vector<1024x4xbf16> -> vector<1024x76xbf16>
    %c0_4 = arith.constant 0 : index
    %c0_5 = arith.constant 0 : index
    %20 = vector.load %arg4[%c0_4, %c0_5] : memref<76x8xbf16, #tpu.memory_space<vmem>>, vector<76x8xbf16>
    %cst = arith.constant dense<0.000000e+00> : vector<1024x8xf32>
    %21 = tpu.matmul %19, %20, %cst {dimension_numbers = #tpu.dot_dimension_numbers<[1], [0], [0], [1], [0, 0, 1, 1], [], []>} : vector<1024x76xbf16>, vector<76x8xbf16>, vector<1024x8xf32> -> vector<1024x8xf32>
    %c0_6 = arith.constant 0 : index
    %c0_7 = arith.constant 0 : index
    %22 = vector.load %arg5[%c0_6, %c0_7] : memref<1x8xf32, #tpu.memory_space<vmem>>, vector<1x8xf32>
    %23 = vector.broadcast %22 : vector<1x8xf32> to vector<1024x8xf32>
    %24 = arith.addf %21, %23 : vector<1024x8xf32>
    %cst_8 = arith.constant 0.000000e+00 : f32
    %25 = vector.broadcast %cst_8 : f32 to vector<1024x8xf32>
    %26 = arith.maximumf %24, %25 : vector<1024x8xf32>
    %c0_9 = arith.constant 0 : index
    %c0_10 = arith.constant 0 : index
    %c0_11 = arith.constant 0 : index
    %27 = vector.load %arg6[%c0_9, %c0_10, %c0_11] : memref<1x1024x8xf32, #tpu.memory_space<vmem>>, vector<1x1024x8xf32>
    %28 = vector.shape_cast %27 : vector<1x1024x8xf32> to vector<1024x8xf32>
    %29 = vector.shape_cast %26 : vector<1024x8xf32> to vector<1x1024x8xf32>
    tpu.vector_store %arg6[%c0_9, %c0_10, %c0_11], %29 {strides = array<i32>} : memref<1x1024x8xf32, #tpu.memory_space<vmem>>, vector<1x1024x8xf32>,
    return
  }
  func.func @transform_0(%arg0: i32, %arg1: i32) -> (i32, i32, i32) {
    %c0_i32 = arith.constant 0 : i32
    %c0_i32_0 = arith.constant 0 : i32
    %c0_i32_1 = arith.constant 0 : i32
    return %arg0, %c0_i32, %c0_i32_0 : i32, i32, i32
  }
  func.func @transform_1(%arg0: i32, %arg1: i32) -> (i32, i32, i32) {
    %c0_i32 = arith.constant 0 : i32
    %c0_i32_0 = arith.constant 0 : i32
    return %arg0, %arg1, %c0_i32 : i32, i32, i32
  }
  func.func @transform_2(%arg0: i32, %arg1: i32) -> (i32, i32) {
    %c0_i32 = arith.constant 0 : i32
    %c0_i32_0 = arith.constant 0 : i32
    %c0_i32_1 = arith.constant 0 : i32
    return %c0_i32, %c0_i32_0 : i32, i32
  }
  func.func @transform_3(%arg0: i32, %arg1: i32) -> (i32, i32) {
    %c0_i32 = arith.constant 0 : i32
    %c0_i32_0 = arith.constant 0 : i32
    %c0_i32_1 = arith.constant 0 : i32
    return %c0_i32, %c0_i32_0 : i32, i32
  }
  func.func @transform_4(%arg0: i32, %arg1: i32) -> (i32, i32, i32) {
    %c0_i32 = arith.constant 0 : i32
    %c0_i32_0 = arith.constant 0 : i32
    return %arg0, %arg1, %c0_i32 : i32, i32, i32
  }
}

</mosaic_0001>

<llo_original>
// kernel: tile.13
$region0: #{tile.13}
  #allocation0 [shape = 's32[1]{0}', space=sflag, size = 0x4, scoped, tag = 'scoped memory for tile.13']
  %s0 = inlined_call_operand.vmem [shape: f32[8], index: 0, kind: input, shape index: {}]
  %s1 = inlined_call_operand.vmem [shape: f32[3,8], index: 1, kind: output, shape index: {}]
  // Predicated region
  $region2: #{tile.13} parent=0 // pred_check
    _
  $region3: #{tile.13} parent=0 // pred_check_branch
    %3 = sbr.rel (0) target = $region5
  $region4: #{tile.13} parent=0 // pred_region
    _
  $region5: #{tile.13} parent=0 // pred_fallthru
    _
  %v4 = vld [vmem:[%s0] ss:$0 sm:$0xff]
  %5 = vst [vmem:[%s1] sm:$0xf] %v4

// kernel: mul.24
$region0: #{mul.24}
  #allocation2 [shape = 's32[1]{0}', space=sflag, size = 0x4, scoped, tag = 'scoped memory for mul.24']
  %s0 = inlined_call_operand.hbm [shape: f32[24], index: 0, kind: input, shape index: {}]
  %s1 = inlined_call_operand.vmem [shape: f32[24], index: 1, kind: input, shape index: {}]
  %s2 = inlined_call_operand.vmem [shape: bf16[24], index: 2, kind: output, shape index: {}]
  $region1: #{mul.24} parent=0
    #allocation0 [shape = 'u8[512]{0}', space=vmem, size = 0x400, scoped, tag = 'operand span for operand 0']
    #allocation1 [shape = 's32[1]{0}', space=sflag, size = 0x4, scoped, tag = 'scoped memory for mul.24']
    %3 = vsyncpa [#allocation1], 0
    %s5 = ssub.s32 16, 16
    %6 = vsyncadd [#allocation1], %s5
    %s8 = sshll.u32 [#allocation0], 4
    %s9 = int_to_ptr.vmem [resolvable:$true] %s8
    %11 = dma.hbm_to_vmem [thread:$0]  %s0, 16, %s9, [#allocation1]
    %12 = dma.done [#allocation1], 16
    %v13 = vld [vmem:[#allocation0] sm:$0x1]
    %v14 = vld [vmem:[%s1] sm:$0x1]
    %15 = xla_tuple %v13, %v14
    %16 = xla_tuple %15
    %v17 = vmul.f32 %v13, %v14
    %18 = xla_tuple %v17
    %v19 = vpack.c.bf16 0.0, %v17
    %20 = vst [vmem:[%s2] sm:$0x1] %v19
    %21 = vsyncpa [#allocation1], 1

// kernel: mul.21
$region0: #{mul.21}
  %s0 = inlined_call_operand.vmem [shape: f32[3,8], index: 0, kind: input, shape index: {}]
  %s1 = inlined_call_operand.vmem [shape: f32[24], index: 1, kind: output, shape index: {}]
  $region1: #{mul.21} parent=0
    #allocation0 [shape = 'u8[4096]{0}', space=vmem, size = 0x1000, scoped, tag = 'scoped mem for output reshape']
    #allocation1 [shape = 'u8[4096]{0}', space=vmem, size = 0x1000, scoped, tag = 'scoped mem for input reshape']
    %s3 = sshll.u32 1, 4
    %s4 = ssub.s32 %s3, 1
    %v5 = vld [vmem:[%s0] sm:%s4]
    %6 = vst [vmem:[#allocation1] sm:%s4] %v5
    %v7 = vld [vmem:[#allocation1] sm:$0x1]
    %vm8 = vcmask 64512
    %9 = vst.msk [vmem:[#allocation0] sm:$0x1] %vm8, %v7
    %s10 = scalar_lea.vmem [#allocation1], 2
    %v11 = vld [vmem:[%s10] sm:$0x1]
    %12 = vrot.lane.b32.xlu0 %v11, 16
    %v13 = vpop.permute.xlu0 %12
    %vm14 = vcmask 195712
    %15 = vst.msk [vmem:[#allocation0] sm:$0x1] %vm14, %v13
    %s16 = scalar_lea.vmem [#allocation1], 1
    %v17 = vld [vmem:[%s16] sm:$0x1]
    %18 = vrot.lane.b32.xlu0 %v17, 8
    %v19 = vpop.permute.xlu0 %18
    %vm20 = vcmask 130112
    %21 = vst.msk [vmem:[#allocation0] sm:$0x1] %vm20, %v19
    %s23 = sshll.u32 1, 1
    %s24 = ssub.s32 %s23, 1
    %v26 = vld [vmem:[#allocation0] sm:%s24]
    %s27 = sshll.u32 1, 1
    %s28 = ssub.s32 %s27, 1
    %29 = vst [vmem:[%s1] sm:%s28] %v26

// kernel: stgkn_block_forward.2
$region0: #{stgkn_block_forward.2}
  #allocation0 [shape = 'u32[]', space=smem, size = 0x4, offset = 0x4, fixed_abs, tag = 'smem constant byte address 0x4 - core index']
  #allocation1 [shape = 'u32[144,128]{1,0:T(1,128)}', space=vmem, size = 0x12000, scoped, tag = 'internal scratch']
  %s0 = inlined_call_operand.vmem [shape: f32[256,64], index: 0, kind: input, shape index: {}]
  %s1 = inlined_call_operand.vmem [shape: f32[64,128], index: 1, kind: input, shape index: {}]
  %s2 = inlined_call_operand.vmem [shape: f32[1,128], index: 2, kind: input, shape index: {}]
  %s3 = inlined_call_operand.vmem [shape: bf16[256,128], index: 3, kind: output, shape index: {}]
  %s4 = sld [smem:[#allocation0]]
  $region22: #{stgkn_block_forward.2} parent=0
    _
  %s6 = ssub.s32 1, %s4
  %s7 = scalar_select 0, %s6, %s4
  // Predicated region
  $region2: #{stgkn_block_forward.2} parent=0 // pred_check
    _
  $region3: #{stgkn_block_forward.2} parent=0 // pred_check_branch
    %9 = sbr.rel (0) target = $region5
  $region4: #{stgkn_block_forward.2} parent=0 // pred_region
    _
  $region5: #{stgkn_block_forward.2} parent=0 // pred_fallthru
    _
  // Predicated region
  $region6: #{stgkn_block_forward.2} parent=0 // pred_check
    _
  $region7: #{stgkn_block_forward.2} parent=0 // pred_check_branch
    %11 = sbr.rel (0) target = $region9
  $region8: #{stgkn_block_forward.2} parent=0 // pred_region
    _
  $region9: #{stgkn_block_forward.2} parent=0 // pred_fallthru
    _
  // Predicated region
  $region10: #{stgkn_block_forward.2} parent=0 // pred_check
    _
  $region11: #{stgkn_block_forward.2} parent=0 // pred_check_branch
    %13 = sbr.rel (0) target = $region13
  $region12: #{stgkn_block_forward.2} parent=0 // pred_region
    _
  $region13: #{stgkn_block_forward.2} parent=0 // pred_fallthru
    _
  %v14 = vld [vmem:[%s0] sm:$0xff]
  %v15 = vld [vmem:[%s0 + $0x8] sm:$0xff]
  %v16 = vld [vmem:[%s0 + $0x10] sm:$0xff]
  %v17 = vld [vmem:[%s0 + $0x18] sm:$0xff]
  %v18 = vld [vmem:[%s0 + $0x20] sm:$0xff]
  %v19 = vld [vmem:[%s0 + $0x28] sm:$0xff]
  %v20 = vld [vmem:[%s0 + $0x30] sm:$0xff]
  %v21 = vld [vmem:[%s0 + $0x38] sm:$0xff]
  %v22 = vld [vmem:[%s0 + $0x40] sm:$0xff]
  %v23 = vld [vmem:[%s0 + $0x48] sm:$0xff]
  %v24 = vld [vmem:[%s0 + $0x50] sm:$0xff]
  %v25 = vld [vmem:[%s0 + $0x58] sm:$0xff]
  %v26 = vld [vmem:[%s0 + $0x60] sm:$0xff]
  %v27 = vld [vmem:[%s0 + $0x68] sm:$0xff]
  %v28 = vld [vmem:[%s0 + $0x70] sm:$0xff]
  %v29 = vld [vmem:[%s0 + $0x78] sm:$0xff]
  %v30 = vld [vmem:[%s0 + $0x80] sm:$0xff]
  %v31 = vld [vmem:[%s0 + $0x88] sm:$0xff]
  %v32 = vld [vmem:[%s0 + $0x90] sm:$0xff]
  %v33 = vld [vmem:[%s0 + $0x98] sm:$0xff]
  %v34 = vld [vmem:[%s0 + $0xa0] sm:$0xff]
  %v35 = vld [vmem:[%s0 + $0xa8] sm:$0xff]
  %v36 = vld [vmem:[%s0 + $0xb0] sm:$0xff]
  %v37 = vld [vmem:[%s0 + $0xb8] sm:$0xff]
  %v38 = vld [vmem:[%s0 + $0xc0] sm:$0xff]
  %v39 = vld [vmem:[%s0 + $0xc8] sm:$0xff]
  %v40 = vld [vmem:[%s0 + $0xd0] sm:$0xff]
  %v41 = vld [vmem:[%s0 + $0xd8] sm:$0xff]
  %v42 = vld [vmem:[%s0 + $0xe0] sm:$0xff]
  %v43 = vld [vmem:[%s0 + $0xe8] sm:$0xff]
  %v44 = vld [vmem:[%s0 + $0xf0] sm:$0xff]
  %v45 = vld [vmem:[%s0 + $0xf8] sm:$0xff]
  %v46 = vld [vmem:[%s1] sm:$0xff]
  %v47 = vld [vmem:[%s1 + $0x8] sm:$0xff]
  %v48 = vld [vmem:[%s1 + $0x10] sm:$0xff]
  %v49 = vld [vmem:[%s1 + $0x18] sm:$0xff]
  %v50 = vld [vmem:[%s1 + $0x20] sm:$0xff]
  %v51 = vld [vmem:[%s1 + $0x28] sm:$0xff]
  %v52 = vld [vmem:[%s1 + $0x30] sm:$0xff]
  %v53 = vld [vmem:[%s1 + $0x38] sm:$0xff]
  %v54 = vld [vmem:[%s2] sm:$0x1]
  %v56 = vlaneseq
  %v57 = vshrl.u32 %v56, 7
  %v58 = vsub.s32 0, %v57
  %v59 = vrot.slane %v54, %v58
  %vm61 = vcmask 523264
  %v63 = vsel %vm61, %v14, 0
  %v66 = vsel %vm61, %v15, 0
  %v69 = vsel %vm61, %v16, 0
  %v72 = vsel %vm61, %v17, 0
  %v75 = vsel %vm61, %v18, 0
  %v78 = vsel %vm61, %v19, 0
  %v81 = vsel %vm61, %v20, 0
  %v84 = vsel %vm61, %v21, 0
  %v87 = vsel %vm61, %v22, 0
  %v90 = vsel %vm61, %v23, 0
  %v93 = vsel %vm61, %v24, 0
  %v96 = vsel %vm61, %v25, 0
  %v99 = vsel %vm61, %v26, 0
  %v102 = vsel %vm61, %v27, 0
  %v105 = vsel %vm61, %v28, 0
  %v108 = vsel %vm61, %v29, 0
  %v111 = vsel %vm61, %v30, 0
  %v114 = vsel %vm61, %v31, 0
  %v117 = vsel %vm61, %v32, 0
  %v120 = vsel %vm61, %v33, 0
  %v123 = vsel %vm61, %v34, 0
  %v126 = vsel %vm61, %v35, 0
  %v129 = vsel %vm61, %v36, 0
  %v132 = vsel %vm61, %v37, 0
  %v135 = vsel %vm61, %v38, 0
  %v138 = vsel %vm61, %v39, 0
  %v141 = vsel %vm61, %v40, 0
  %v144 = vsel %vm61, %v41, 0
  %v147 = vsel %vm61, %v42, 0
  %v150 = vsel %vm61, %v43, 0
  %v153 = vsel %vm61, %v44, 0
  %v156 = vsel %vm61, %v45, 0
  %158 = vmatprep.subr.mxu0 0.0
  %159 = vmatpush1.msra.mxu0 0.0
  %160 = vmatprep.subr.mxu0 0.0
  %161 = vmatpush1.msra.mxu0 0.0
  %162 = vmatprep.subr.mxu0 0.0
  %163 = vmatpush1.msra.mxu0 0.0
  %164 = vmatprep.subr.mxu0 0.0
  %165 = vmatpush1.msra.mxu0 0.0
  %166 = vmatprep.subr.mxu0 0.0
  %167 = vmatpush1.msra.mxu0 0.0
  %168 = vmatprep.subr.mxu0 0.0
  %169 = vmatpush1.msra.mxu0 0.0
  %170 = vmatprep.subr.mxu0 0.0
  %171 = vmatpush1.msra.mxu0 0.0
  %172 = vmatprep.subr.mxu0 0.0
  %173 = vmatpush1.msra.mxu0 0.0
  %174 = vmatprep.subr.mxu0 0.0
  %175 = vmatpush1.msra.mxu0 %v53
  %176 = vmatprep.subr.mxu0 0.0
  %177 = vmatpush1.msra.mxu0 %v52
  %178 = vmatprep.subr.mxu0 0.0
  %179 = vmatpush1.msra.mxu0 %v51
  %180 = vmatprep.subr.mxu0 0.0
  %181 = vmatpush1.msra.mxu0 %v50
  %182 = vmatprep.subr.mxu0 0.0
  %183 = vmatpush1.msra.mxu0 %v49
  %184 = vmatprep.subr.mxu0 0.0
  %185 = vmatpush1.msra.mxu0 %v48
  %186 = vmatprep.subr.mxu0 0.0
  %187 = vmatpush1.msra.mxu0 %v47
  %188 = vmatprep.subr.mxu0 0.0
  %189 = vmatpush1.msra.mxu0 %v46
  %190 = vmatprep.subr.mxu0 0.0
  %191 = vmatpush2.msra.mxu0 0.0
  %192 = vmatprep.subr.mxu0 0.0
  %193 = vmatpush2.msra.mxu0 0.0
  %194 = vmatprep.subr.mxu0 0.0
  %195 = vmatpush2.msra.mxu0 0.0
  %196 = vmatprep.subr.mxu0 0.0
  %197 = vmatpush2.msra.mxu0 0.0
  %198 = vmatprep.subr.mxu0 0.0
  %199 = vmatpush2.msra.mxu0 0.0
  %200 = vmatprep.subr.mxu0 0.0
  %201 = vmatpush2.msra.mxu0 0.0
  %202 = vmatprep.subr.mxu0 0.0
  %203 = vmatpush2.msra.mxu0 0.0
  %204 = vmatprep.subr.mxu0 0.0
  %205 = vmatpush2.msra.mxu0 0.0
  %206 = vmatprep.subr.mxu0 0.0
  %207 = vmatpush2.msra.mxu0 0.0
  %208 = vmatprep.subr.mxu0 0.0
  %209 = vmatpush2.msra.mxu0 0.0
  %210 = vmatprep.subr.mxu0 0.0
  %211 = vmatpush2.msra.mxu0 0.0
  %212 = vmatprep.subr.mxu0 0.0
  %213 = vmatpush2.msra.mxu0 0.0
  %214 = vmatprep.subr.mxu0 0.0
  %215 = vmatpush2.msra.mxu0 0.0
  %216 = vmatprep.subr.mxu0 0.0
  %217 = vmatpush2.msra.mxu0 0.0
  %218 = vmatprep.subr.mxu0 0.0
  %219 = vmatpush2.msra.mxu0 0.0
  %220 = vmatprep.subr.mxu0 0.0
  %221 = vmatpush2.msra.mxu0 0.0
  %222 = vmatprep.mubr.f32.mxu0 0.0
  %223 = vmatmul.mubr.f32.gmra.mxu0 %v63
  %v224 = vpop.f32.mrf.mxu0
  %v225 = vadd.f32 %v59, %v224
  %v226 = vpop.f32.mrf.mxu0
  %227 = vmatprep.mubr.f32.mxu0 0.0
  %228 = vmatmul.mubr.f32.gmra.mxu0 %v66
  %v229 = vpop.f32.mrf.mxu0
  %v230 = vadd.f32 %v59, %v229
  %v231 = vpop.f32.mrf.mxu0
  %232 = vmatprep.mubr.f32.mxu0 0.0
  %233 = vmatmul.mubr.f32.gmra.mxu0 %v69
  %v234 = vpop.f32.mrf.mxu0
  %v235 = vadd.f32 %v59, %v234
  %v236 = vpop.f32.mrf.mxu0
  %237 = vmatprep.mubr.f32.mxu0 0.0
  %238 = vmatmul.mubr.f32.gmra.mxu0 %v72
  %v239 = vpop.f32.mrf.mxu0
  %v240 = vadd.f32 %v59, %v239
  %v241 = vpop.f32.mrf.mxu0
  %242 = vmatprep.mubr.f32.mxu0 0.0
  %243 = vmatmul.mubr.f32.gmra.mxu0 %v75
  %v244 = vpop.f32.mrf.mxu0
  %v245 = vadd.f32 %v59, %v244
  %v246 = vpop.f32.mrf.mxu0
  %247 = vmatprep.mubr.f32.mxu0 0.0
  %248 = vmatmul.mubr.f32.gmra.mxu0 %v78
  %v249 = vpop.f32.mrf.mxu0
  %v250 = vadd.f32 %v59, %v249
  %v251 = vpop.f32.mrf.mxu0
  %252 = vmatprep.mubr.f32.mxu0 0.0
  %253 = vmatmul.mubr.f32.gmra.mxu0 %v81
  %v254 = vpop.f32.mrf.mxu0
  %v255 = vadd.f32 %v59, %v254
  %v256 = vpop.f32.mrf.mxu0
  %257 = vmatprep.mubr.f32.mxu0 0.0
  %258 = vmatmul.mubr.f32.gmra.mxu0 %v84
  %v259 = vpop.f32.mrf.mxu0
  %v260 = vadd.f32 %v59, %v259
  %v261 = vpop.f32.mrf.mxu0
  %262 = vmatprep.mubr.f32.mxu0 0.0
  %263 = vmatmul.mubr.f32.gmra.mxu0 %v87
  %v264 = vpop.f32.mrf.mxu0
  %v265 = vadd.f32 %v59, %v264
  %v266 = vpop.f32.mrf.mxu0
  %267 = vmatprep.mubr.f32.mxu0 0.0
  %268 = vmatmul.mubr.f32.gmra.mxu0 %v90
  %v269 = vpop.f32.mrf.mxu0
  %v270 = vadd.f32 %v59, %v269
  %v271 = vpop.f32.mrf.mxu0
  %272 = vmatprep.mubr.f32.mxu0 0.0
  %273 = vmatmul.mubr.f32.gmra.mxu0 %v93
  %v274 = vpop.f32.mrf.mxu0
  %v275 = vadd.f32 %v59, %v274
  %v276 = vpop.f32.mrf.mxu0
  %277 = vmatprep.mubr.f32.mxu0 0.0
  %278 = vmatmul.mubr.f32.gmra.mxu0 %v96
  %v279 = vpop.f32.mrf.mxu0
  %v280 = vadd.f32 %v59, %v279
  %v281 = vpop.f32.mrf.mxu0
  %282 = vmatprep.mubr.f32.mxu0 0.0
  %283 = vmatmul.mubr.f32.gmra.mxu0 %v99
  %v284 = vpop.f32.mrf.mxu0
  %v285 = vadd.f32 %v59, %v284
  %v286 = vpop.f32.mrf.mxu0
  %287 = vmatprep.mubr.f32.mxu0 0.0
  %288 = vmatmul.mubr.f32.gmra.mxu0 %v102
  %v289 = vpop.f32.mrf.mxu0
  %v290 = vadd.f32 %v59, %v289
  %v291 = vpop.f32.mrf.mxu0
  %292 = vmatprep.mubr.f32.mxu0 0.0
  %293 = vmatmul.mubr.f32.gmra.mxu0 %v105
  %v294 = vpop.f32.mrf.mxu0
  %v295 = vadd.f32 %v59, %v294
  %v296 = vpop.f32.mrf.mxu0
  %297 = vmatprep.mubr.f32.mxu0 0.0
  %298 = vmatmul.mubr.f32.gmra.mxu0 %v108
  %v299 = vpop.f32.mrf.mxu0
  %v300 = vadd.f32 %v59, %v299
  %v301 = vpop.f32.mrf.mxu0
  %302 = vmatprep.mubr.f32.mxu0 0.0
  %303 = vmatmul.mubr.f32.gmra.mxu0 %v111
  %v304 = vpop.f32.mrf.mxu0
  %v305 = vadd.f32 %v59, %v304
  %v306 = vpop.f32.mrf.mxu0
  %307 = vmatprep.mubr.f32.mxu0 0.0
  %308 = vmatmul.mubr.f32.gmra.mxu0 %v114
  %v309 = vpop.f32.mrf.mxu0
  %v310 = vadd.f32 %v59, %v309
  %v311 = vpop.f32.mrf.mxu0
  %312 = vmatprep.mubr.f32.mxu0 0.0
  %313 = vmatmul.mubr.f32.gmra.mxu0 %v117
  %v314 = vpop.f32.mrf.mxu0
  %v315 = vadd.f32 %v59, %v314
  %v316 = vpop.f32.mrf.mxu0
  %317 = vmatprep.mubr.f32.mxu0 0.0
  %318 = vmatmul.mubr.f32.gmra.mxu0 %v120
  %v319 = vpop.f32.mrf.mxu0
  %v320 = vadd.f32 %v59, %v319
  %v321 = vpop.f32.mrf.mxu0
  %322 = vmatprep.mubr.f32.mxu0 0.0
  %323 = vmatmul.mubr.f32.gmra.mxu0 %v123
  %v324 = vpop.f32.mrf.mxu0
  %v325 = vadd.f32 %v59, %v324
  %v326 = vpop.f32.mrf.mxu0
  %327 = vmatprep.mubr.f32.mxu0 0.0
  %328 = vmatmul.mubr.f32.gmra.mxu0 %v126
  %v329 = vpop.f32.mrf.mxu0
  %v330 = vadd.f32 %v59, %v329
  %v331 = vpop.f32.mrf.mxu0
  %332 = vmatprep.mubr.f32.mxu0 0.0
  %333 = vmatmul.mubr.f32.gmra.mxu0 %v129
  %v334 = vpop.f32.mrf.mxu0
  %v335 = vadd.f32 %v59, %v334
  %v336 = vpop.f32.mrf.mxu0
  %337 = vmatprep.mubr.f32.mxu0 0.0
  %338 = vmatmul.mubr.f32.gmra.mxu0 %v132
  %v339 = vpop.f32.mrf.mxu0
  %v340 = vadd.f32 %v59, %v339
  %v341 = vpop.f32.mrf.mxu0
  %342 = vmatprep.mubr.f32.mxu0 0.0
  %343 = vmatmul.mubr.f32.gmra.mxu0 %v135
  %v344 = vpop.f32.mrf.mxu0
  %v345 = vadd.f32 %v59, %v344
  %v346 = vpop.f32.mrf.mxu0
  %347 = vmatprep.mubr.f32.mxu0 0.0
  %348 = vmatmul.mubr.f32.gmra.mxu0 %v138
  %v349 = vpop.f32.mrf.mxu0
  %v350 = vadd.f32 %v59, %v349
  %v351 = vpop.f32.mrf.mxu0
  %352 = vmatprep.mubr.f32.mxu0 0.0
  %353 = vmatmul.mubr.f32.gmra.mxu0 %v141
  %v354 = vpop.f32.mrf.mxu0
  %v355 = vadd.f32 %v59, %v354
  %v356 = vpop.f32.mrf.mxu0
  %357 = vmatprep.mubr.f32.mxu0 0.0
  %358 = vmatmul.mubr.f32.gmra.mxu0 %v144
  %v359 = vpop.f32.mrf.mxu0
  %v360 = vadd.f32 %v59, %v359
  %v361 = vpop.f32.mrf.mxu0
  %362 = vmatprep.mubr.f32.mxu0 0.0
  %363 = vmatmul.mubr.f32.gmra.mxu0 %v147
  %v364 = vpop.f32.mrf.mxu0
  %v365 = vadd.f32 %v59, %v364
  %v366 = vpop.f32.mrf.mxu0
  %367 = vmatprep.mubr.f32.mxu0 0.0
  %368 = vmatmul.mubr.f32.gmra.mxu0 %v150
  %v369 = vpop.f32.mrf.mxu0
  %v370 = vadd.f32 %v59, %v369
  %v371 = vpop.f32.mrf.mxu0
  %372 = vmatprep.mubr.f32.mxu0 0.0
  %373 = vmatmul.mubr.f32.gmra.mxu0 %v153
  %v374 = vpop.f32.mrf.mxu0
  %v375 = vadd.f32 %v59, %v374
  %v376 = vpop.f32.mrf.mxu0
  %377 = vmatprep.mubr.f32.mxu0 0.0
  %378 = vmatmul.mubr.f32.gmra.mxu0 %v156
  %v379 = vpop.f32.mrf.mxu0
  %v380 = vadd.f32 %v59, %v379
  %v381 = vpop.f32.mrf.mxu0
  %382 = vdwg.mxu0
  %v383 = vmax.f32 %v225, 0.0
  %v384 = vmax.f32 %v230, 0.0
  %v385 = vmax.f32 %v235, 0.0
  %v386 = vmax.f32 %v240, 0.0
  %v387 = vmax.f32 %v245, 0.0
  %v388 = vmax.f32 %v250, 0.0
  %v389 = vmax.f32 %v255, 0.0
  %v390 = vmax.f32 %v260, 0.0
  %v391 = vmax.f32 %v265, 0.0
  %v392 = vmax.f32 %v270, 0.0
  %v393 = vmax.f32 %v275, 0.0
  %v394 = vmax.f32 %v280, 0.0
  %v395 = vmax.f32 %v285, 0.0
  %v396 = vmax.f32 %v290, 0.0
  %v397 = vmax.f32 %v295, 0.0
  %v398 = vmax.f32 %v300, 0.0
  %v399 = vmax.f32 %v305, 0.0
  %v400 = vmax.f32 %v310, 0.0
  %v401 = vmax.f32 %v315, 0.0
  %v402 = vmax.f32 %v320, 0.0
  %v403 = vmax.f32 %v325, 0.0
  %v404 = vmax.f32 %v330, 0.0
  %v405 = vmax.f32 %v335, 0.0
  %v406 = vmax.f32 %v340, 0.0
  %v407 = vmax.f32 %v345, 0.0
  %v408 = vmax.f32 %v350, 0.0
  %v409 = vmax.f32 %v355, 0.0
  %v410 = vmax.f32 %v360, 0.0
  %v411 = vmax.f32 %v365, 0.0
  %v412 = vmax.f32 %v370, 0.0
  %v413 = vmax.f32 %v375, 0.0
  %v414 = vmax.f32 %v380, 0.0
  %v415 = vpack.c.bf16 %v384, %v383
  %v416 = vpack.c.bf16 %v386, %v385
  %v417 = vpack.c.bf16 %v388, %v387
  %v418 = vpack.c.bf16 %v390, %v389
  %v419 = vpack.c.bf16 %v392, %v391
  %v420 = vpack.c.bf16 %v394, %v393
  %v421 = vpack.c.bf16 %v396, %v395
  %v422 = vpack.c.bf16 %v398, %v397
  %v423 = vpack.c.bf16 %v400, %v399
  %v424 = vpack.c.bf16 %v402, %v401
  %v425 = vpack.c.bf16 %v404, %v403
  %v426 = vpack.c.bf16 %v406, %v405
  %v427 = vpack.c.bf16 %v408, %v407
  %v428 = vpack.c.bf16 %v410, %v409
  %v429 = vpack.c.bf16 %v412, %v411
  %v430 = vpack.c.bf16 %v414, %v413
  %v447 = vunpack.c.l.b16 %v415
  %v448 = vunpack.c.h.b16 %v415
  %v449 = vunpack.c.l.b16 %v416
  %v450 = vunpack.c.h.b16 %v416
  %v451 = vunpack.c.l.b16 %v417
  %v452 = vunpack.c.h.b16 %v417
  %v453 = vunpack.c.l.b16 %v418
  %v454 = vunpack.c.h.b16 %v418
  %v455 = vunpack.c.l.b16 %v419
  %v456 = vunpack.c.h.b16 %v419
  %v457 = vunpack.c.l.b16 %v420
  %v458 = vunpack.c.h.b16 %v420
  %v459 = vunpack.c.l.b16 %v421
  %v460 = vunpack.c.h.b16 %v421
  %v461 = vunpack.c.l.b16 %v422
  %v462 = vunpack.c.h.b16 %v422
  %v463 = vunpack.c.l.b16 %v423
  %v464 = vunpack.c.h.b16 %v423
  %v465 = vunpack.c.l.b16 %v424
  %v466 = vunpack.c.h.b16 %v424
  %v467 = vunpack.c.l.b16 %v425
  %v468 = vunpack.c.h.b16 %v425
  %v469 = vunpack.c.l.b16 %v426
  %v470 = vunpack.c.h.b16 %v426
  %v471 = vunpack.c.l.b16 %v427
  %v472 = vunpack.c.h.b16 %v427
  %v473 = vunpack.c.l.b16 %v428
  %v474 = vunpack.c.h.b16 %v428
  %v475 = vunpack.c.l.b16 %v429
  %v476 = vunpack.c.h.b16 %v429
  %v477 = vunpack.c.l.b16 %v430
  %v478 = vunpack.c.h.b16 %v430
  %v479 = vpack.c.b16 %v447, %v447
  %v480 = vpack.c.b16 %v448, %v448
  %v481 = vpack.c.b16 %v449, %v449
  %v482 = vpack.c.b16 %v450, %v450
  %v483 = vpack.c.b16 %v451, %v451
  %v484 = vpack.c.b16 %v452, %v452
  %v485 = vpack.c.b16 %v453, %v453
  %v486 = vpack.c.b16 %v454, %v454
  %v487 = vpack.c.b16 %v455, %v455
  %v488 = vpack.c.b16 %v456, %v456
  %v489 = vpack.c.b16 %v457, %v457
  %v490 = vpack.c.b16 %v458, %v458
  %v491 = vpack.c.b16 %v459, %v459
  %v492 = vpack.c.b16 %v460, %v460
  %v493 = vpack.c.b16 %v461, %v461
  %v494 = vpack.c.b16 %v462, %v462
  %v495 = vpack.c.b16 %v463, %v463
  %v496 = vpack.c.b16 %v464, %v464
  %v497 = vpack.c.b16 %v465, %v465
  %v498 = vpack.c.b16 %v466, %v466
  %v499 = vpack.c.b16 %v467, %v467
  %v500 = vpack.c.b16 %v468, %v468
  %v501 = vpack.c.b16 %v469, %v469
  %v502 = vpack.c.b16 %v470, %v470
  %v503 = vpack.c.b16 %v471, %v471
  %v504 = vpack.c.b16 %v472, %v472
  %v505 = vpack.c.b16 %v473, %v473
  %v506 = vpack.c.b16 %v474, %v474
  %v507 = vpack.c.b16 %v475, %v475
  %v508 = vpack.c.b16 %v476, %v476
  %v509 = vpack.c.b16 %v477, %v477
  %v510 = vpack.c.b16 %v478, %v478
  %543 = vst [vmem:[%s3] sm:$0xf] %v479
  %544 = vst [vmem:[%s3 + $0x4] sm:$0xf] %v480
  %545 = vst [vmem:[%s3 + $0x8] sm:$0xf] %v481
  %546 = vst [vmem:[%s3 + $0xc] sm:$0xf] %v482
  %547 = vst [vmem:[%s3 + $0x10] sm:$0xf] %v483
  %548 = vst [vmem:[%s3 + $0x14] sm:$0xf] %v484
  %549 = vst [vmem:[%s3 + $0x18] sm:$0xf] %v485
  %550 = vst [vmem:[%s3 + $0x1c] sm:$0xf] %v486
  %551 = vst [vmem:[%s3 + $0x20] sm:$0xf] %v487
  %552 = vst [vmem:[%s3 + $0x24] sm:$0xf] %v488
  %553 = vst [vmem:[%s3 + $0x28] sm:$0xf] %v489
  %554 = vst [vmem:[%s3 + $0x2c] sm:$0xf] %v490
  %555 = vst [vmem:[%s3 + $0x30] sm:$0xf] %v491
  %556 = vst [vmem:[%s3 + $0x34] sm:$0xf] %v492
  %557 = vst [vmem:[%s3 + $0x38] sm:$0xf] %v493
  %558 = vst [vmem:[%s3 + $0x3c] sm:$0xf] %v494
  %559 = vst [vmem:[%s3 + $0x40] sm:$0xf] %v495
  %560 = vst [vmem:[%s3 + $0x44] sm:$0xf] %v496
  %561 = vst [vmem:[%s3 + $0x48] sm:$0xf] %v497
  %562 = vst [vmem:[%s3 + $0x4c] sm:$0xf] %v498
  %563 = vst [vmem:[%s3 + $0x50] sm:$0xf] %v499
  %564 = vst [vmem:[%s3 + $0x54] sm:$0xf] %v500
  %565 = vst [vmem:[%s3 + $0x58] sm:$0xf] %v501
  %566 = vst [vmem:[%s3 + $0x5c] sm:$0xf] %v502
  %567 = vst [vmem:[%s3 + $0x60] sm:$0xf] %v503
  %568 = vst [vmem:[%s3 + $0x64] sm:$0xf] %v504
  %569 = vst [vmem:[%s3 + $0x68] sm:$0xf] %v505
  %570 = vst [vmem:[%s3 + $0x6c] sm:$0xf] %v506
  %571 = vst [vmem:[%s3 + $0x70] sm:$0xf] %v507
  %572 = vst [vmem:[%s3 + $0x74] sm:$0xf] %v508
  %573 = vst [vmem:[%s3 + $0x78] sm:$0xf] %v509
  %574 = vst [vmem:[%s3 + $0x7c] sm:$0xf] %v510
  // Predicated region
  $region14: #{stgkn_block_forward.2} parent=0 // pred_check
    _
  $region15: #{stgkn_block_forward.2} parent=0 // pred_check_branch
    %576 = sbr.rel (0) target = $region17
  $region16: #{stgkn_block_forward.2} parent=0 // pred_region
    _
  $region17: #{stgkn_block_forward.2} parent=0 // pred_fallthru
    _
  // Predicated region
  $region18: #{stgkn_block_forward.2} parent=0 // pred_check
    _
  $region19: #{stgkn_block_forward.2} parent=0 // pred_check_branch
    %578 = sbr.rel (0) target = $region21
  $region20: #{stgkn_block_forward.2} parent=0 // pred_region
    _
  $region21: #{stgkn_block_forward.2} parent=0 // pred_fallthru
    _

// kernel: stgkn_block_forward.3
$region0: #{stgkn_block_forward.3}
  #allocation0 [shape = 'u32[]', space=smem, size = 0x4, offset = 0x4, fixed_abs, tag = 'smem constant byte address 0x4 - core index']
  #allocation1 [shape = 'u32[144,128]{1,0:T(1,128)}', space=vmem, size = 0x12000, scoped, tag = 'internal scratch']
  #allocation2 [shape = 'bf16[2176,8]{1,0:T(8,128)(2,1)}', space=vmem, size = 0x88000, scoped, tag = 'scratch operand']
  #allocation4 [shape = 's32[]', space=sflag, size = 0x4, offset = 0, fixed_abs, tag = 'sflag constant byte address 0x0 - dummy sync flag']
  %s0 = inlined_call_operand.vmem [shape: bf16[2,2048,8], index: 0, kind: input, shape index: {}]
  %s1 = inlined_call_operand.vmem [shape: f32[2,2048,4], index: 1, kind: input, shape index: {}]
  %s2 = inlined_call_operand.vmem [shape: bf16[76,8], index: 2, kind: input, shape index: {}]
  %s3 = inlined_call_operand.vmem [shape: f32[1,8], index: 3, kind: input, shape index: {}]
  %s4 = inlined_call_operand.vmem [shape: f32[2,2048,8], index: 4, kind: output, shape index: {}]
  %s5 = sld [smem:[#allocation0]]
  $region88: #{stgkn_block_forward.3} parent=0
    _
  %s7 = ssub.s32 1, %s5
  %s8 = scalar_select 0, %s7, %s5
  loop: start=0, step=1, limit=6
  $region2: #{stgkn_block_forward.3} parent=0 // loop_pre_header
    _
  $region3: #{stgkn_block_forward.3} parent=0 // loop_header
    %s10 = sphi 0, %s14
    %p11 = scmp.ge.s32.totalorder %s10, 6
    %s17 = sphi 0, %s29
    %s18 = sphi 0, %s25
    %s19 = sphi 0, %s17
    %s20 = sphi 0, %s18
    %s21 = sphi 0, %s19
    %s22 = sphi 0, %s20
    %s32 = sphi 0, %s34
    %s35 = sphi 0, %s32
    %s36 = sphi 0, %s35
    %s52 = sphi 0, %s36
    %s60 = sphi 0, %s62
    %s63 = sphi 0, %s60
    %s64 = sphi 0, %s63
    %s80 = sphi 0, %s64
    %s84 = sphi 0, %s84
    %s86 = sphi 0, %s84
    %s87 = sphi 0, %s86
    %s101 = sphi 0, %s87
    %s105 = sphi 0, %s105
    %s107 = sphi 0, %s105
    %s108 = sphi 0, %s107
    %s122 = sphi 0, %s108
    %s130 = sphi 0, %s132
    %s133 = sphi 0, %s130
    %s134 = sphi 0, %s133
    %s150 = sphi 0, %s134
  $region4: #{stgkn_block_forward.3} parent=0 // loop_header_branch
    %13 = sbr.rel (%p11) target = $region8
  $region5: #{stgkn_block_forward.3} parent=0 // loop_body
    %s15 = ssub.s32 %s10, 1
    %s16 = ssub.s32 %s10, 2
    %s23 = sadd.s32 1, %s18
    %p24 = scmp.ge.s32.totalorder %s23, 2
    %s25 = scalar_select %p24, 0, %s23
    %s26 = sadd.s32 1, %s17
    %s27 = scalar_select %p24, %s26, %s17
    %p28 = scmp.ge.s32.totalorder %s27, 2
    %s29 = scalar_select %p28, 0, %s27
    %s30 = ssub.s32 %s17, %s29
    %p31 = scmp.eq.s32.totalorder %s30, 0
    %s33 = sadd.s32 %s32, 1
    %s34 = scalar_select %p31, %s32, %s33
    %p37 = pneg %p31
    %p38 = scmp.eq.s32.totalorder %s10, 3
    %p39 = por %p37, %p38
    %p40 = scmp.ne.s32.totalorder %s32, %s35
    %p41 = scmp.eq.s32.totalorder %s10, 0
    %p42 = por %p40, %p41
    %p43 = scmp.ne.s32.totalorder %s32, %s35
    %p44 = scmp.eq.s32.totalorder %s15, 3
    %p45 = por %p43, %p44
    %p46 = scmp.ne.s32.totalorder %s35, %s36
    %p47 = scmp.eq.s32.totalorder %s15, 0
    %p48 = por %p46, %p47
    %p49 = scmp.ne.s32.totalorder %s35, %s36
    %p50 = scmp.eq.s32.totalorder %s16, 3
    %p51 = por %p49, %p50
    %p53 = scmp.ne.s32.totalorder %s36, %s52
    %p54 = scmp.eq.s32.totalorder %s16, 0
    %p55 = por %p53, %p54
    %s56 = ssub.s32 %s17, %s29
    %s57 = ssub.s32 %s18, %s25
    %s58 = sor.u32 %s56, %s57
    %p59 = scmp.eq.s32.totalorder %s58, 0
    %s61 = sadd.s32 %s60, 1
    %s62 = scalar_select %p59, %s60, %s61
    %p65 = pneg %p59
    %p66 = scmp.eq.s32.totalorder %s10, 3
    %p67 = por %p65, %p66
    %p68 = scmp.ne.s32.totalorder %s60, %s63
    %p69 = scmp.eq.s32.totalorder %s10, 0
    %p70 = por %p68, %p69
    %p71 = scmp.ne.s32.totalorder %s60, %s63
    %p72 = scmp.eq.s32.totalorder %s15, 3
    %p73 = por %p71, %p72
    %p74 = scmp.ne.s32.totalorder %s63, %s64
    %p75 = scmp.eq.s32.totalorder %s15, 0
    %p76 = por %p74, %p75
    %p77 = scmp.ne.s32.totalorder %s63, %s64
    %p78 = scmp.eq.s32.totalorder %s16, 3
    %p79 = por %p77, %p78
    %p81 = scmp.ne.s32.totalorder %s64, %s80
    %p82 = scmp.eq.s32.totalorder %s16, 0
    %p83 = por %p81, %p82
    %s85 = sadd.s32 %s84, 1
    %p88 = scmp.eq.s32.totalorder %s10, 3
    %p89 = scmp.ne.s32.totalorder %s84, %s86
    %p90 = scmp.eq.s32.totalorder %s10, 0
    %p91 = por %p89, %p90
    %p92 = scmp.ne.s32.totalorder %s84, %s86
    %p93 = scmp.eq.s32.totalorder %s15, 3
    %p94 = por %p92, %p93
    %p95 = scmp.ne.s32.totalorder %s86, %s87
    %p96 = scmp.eq.s32.totalorder %s15, 0
    %p97 = por %p95, %p96
    %p98 = scmp.ne.s32.totalorder %s86, %s87
    %p99 = scmp.eq.s32.totalorder %s16, 3
    %p100 = por %p98, %p99
    %p102 = scmp.ne.s32.totalorder %s87, %s101
    %p103 = scmp.eq.s32.totalorder %s16, 0
    %p104 = por %p102, %p103
    %s106 = sadd.s32 %s105, 1
    %p109 = scmp.eq.s32.totalorder %s10, 3
    %p110 = scmp.ne.s32.totalorder %s105, %s107
    %p111 = scmp.eq.s32.totalorder %s10, 0
    %p112 = por %p110, %p111
    %p113 = scmp.ne.s32.totalorder %s105, %s107
    %p114 = scmp.eq.s32.totalorder %s15, 3
    %p115 = por %p113, %p114
    %p116 = scmp.ne.s32.totalorder %s107, %s108
    %p117 = scmp.eq.s32.totalorder %s15, 0
    %p118 = por %p116, %p117
    %p119 = scmp.ne.s32.totalorder %s107, %s108
    %p120 = scmp.eq.s32.totalorder %s16, 3
    %p121 = por %p119, %p120
    %p123 = scmp.ne.s32.totalorder %s108, %s122
    %p124 = scmp.eq.s32.totalorder %s16, 0
    %p125 = por %p123, %p124
    %s126 = ssub.s32 %s17, %s29
    %s127 = ssub.s32 %s18, %s25
    %s128 = sor.u32 %s126, %s127
    %p129 = scmp.eq.s32.totalorder %s128, 0
    %s131 = sadd.s32 %s130, 1
    %s132 = scalar_select %p129, %s130, %s131
    %p135 = pneg %p129
    %p136 = scmp.eq.s32.totalorder %s10, 3
    %p137 = por %p135, %p136
    %p138 = scmp.ne.s32.totalorder %s130, %s133
    %p139 = scmp.eq.s32.totalorder %s10, 0
    %p140 = por %p138, %p139
    %p141 = scmp.ne.s32.totalorder %s130, %s133
    %p142 = scmp.eq.s32.totalorder %s15, 3
    %p143 = por %p141, %p142
    %p144 = scmp.ne.s32.totalorder %s133, %s134
    %p145 = scmp.eq.s32.totalorder %s15, 0
    %p146 = por %p144, %p145
    %p147 = scmp.ne.s32.totalorder %s133, %s134
    %p148 = scmp.eq.s32.totalorder %s16, 3
    %p149 = por %p147, %p148
    %p151 = scmp.ne.s32.totalorder %s134, %s150
    %p152 = scmp.eq.s32.totalorder %s16, 0
    %p153 = por %p151, %p152
    %p154 = scmp.le.s32.totalorder 1, %s10
    %p155 = scmp.lt.s32.totalorder %s10, 5
    %p156 = pnand %p154, %p155
    %p157 = pneg %p156
    // Predicated region
    $region9: #{stgkn_block_forward.3} parent=5 // pred_check
      _
    $region10: #{stgkn_block_forward.3} parent=5 // pred_check_branch
      %159 = sbr.rel (%p156) target = $region12
    $region11: #{stgkn_block_forward.3} parent=5 // pred_region
      %s160 = ssub.s32 %s10, 1
      // Predicated region
      $region13: #{stgkn_block_forward.3} parent=11 // pred_check
        %p161 = pneg %p97
      $region14: #{stgkn_block_forward.3} parent=11 // pred_check_branch
        %163 = sbr.rel (%p161) target = $region16
      $region15: #{stgkn_block_forward.3} parent=11 // pred_region
        _
      $region16: #{stgkn_block_forward.3} parent=11 // pred_fallthru
        _
      // Predicated region
      $region17: #{stgkn_block_forward.3} parent=11 // pred_check
        %p164 = pneg %p118
      $region18: #{stgkn_block_forward.3} parent=11 // pred_check_branch
        %166 = sbr.rel (%p164) target = $region20
      $region19: #{stgkn_block_forward.3} parent=11 // pred_region
        _
      $region20: #{stgkn_block_forward.3} parent=11 // pred_fallthru
        _
    $region12: #{stgkn_block_forward.3} parent=5 // pred_fallthru
      _
    %p167 = scmp.lt.s32.totalorder %s10, 4
    // Predicated region
    $region21: #{stgkn_block_forward.3} parent=5 // pred_check
      %p168 = pneg %p167
    $region22: #{stgkn_block_forward.3} parent=5 // pred_check_branch
      %170 = sbr.rel (%p168) target = $region24
    $region23: #{stgkn_block_forward.3} parent=5 // pred_region
      // Predicated region
      $region25: #{stgkn_block_forward.3} parent=23 // pred_check
        %p171 = pneg %p42
      $region26: #{stgkn_block_forward.3} parent=23 // pred_check_branch
        %173 = sbr.rel (%p171) target = $region28
      $region27: #{stgkn_block_forward.3} parent=23 // pred_region
        %p174 = scmp.lt.s32.totalorder %s17, 1
        %s175 = scalar_select %p174, %s17, 1
        %s176 = smul.addr %s175, 256
        %s177 = smul.addr %s176, 4
        %s178 = scalar_lea.vmem %s0, %s177
      $region28: #{stgkn_block_forward.3} parent=23 // pred_fallthru
        _
      // Predicated region
      $region29: #{stgkn_block_forward.3} parent=23 // pred_check
        %p179 = pneg %p70
      $region30: #{stgkn_block_forward.3} parent=23 // pred_check_branch
        %181 = sbr.rel (%p179) target = $region32
      $region31: #{stgkn_block_forward.3} parent=23 // pred_region
        %s182 = smul.u32 128, %s18
        %p183 = scmp.lt.s32.totalorder %s17, 1
        %s184 = scalar_select %p183, %s17, 1
        %p185 = scmp.lt.s32.totalorder %s182, 255
        %s186 = scalar_select %p185, %s182, 255
        %s187 = smul.addr %s184, 256
        %s188 = sadd.s32 %s186, %s187
        %s189 = smul.addr %s188, 8
        %s190 = scalar_lea.vmem %s1, %s189
        %s191 = smul.u32 128, %s18
      $region32: #{stgkn_block_forward.3} parent=23 // pred_fallthru
        _
    $region24: #{stgkn_block_forward.3} parent=5 // pred_fallthru
      _
    %p192 = scmp.le.s32.totalorder 1, %s10
    %p193 = scmp.lt.s32.totalorder %s10, 5
    %p194 = pnand %p192, %p193
    %p195 = pneg %p194
    // Predicated region
    $region33: #{stgkn_block_forward.3} parent=5 // pred_check
      _
    $region34: #{stgkn_block_forward.3} parent=5 // pred_check_branch
      %197 = sbr.rel (%p194) target = $region36
    $region35: #{stgkn_block_forward.3} parent=5 // pred_region
      %s198 = ssub.s32 %s10, 1
      %p199 = scmp.lt.s32.totalorder %s19, 1
      %s200 = scalar_select %p199, %s19, 1
      %s201 = smul.addr %s200, 256
      %s202 = smul.addr %s201, 4
      %s203 = scalar_lea.vmem %s0, %s202
      %p204 = pneg %p48
      %p205 = pneg %p45
      %s206 = smul.u32 128, %s20
      %p207 = scmp.lt.s32.totalorder %s19, 1
      %s208 = scalar_select %p207, %s19, 1
      %p209 = scmp.lt.s32.totalorder %s206, 255
      %s210 = scalar_select %p209, %s206, 255
      %s211 = smul.addr %s208, 256
      %s212 = sadd.s32 %s210, %s211
      %s213 = smul.addr %s212, 8
      %s214 = scalar_lea.vmem %s1, %s213
      %p215 = pneg %p76
      %p216 = pneg %p73
      %p217 = pneg %p97
      %p218 = pneg %p94
      %p219 = pneg %p118
      %p220 = pneg %p115
      %p221 = pneg %p146
      %p222 = pneg %p143
      %s223 = smul.u32 128, %s20
      %p224 = scmp.lt.s32.totalorder %s19, 1
      %s225 = scalar_select %p224, %s19, 1
      %p226 = scmp.lt.s32.totalorder %s223, 255
      %s227 = scalar_select %p226, %s223, 255
      %s228 = smul.addr %s225, 256
      %s229 = sadd.s32 %s227, %s228
      %s230 = smul.addr %s229, 8
      %s231 = scalar_lea.vmem %s4, %s230
      %p232 = scmp.lt.s32.totalorder %s19, 1
      %s233 = scalar_select %p232, %s19, 1
      %s234 = smul.addr %s233, 256
      %s235 = smul.addr %s234, 4
      %s236 = scalar_lea.vmem %s0, %s235
      %s237 = smul.u32 128, %s20
      %p238 = scmp.lt.s32.totalorder %s19, 1
      %s239 = scalar_select %p238, %s19, 1
      %p240 = scmp.lt.s32.totalorder %s237, 255
      %s241 = scalar_select %p240, %s237, 255
      %s242 = smul.addr %s239, 256
      %s243 = sadd.s32 %s241, %s242
      %s244 = smul.addr %s243, 8
      %s245 = scalar_lea.vmem %s1, %s244
      %s246 = smul.u32 128, %s20
      %s247 = smul.u32 128, %s20
      %p248 = scmp.lt.s32.totalorder %s19, 1
      %s249 = scalar_select %p248, %s19, 1
      %p250 = scmp.lt.s32.totalorder %s247, 255
      %s251 = scalar_select %p250, %s247, 255
      %s252 = smul.addr %s249, 256
      %s253 = sadd.s32 %s251, %s252
      %s254 = smul.addr %s253, 8
      %s255 = scalar_lea.vmem %s4, %s254
      %s256 = smul.u32 128, %s20
      %p258 = scmp.eq.s32.totalorder %s20, 0
      // Predicated region
      $region37: #{stgkn_block_forward.3} parent=35 // pred_check
        %p259 = pneg %p258
      $region38: #{stgkn_block_forward.3} parent=35 // pred_check_branch
        %261 = sbr.rel (%p259) target = $region40
      $region39: #{stgkn_block_forward.3} parent=35 // pred_region
        %vm262 = vcmask 60416
        %263 = vst.msk [vmem:[#allocation2] sm:$0xf] %vm262, 0
        %264 = vst.msk [vmem:[#allocation2 + $0x4] sm:$0xf] %vm262, 0
        %265 = vst.msk [vmem:[#allocation2 + $0x8] sm:$0xf] %vm262, 0
        %266 = vst.msk [vmem:[#allocation2 + $0xc] sm:$0xf] %vm262, 0
        %267 = vst.msk [vmem:[#allocation2 + $0x10] sm:$0xf] %vm262, 0
        %268 = vst.msk [vmem:[#allocation2 + $0x14] sm:$0xf] %vm262, 0
        %269 = vst.msk [vmem:[#allocation2 + $0x18] sm:$0xf] %vm262, 0
        %270 = vst.msk [vmem:[#allocation2 + $0x1c] sm:$0xf] %vm262, 0
        %271 = vst.msk [vmem:[#allocation2 + $0x420] sm:$0xf] %vm262, 0
        %272 = vst.msk [vmem:[#allocation2 + $0x424] sm:$0xf] %vm262, 0
        %273 = vst.msk [vmem:[#allocation2 + $0x428] sm:$0xf] %vm262, 0
        %274 = vst.msk [vmem:[#allocation2 + $0x42c] sm:$0xf] %vm262, 0
        %275 = vst.msk [vmem:[#allocation2 + $0x430] sm:$0xf] %vm262, 0
        %276 = vst.msk [vmem:[#allocation2 + $0x434] sm:$0xf] %vm262, 0
        %277 = vst.msk [vmem:[#allocation2 + $0x438] sm:$0xf] %vm262, 0
        %278 = vst.msk [vmem:[#allocation2 + $0x43c] sm:$0xf] %vm262, 0
        $region41: #{stgkn_block_forward.3} parent=39
          #allocation3 [shape = 's32[1]{0}', space=sflag, size = 0x4, scoped, tag = 'scoped memory for stgkn_block_forward.3']
          %s279 = scalar_lea.vmem [#allocation2], 32
          %p281 = scmp.lt.u32.totalorder 1024, 8
          %p282 = pneg %p281
          // Predicated region
          $region42: #{stgkn_block_forward.3} parent=41 // pred_check
            _
          $region43: #{stgkn_block_forward.3} parent=41 // pred_check_branch
            %284 = sbr.rel (%p281) target = $region45
          $region44: #{stgkn_block_forward.3} parent=41 // pred_region
            %s300 = sand.u32 1024, 7
            %p301 = scmp.eq.s32.totalorder %s300, 0
            // Predicated region
            $region57: #{stgkn_block_forward.3} parent=44 // pred_check
              %p302 = pneg %p301
            $region58: #{stgkn_block_forward.3} parent=44 // pred_check_branch
              %304 = sbr.rel (%p302) target = $region60
            $region59: #{stgkn_block_forward.3} parent=44 // pred_region
              loop: start=0, step=1, limit=1
              $region61: #{stgkn_block_forward.3} parent=59 // loop_pre_header
                _
              $region62: #{stgkn_block_forward.3} parent=59 // loop_header
                %s306 = sphi 0, %s310
                %p307 = scmp.ge.s32.totalorder %s306, 1
                %s311 = sphi %s236, %s236
                %s312 = sphi %s279, %s279
              $region63: #{stgkn_block_forward.3} parent=59 // loop_header_branch
                %309 = sbr.rel (%p307) target = $region67
              $region64: #{stgkn_block_forward.3} parent=59 // loop_body
                %v313 = vld [vmem:[%s311] sm:$0xff]
                %314 = vst [vmem:[%s312] sm:$0xff] %v313
                %v315 = vld [vmem:[%s311 + $0x8] sm:$0xff]
                %316 = vst [vmem:[%s312 + $0x8] sm:$0xff] %v315
                %v317 = vld [vmem:[%s311 + $0x10] sm:$0xff]
                %318 = vst [vmem:[%s312 + $0x10] sm:$0xff] %v317
                %v319 = vld [vmem:[%s311 + $0x18] sm:$0xff]
                %320 = vst [vmem:[%s312 + $0x18] sm:$0xff] %v319
                %v321 = vld [vmem:[%s311 + $0x20] sm:$0xff]
                %322 = vst [vmem:[%s312 + $0x20] sm:$0xff] %v321
                %v323 = vld [vmem:[%s311 + $0x28] sm:$0xff]
                %324 = vst [vmem:[%s312 + $0x28] sm:$0xff] %v323
                %v325 = vld [vmem:[%s311 + $0x30] sm:$0xff]
                %326 = vst [vmem:[%s312 + $0x30] sm:$0xff] %v325
                %v327 = vld [vmem:[%s311 + $0x38] sm:$0xff]
                %328 = vst [vmem:[%s312 + $0x38] sm:$0xff] %v327
                %v329 = vld [vmem:[%s311 + $0x40] sm:$0xff]
                %330 = vst [vmem:[%s312 + $0x40] sm:$0xff] %v329
                %v331 = vld [vmem:[%s311 + $0x48] sm:$0xff]
                %332 = vst [vmem:[%s312 + $0x48] sm:$0xff] %v331
                %v333 = vld [vmem:[%s311 + $0x50] sm:$0xff]
                %334 = vst [vmem:[%s312 + $0x50] sm:$0xff] %v333
                %v335 = vld [vmem:[%s311 + $0x58] sm:$0xff]
                %336 = vst [vmem:[%s312 + $0x58] sm:$0xff] %v335
                %v337 = vld [vmem:[%s311 + $0x60] sm:$0xff]
                %338 = vst [vmem:[%s312 + $0x60] sm:$0xff] %v337
                %v339 = vld [vmem:[%s311 + $0x68] sm:$0xff]
                %340 = vst [vmem:[%s312 + $0x68] sm:$0xff] %v339
                %v341 = vld [vmem:[%s311 + $0x70] sm:$0xff]
                %342 = vst [vmem:[%s312 + $0x70] sm:$0xff] %v341
                %v343 = vld [vmem:[%s311 + $0x78] sm:$0xff]
                %344 = vst [vmem:[%s312 + $0x78] sm:$0xff] %v343
                %v345 = vld [vmem:[%s311 + $0x80] sm:$0xff]
                %346 = vst [vmem:[%s312 + $0x80] sm:$0xff] %v345
                %v347 = vld [vmem:[%s311 + $0x88] sm:$0xff]
                %348 = vst [vmem:[%s312 + $0x88] sm:$0xff] %v347
                %v349 = vld [vmem:[%s311 + $0x90] sm:$0xff]
                %350 = vst [vmem:[%s312 + $0x90] sm:$0xff] %v349
                %v351 = vld [vmem:[%s311 + $0x98] sm:$0xff]
                %352 = vst [vmem:[%s312 + $0x98] sm:$0xff] %v351
                %v353 = vld [vmem:[%s311 + $0xa0] sm:$0xff]
                %354 = vst [vmem:[%s312 + $0xa0] sm:$0xff] %v353
                %v355 = vld [vmem:[%s311 + $0xa8] sm:$0xff]
                %356 = vst [vmem:[%s312 + $0xa8] sm:$0xff] %v355
                %v357 = vld [vmem:[%s311 + $0xb0] sm:$0xff]
                %358 = vst [vmem:[%s312 + $0xb0] sm:$0xff] %v357
                %v359 = vld [vmem:[%s311 + $0xb8] sm:$0xff]
                %360 = vst [vmem:[%s312 + $0xb8] sm:$0xff] %v359
                %v361 = vld [vmem:[%s311 + $0xc0] sm:$0xff]
                %362 = vst [vmem:[%s312 + $0xc0] sm:$0xff] %v361
                %v363 = vld [vmem:[%s311 + $0xc8] sm:$0xff]
                %364 = vst [vmem:[%s312 + $0xc8] sm:$0xff] %v363
                %v365 = vld [vmem:[%s311 + $0xd0] sm:$0xff]
                %366 = vst [vmem:[%s312 + $0xd0] sm:$0xff] %v365
                %v367 = vld [vmem:[%s311 + $0xd8] sm:$0xff]
                %368 = vst [vmem:[%s312 + $0xd8] sm:$0xff] %v367
                %v369 = vld [vmem:[%s311 + $0xe0] sm:$0xff]
                %370 = vst [vmem:[%s312 + $0xe0] sm:$0xff] %v369
                %v371 = vld [vmem:[%s311 + $0xe8] sm:$0xff]
                %372 = vst [vmem:[%s312 + $0xe8] sm:$0xff] %v371
                %v373 = vld [vmem:[%s311 + $0xf0] sm:$0xff]
                %374 = vst [vmem:[%s312 + $0xf0] sm:$0xff] %v373
                %v375 = vld [vmem:[%s311 + $0xf8] sm:$0xff]
                %376 = vst [vmem:[%s312 + $0xf8] sm:$0xff] %v375
                %v377 = vld [vmem:[%s311 + $0x100] sm:$0xff]
                %378 = vst [vmem:[%s312 + $0x100] sm:$0xff] %v377
                %v379 = vld [vmem:[%s311 + $0x108] sm:$0xff]
                %380 = vst [vmem:[%s312 + $0x108] sm:$0xff] %v379
                %v381 = vld [vmem:[%s311 + $0x110] sm:$0xff]
                %382 = vst [vmem:[%s312 + $0x110] sm:$0xff] %v381
                %v383 = vld [vmem:[%s311 + $0x118] sm:$0xff]
                %384 = vst [vmem:[%s312 + $0x118] sm:$0xff] %v383
                %v385 = vld [vmem:[%s311 + $0x120] sm:$0xff]
                %386 = vst [vmem:[%s312 + $0x120] sm:$0xff] %v385
                %v387 = vld [vmem:[%s311 + $0x128] sm:$0xff]
                %388 = vst [vmem:[%s312 + $0x128] sm:$0xff] %v387
                %v389 = vld [vmem:[%s311 + $0x130] sm:$0xff]
                %390 = vst [vmem:[%s312 + $0x130] sm:$0xff] %v389
                %v391 = vld [vmem:[%s311 + $0x138] sm:$0xff]
                %392 = vst [vmem:[%s312 + $0x138] sm:$0xff] %v391
                %v393 = vld [vmem:[%s311 + $0x140] sm:$0xff]
                %394 = vst [vmem:[%s312 + $0x140] sm:$0xff] %v393
                %v395 = vld [vmem:[%s311 + $0x148] sm:$0xff]
                %396 = vst [vmem:[%s312 + $0x148] sm:$0xff] %v395
                %v397 = vld [vmem:[%s311 + $0x150] sm:$0xff]
                %398 = vst [vmem:[%s312 + $0x150] sm:$0xff] %v397
                %v399 = vld [vmem:[%s311 + $0x158] sm:$0xff]
                %400 = vst [vmem:[%s312 + $0x158] sm:$0xff] %v399
                %v401 = vld [vmem:[%s311 + $0x160] sm:$0xff]
                %402 = vst [vmem:[%s312 + $0x160] sm:$0xff] %v401
                %v403 = vld [vmem:[%s311 + $0x168] sm:$0xff]
                %404 = vst [vmem:[%s312 + $0x168] sm:$0xff] %v403
                %v405 = vld [vmem:[%s311 + $0x170] sm:$0xff]
                %406 = vst [vmem:[%s312 + $0x170] sm:$0xff] %v405
                %v407 = vld [vmem:[%s311 + $0x178] sm:$0xff]
                %408 = vst [vmem:[%s312 + $0x178] sm:$0xff] %v407
                %v409 = vld [vmem:[%s311 + $0x180] sm:$0xff]
                %410 = vst [vmem:[%s312 + $0x180] sm:$0xff] %v409
                %v411 = vld [vmem:[%s311 + $0x188] sm:$0xff]
                %412 = vst [vmem:[%s312 + $0x188] sm:$0xff] %v411
                %v413 = vld [vmem:[%s311 + $0x190] sm:$0xff]
                %414 = vst [vmem:[%s312 + $0x190] sm:$0xff] %v413
                %v415 = vld [vmem:[%s311 + $0x198] sm:$0xff]
                %416 = vst [vmem:[%s312 + $0x198] sm:$0xff] %v415
                %v417 = vld [vmem:[%s311 + $0x1a0] sm:$0xff]
                %418 = vst [vmem:[%s312 + $0x1a0] sm:$0xff] %v417
                %v419 = vld [vmem:[%s311 + $0x1a8] sm:$0xff]
                %420 = vst [vmem:[%s312 + $0x1a8] sm:$0xff] %v419
                %v421 = vld [vmem:[%s311 + $0x1b0] sm:$0xff]
                %422 = vst [vmem:[%s312 + $0x1b0] sm:$0xff] %v421
                %v423 = vld [vmem:[%s311 + $0x1b8] sm:$0xff]
                %424 = vst [vmem:[%s312 + $0x1b8] sm:$0xff] %v423
                %v425 = vld [vmem:[%s311 + $0x1c0] sm:$0xff]
                %426 = vst [vmem:[%s312 + $0x1c0] sm:$0xff] %v425
                %v427 = vld [vmem:[%s311 + $0x1c8] sm:$0xff]
                %428 = vst [vmem:[%s312 + $0x1c8] sm:$0xff] %v427
                %v429 = vld [vmem:[%s311 + $0x1d0] sm:$0xff]
                %430 = vst [vmem:[%s312 + $0x1d0] sm:$0xff] %v429
                %v431 = vld [vmem:[%s311 + $0x1d8] sm:$0xff]
                %432 = vst [vmem:[%s312 + $0x1d8] sm:$0xff] %v431
                %v433 = vld [vmem:[%s311 + $0x1e0] sm:$0xff]
                %434 = vst [vmem:[%s312 + $0x1e0] sm:$0xff] %v433
                %v435 = vld [vmem:[%s311 + $0x1e8] sm:$0xff]
                %436 = vst [vmem:[%s312 + $0x1e8] sm:$0xff] %v435
                %v437 = vld [vmem:[%s311 + $0x1f0] sm:$0xff]
                %438 = vst [vmem:[%s312 + $0x1f0] sm:$0xff] %v437
                %v439 = vld [vmem:[%s311 + $0x1f8] sm:$0xff]
                %440 = vst [vmem:[%s312 + $0x1f8] sm:$0xff] %v439
                %v441 = vld [vmem:[%s311 + $0x200] sm:$0xff]
                %442 = vst [vmem:[%s312 + $0x200] sm:$0xff] %v441
                %v443 = vld [vmem:[%s311 + $0x208] sm:$0xff]
                %444 = vst [vmem:[%s312 + $0x208] sm:$0xff] %v443
                %v445 = vld [vmem:[%s311 + $0x210] sm:$0xff]
                %446 = vst [vmem:[%s312 + $0x210] sm:$0xff] %v445
                %v447 = vld [vmem:[%s311 + $0x218] sm:$0xff]
                %448 = vst [vmem:[%s312 + $0x218] sm:$0xff] %v447
                %v449 = vld [vmem:[%s311 + $0x220] sm:$0xff]
                %450 = vst [vmem:[%s312 + $0x220] sm:$0xff] %v449
                %v451 = vld [vmem:[%s311 + $0x228] sm:$0xff]
                %452 = vst [vmem:[%s312 + $0x228] sm:$0xff] %v451
                %v453 = vld [vmem:[%s311 + $0x230] sm:$0xff]
                %454 = vst [vmem:[%s312 + $0x230] sm:$0xff] %v453
                %v455 = vld [vmem:[%s311 + $0x238] sm:$0xff]
                %456 = vst [vmem:[%s312 + $0x238] sm:$0xff] %v455
                %v457 = vld [vmem:[%s311 + $0x240] sm:$0xff]
                %458 = vst [vmem:[%s312 + $0x240] sm:$0xff] %v457
                %v459 = vld [vmem:[%s311 + $0x248] sm:$0xff]
                %460 = vst [vmem:[%s312 + $0x248] sm:$0xff] %v459
                %v461 = vld [vmem:[%s311 + $0x250] sm:$0xff]
                %462 = vst [vmem:[%s312 + $0x250] sm:$0xff] %v461
                %v463 = vld [vmem:[%s311 + $0x258] sm:$0xff]
                %464 = vst [vmem:[%s312 + $0x258] sm:$0xff] %v463
                %v465 = vld [vmem:[%s311 + $0x260] sm:$0xff]
                %466 = vst [vmem:[%s312 + $0x260] sm:$0xff] %v465
                %v467 = vld [vmem:[%s311 + $0x268] sm:$0xff]
                %468 = vst [vmem:[%s312 + $0x268] sm:$0xff] %v467
                %v469 = vld [vmem:[%s311 + $0x270] sm:$0xff]
                %470 = vst [vmem:[%s312 + $0x270] sm:$0xff] %v469
                %v471 = vld [vmem:[%s311 + $0x278] sm:$0xff]
                %472 = vst [vmem:[%s312 + $0x278] sm:$0xff] %v471
                %v473 = vld [vmem:[%s311 + $0x280] sm:$0xff]
                %474 = vst [vmem:[%s312 + $0x280] sm:$0xff] %v473
                %v475 = vld [vmem:[%s311 + $0x288] sm:$0xff]
                %476 = vst [vmem:[%s312 + $0x288] sm:$0xff] %v475
                %v477 = vld [vmem:[%s311 + $0x290] sm:$0xff]
                %478 = vst [vmem:[%s312 + $0x290] sm:$0xff] %v477
                %v479 = vld [vmem:[%s311 + $0x298] sm:$0xff]
                %480 = vst [vmem:[%s312 + $0x298] sm:$0xff] %v479
                %v481 = vld [vmem:[%s311 + $0x2a0] sm:$0xff]
                %482 = vst [vmem:[%s312 + $0x2a0] sm:$0xff] %v481
                %v483 = vld [vmem:[%s311 + $0x2a8] sm:$0xff]
                %484 = vst [vmem:[%s312 + $0x2a8] sm:$0xff] %v483
                %v485 = vld [vmem:[%s311 + $0x2b0] sm:$0xff]
                %486 = vst [vmem:[%s312 + $0x2b0] sm:$0xff] %v485
                %v487 = vld [vmem:[%s311 + $0x2b8] sm:$0xff]
                %488 = vst [vmem:[%s312 + $0x2b8] sm:$0xff] %v487
                %v489 = vld [vmem:[%s311 + $0x2c0] sm:$0xff]
                %490 = vst [vmem:[%s312 + $0x2c0] sm:$0xff] %v489
                %v491 = vld [vmem:[%s311 + $0x2c8] sm:$0xff]
                %492 = vst [vmem:[%s312 + $0x2c8] sm:$0xff] %v491
                %v493 = vld [vmem:[%s311 + $0x2d0] sm:$0xff]
                %494 = vst [vmem:[%s312 + $0x2d0] sm:$0xff] %v493
                %v495 = vld [vmem:[%s311 + $0x2d8] sm:$0xff]
                %496 = vst [vmem:[%s312 + $0x2d8] sm:$0xff] %v495
                %v497 = vld [vmem:[%s311 + $0x2e0] sm:$0xff]
                %498 = vst [vmem:[%s312 + $0x2e0] sm:$0xff] %v497
                %v499 = vld [vmem:[%s311 + $0x2e8] sm:$0xff]
                %500 = vst [vmem:[%s312 + $0x2e8] sm:$0xff] %v499
                %v501 = vld [vmem:[%s311 + $0x2f0] sm:$0xff]
                %502 = vst [vmem:[%s312 + $0x2f0] sm:$0xff] %v501
                %v503 = vld [vmem:[%s311 + $0x2f8] sm:$0xff]
                %504 = vst [vmem:[%s312 + $0x2f8] sm:$0xff] %v503
                %v505 = vld [vmem:[%s311 + $0x300] sm:$0xff]
                %506 = vst [vmem:[%s312 + $0x300] sm:$0xff] %v505
                %v507 = vld [vmem:[%s311 + $0x308] sm:$0xff]
                %508 = vst [vmem:[%s312 + $0x308] sm:$0xff] %v507
                %v509 = vld [vmem:[%s311 + $0x310] sm:$0xff]
                %510 = vst [vmem:[%s312 + $0x310] sm:$0xff] %v509
                %v511 = vld [vmem:[%s311 + $0x318] sm:$0xff]
                %512 = vst [vmem:[%s312 + $0x318] sm:$0xff] %v511
                %v513 = vld [vmem:[%s311 + $0x320] sm:$0xff]
                %514 = vst [vmem:[%s312 + $0x320] sm:$0xff] %v513
                %v515 = vld [vmem:[%s311 + $0x328] sm:$0xff]
                %516 = vst [vmem:[%s312 + $0x328] sm:$0xff] %v515
                %v517 = vld [vmem:[%s311 + $0x330] sm:$0xff]
                %518 = vst [vmem:[%s312 + $0x330] sm:$0xff] %v517
                %v519 = vld [vmem:[%s311 + $0x338] sm:$0xff]
                %520 = vst [vmem:[%s312 + $0x338] sm:$0xff] %v519
                %v521 = vld [vmem:[%s311 + $0x340] sm:$0xff]
                %522 = vst [vmem:[%s312 + $0x340] sm:$0xff] %v521
                %v523 = vld [vmem:[%s311 + $0x348] sm:$0xff]
                %524 = vst [vmem:[%s312 + $0x348] sm:$0xff] %v523
                %v525 = vld [vmem:[%s311 + $0x350] sm:$0xff]
                %526 = vst [vmem:[%s312 + $0x350] sm:$0xff] %v525
                %v527 = vld [vmem:[%s311 + $0x358] sm:$0xff]
                %528 = vst [vmem:[%s312 + $0x358] sm:$0xff] %v527
                %v529 = vld [vmem:[%s311 + $0x360] sm:$0xff]
                %530 = vst [vmem:[%s312 + $0x360] sm:$0xff] %v529
                %v531 = vld [vmem:[%s311 + $0x368] sm:$0xff]
                %532 = vst [vmem:[%s312 + $0x368] sm:$0xff] %v531
                %v533 = vld [vmem:[%s311 + $0x370] sm:$0xff]
                %534 = vst [vmem:[%s312 + $0x370] sm:$0xff] %v533
                %v535 = vld [vmem:[%s311 + $0x378] sm:$0xff]
                %536 = vst [vmem:[%s312 + $0x378] sm:$0xff] %v535
                %v537 = vld [vmem:[%s311 + $0x380] sm:$0xff]
                %538 = vst [vmem:[%s312 + $0x380] sm:$0xff] %v537
                %v539 = vld [vmem:[%s311 + $0x388] sm:$0xff]
                %540 = vst [vmem:[%s312 + $0x388] sm:$0xff] %v539
                %v541 = vld [vmem:[%s311 + $0x390] sm:$0xff]
                %542 = vst [vmem:[%s312 + $0x390] sm:$0xff] %v541
                %v543 = vld [vmem:[%s311 + $0x398] sm:$0xff]
                %544 = vst [vmem:[%s312 + $0x398] sm:$0xff] %v543
                %v545 = vld [vmem:[%s311 + $0x3a0] sm:$0xff]
                %546 = vst [vmem:[%s312 + $0x3a0] sm:$0xff] %v545
                %v547 = vld [vmem:[%s311 + $0x3a8] sm:$0xff]
                %548 = vst [vmem:[%s312 + $0x3a8] sm:$0xff] %v547
                %v549 = vld [vmem:[%s311 + $0x3b0] sm:$0xff]
                %550 = vst [vmem:[%s312 + $0x3b0] sm:$0xff] %v549
                %v551 = vld [vmem:[%s311 + $0x3b8] sm:$0xff]
                %552 = vst [vmem:[%s312 + $0x3b8] sm:$0xff] %v551
                %v553 = vld [vmem:[%s311 + $0x3c0] sm:$0xff]
                %554 = vst [vmem:[%s312 + $0x3c0] sm:$0xff] %v553
                %v555 = vld [vmem:[%s311 + $0x3c8] sm:$0xff]
                %556 = vst [vmem:[%s312 + $0x3c8] sm:$0xff] %v555
                %v557 = vld [vmem:[%s311 + $0x3d0] sm:$0xff]
                %558 = vst [vmem:[%s312 + $0x3d0] sm:$0xff] %v557
                %v559 = vld [vmem:[%s311 + $0x3d8] sm:$0xff]
                %560 = vst [vmem:[%s312 + $0x3d8] sm:$0xff] %v559
                %v561 = vld [vmem:[%s311 + $0x3e0] sm:$0xff]
                %562 = vst [vmem:[%s312 + $0x3e0] sm:$0xff] %v561
                %v563 = vld [vmem:[%s311 + $0x3e8] sm:$0xff]
                %564 = vst [vmem:[%s312 + $0x3e8] sm:$0xff] %v563
                %v565 = vld [vmem:[%s311 + $0x3f0] sm:$0xff]
                %566 = vst [vmem:[%s312 + $0x3f0] sm:$0xff] %v565
                %v567 = vld [vmem:[%s311 + $0x3f8] sm:$0xff]
                %568 = vst [vmem:[%s312 + $0x3f8] sm:$0xff] %v567
              $region65: #{stgkn_block_forward.3} parent=59 // loop_footer
                %s310 = sadd.s32 1, %s306
              $region66: #{stgkn_block_forward.3} parent=59 // loop_footer_branch
                %305 = sbr.rel target = $region62
              $region67: #{stgkn_block_forward.3} parent=59 // loop_exit
                _
            $region60: #{stgkn_block_forward.3} parent=44 // pred_fallthru
              _
            %p569 = pneg %p301
            // Predicated region
            $region68: #{stgkn_block_forward.3} parent=44 // pred_check
              _
            $region69: #{stgkn_block_forward.3} parent=44 // pred_check_branch
              %571 = sbr.rel (%p301) target = $region71
            $region70: #{stgkn_block_forward.3} parent=44 // pred_region
              %s572 = sand.u32 1024, 7
            $region71: #{stgkn_block_forward.3} parent=44 // pred_fallthru
              _
          $region45: #{stgkn_block_forward.3} parent=41 // pred_fallthru
            _
          // Predicated region
          $region46: #{stgkn_block_forward.3} parent=41 // pred_check
            %p285 = pneg %p281
          $region47: #{stgkn_block_forward.3} parent=41 // pred_check_branch
            %287 = sbr.rel (%p285) target = $region49
          $region48: #{stgkn_block_forward.3} parent=41 // pred_region
            %s288 = sshll.u32 1, 1024
            %s289 = ssub.s32 %s288, 1
            loop: start=0, step=1, limit=1
            $region50: #{stgkn_block_forward.3} parent=48 // loop_pre_header
              _
            $region51: #{stgkn_block_forward.3} parent=48 // loop_header
              %s291 = sphi 0, %s295
              %p292 = scmp.ge.s32.totalorder %s291, 1
              %s296 = sphi %s236, %s236
              %s297 = sphi %s279, %s279
            $region52: #{stgkn_block_forward.3} parent=48 // loop_header_branch
              %294 = sbr.rel (%p292) target = $region56
            $region53: #{stgkn_block_forward.3} parent=48 // loop_body
              %v298 = vld [vmem:[%s296] sm:%s289]
              %299 = vst [vmem:[%s297] sm:%s289] %v298
            $region54: #{stgkn_block_forward.3} parent=48 // loop_footer
              %s295 = sadd.s32 1, %s291
            $region55: #{stgkn_block_forward.3} parent=48 // loop_footer_branch
              %290 = sbr.rel target = $region51
            $region56: #{stgkn_block_forward.3} parent=48 // loop_exit
              _
          $region49: #{stgkn_block_forward.3} parent=41 // pred_fallthru
            _
          // Predicated region
          $region72: #{stgkn_block_forward.3} parent=41 // pred_check
            _
          $region73: #{stgkn_block_forward.3} parent=41 // pred_check_branch
            %575 = sbr.rel (0) target = $region75
          $region74: #{stgkn_block_forward.3} parent=41 // pred_region
            %576 = vsyncadd [#allocation3], 16384
          $region75: #{stgkn_block_forward.3} parent=41 // pred_fallthru
            _
          %s577 = smul.u32 4, 256
          %s578 = smul.u32 %s577, 1
          %s579 = sshll.u32 %s578, 4
          %580 = dma.done [#allocation3], %s579
      $region40: #{stgkn_block_forward.3} parent=35 // pred_fallthru
        _
      %s581 = smul.u32 %s20, 1024
      %s582 = sshra.s32 %s581, 3
      %s583 = sand.u32 %s581, 7
      %s584 = smul.addr %s582, 4
      %s585 = scalar_lea.vmem [#allocation2], %s584
      %v586 = vld [vmem:[%s585] sm:$0xf]
      %v587 = vld [vmem:[%s585 + $0x4] sm:$0xf]
      %v588 = vld [vmem:[%s585 + $0x8] sm:$0xf]
      %v589 = vld [vmem:[%s585 + $0xc] sm:$0xf]
      %v590 = vld [vmem:[%s585 + $0x10] sm:$0xf]
      %v591 = vld [vmem:[%s585 + $0x14] sm:$0xf]
      %v592 = vld [vmem:[%s585 + $0x18] sm:$0xf]
      %v593 = vld [vmem:[%s585 + $0x1c] sm:$0xf]
      %v594 = vld [vmem:[%s585 + $0x20] sm:$0xf]
      %v595 = vld [vmem:[%s585 + $0x24] sm:$0xf]
      %v596 = vld [vmem:[%s585 + $0x28] sm:$0xf]
      %v597 = vld [vmem:[%s585 + $0x2c] sm:$0xf]
      %v598 = vld [vmem:[%s585 + $0x30] sm:$0xf]
      %v599 = vld [vmem:[%s585 + $0x34] sm:$0xf]
      %v600 = vld [vmem:[%s585 + $0x38] sm:$0xf]
      %v601 = vld [vmem:[%s585 + $0x3c] sm:$0xf]
      %v602 = vld [vmem:[%s585 + $0x40] sm:$0xf]
      %v603 = vld [vmem:[%s585 + $0x44] sm:$0xf]
      %v604 = vld [vmem:[%s585 + $0x48] sm:$0xf]
      %v605 = vld [vmem:[%s585 + $0x4c] sm:$0xf]
      %v606 = vld [vmem:[%s585 + $0x50] sm:$0xf]
      %v607 = vld [vmem:[%s585 + $0x54] sm:$0xf]
      %v608 = vld [vmem:[%s585 + $0x58] sm:$0xf]
      %v609 = vld [vmem:[%s585 + $0x5c] sm:$0xf]
      %v610 = vld [vmem:[%s585 + $0x60] sm:$0xf]
      %v611 = vld [vmem:[%s585 + $0x64] sm:$0xf]
      %v612 = vld [vmem:[%s585 + $0x68] sm:$0xf]
      %v613 = vld [vmem:[%s585 + $0x6c] sm:$0xf]
      %v614 = vld [vmem:[%s585 + $0x70] sm:$0xf]
      %v615 = vld [vmem:[%s585 + $0x74] sm:$0xf]
      %v616 = vld [vmem:[%s585 + $0x78] sm:$0xf]
      %v617 = vld [vmem:[%s585 + $0x7c] sm:$0xf]
      %v618 = vld [vmem:[%s585 + $0x80] sm:$0xf]
      %v619 = vld [vmem:[%s585 + $0x84] sm:$0xf]
      %v620 = vld [vmem:[%s585 + $0x88] sm:$0xf]
      %v621 = vld [vmem:[%s585 + $0x8c] sm:$0xf]
      %v622 = vld [vmem:[%s585 + $0x90] sm:$0xf]
      %v623 = vld [vmem:[%s585 + $0x94] sm:$0xf]
      %v624 = vld [vmem:[%s585 + $0x98] sm:$0xf]
      %v625 = vld [vmem:[%s585 + $0x9c] sm:$0xf]
      %v626 = vld [vmem:[%s585 + $0xa0] sm:$0xf]
      %v627 = vld [vmem:[%s585 + $0xa4] sm:$0xf]
      %v628 = vld [vmem:[%s585 + $0xa8] sm:$0xf]
      %v629 = vld [vmem:[%s585 + $0xac] sm:$0xf]
      %v630 = vld [vmem:[%s585 + $0xb0] sm:$0xf]
      %v631 = vld [vmem:[%s585 + $0xb4] sm:$0xf]
      %v632 = vld [vmem:[%s585 + $0xb8] sm:$0xf]
      %v633 = vld [vmem:[%s585 + $0xbc] sm:$0xf]
      %v634 = vld [vmem:[%s585 + $0xc0] sm:$0xf]
      %v635 = vld [vmem:[%s585 + $0xc4] sm:$0xf]
      %v636 = vld [vmem:[%s585 + $0xc8] sm:$0xf]
      %v637 = vld [vmem:[%s585 + $0xcc] sm:$0xf]
      %v638 = vld [vmem:[%s585 + $0xd0] sm:$0xf]
      %v639 = vld [vmem:[%s585 + $0xd4] sm:$0xf]
      %v640 = vld [vmem:[%s585 + $0xd8] sm:$0xf]
      %v641 = vld [vmem:[%s585 + $0xdc] sm:$0xf]
      %v642 = vld [vmem:[%s585 + $0xe0] sm:$0xf]
      %v643 = vld [vmem:[%s585 + $0xe4] sm:$0xf]
      %v644 = vld [vmem:[%s585 + $0xe8] sm:$0xf]
      %v645 = vld [vmem:[%s585 + $0xec] sm:$0xf]
      %v646 = vld [vmem:[%s585 + $0xf0] sm:$0xf]
      %v647 = vld [vmem:[%s585 + $0xf4] sm:$0xf]
      %v648 = vld [vmem:[%s585 + $0xf8] sm:$0xf]
      %v649 = vld [vmem:[%s585 + $0xfc] sm:$0xf]
      %v650 = vld [vmem:[%s585 + $0x100] sm:$0xf]
      %v651 = vld [vmem:[%s585 + $0x104] sm:$0xf]
      %v652 = vld [vmem:[%s585 + $0x108] sm:$0xf]
      %v653 = vld [vmem:[%s585 + $0x10c] sm:$0xf]
      %v654 = vld [vmem:[%s585 + $0x110] sm:$0xf]
      %v655 = vld [vmem:[%s585 + $0x114] sm:$0xf]
      %v656 = vld [vmem:[%s585 + $0x118] sm:$0xf]
      %v657 = vld [vmem:[%s585 + $0x11c] sm:$0xf]
      %v658 = vld [vmem:[%s585 + $0x120] sm:$0xf]
      %v659 = vld [vmem:[%s585 + $0x124] sm:$0xf]
      %v660 = vld [vmem:[%s585 + $0x128] sm:$0xf]
      %v661 = vld [vmem:[%s585 + $0x12c] sm:$0xf]
      %v662 = vld [vmem:[%s585 + $0x130] sm:$0xf]
      %v663 = vld [vmem:[%s585 + $0x134] sm:$0xf]
      %v664 = vld [vmem:[%s585 + $0x138] sm:$0xf]
      %v665 = vld [vmem:[%s585 + $0x13c] sm:$0xf]
      %v666 = vld [vmem:[%s585 + $0x140] sm:$0xf]
      %v667 = vld [vmem:[%s585 + $0x144] sm:$0xf]
      %v668 = vld [vmem:[%s585 + $0x148] sm:$0xf]
      %v669 = vld [vmem:[%s585 + $0x14c] sm:$0xf]
      %v670 = vld [vmem:[%s585 + $0x150] sm:$0xf]
      %v671 = vld [vmem:[%s585 + $0x154] sm:$0xf]
      %v672 = vld [vmem:[%s585 + $0x158] sm:$0xf]
      %v673 = vld [vmem:[%s585 + $0x15c] sm:$0xf]
      %v674 = vld [vmem:[%s585 + $0x160] sm:$0xf]
      %v675 = vld [vmem:[%s585 + $0x164] sm:$0xf]
      %v676 = vld [vmem:[%s585 + $0x168] sm:$0xf]
      %v677 = vld [vmem:[%s585 + $0x16c] sm:$0xf]
      %v678 = vld [vmem:[%s585 + $0x170] sm:$0xf]
      %v679 = vld [vmem:[%s585 + $0x174] sm:$0xf]
      %v680 = vld [vmem:[%s585 + $0x178] sm:$0xf]
      %v681 = vld [vmem:[%s585 + $0x17c] sm:$0xf]
      %v682 = vld [vmem:[%s585 + $0x180] sm:$0xf]
      %v683 = vld [vmem:[%s585 + $0x184] sm:$0xf]
      %v684 = vld [vmem:[%s585 + $0x188] sm:$0xf]
      %v685 = vld [vmem:[%s585 + $0x18c] sm:$0xf]
      %v686 = vld [vmem:[%s585 + $0x190] sm:$0xf]
      %v687 = vld [vmem:[%s585 + $0x194] sm:$0xf]
      %v688 = vld [vmem:[%s585 + $0x198] sm:$0xf]
      %v689 = vld [vmem:[%s585 + $0x19c] sm:$0xf]
      %v690 = vld [vmem:[%s585 + $0x1a0] sm:$0xf]
      %v691 = vld [vmem:[%s585 + $0x1a4] sm:$0xf]
      %v692 = vld [vmem:[%s585 + $0x1a8] sm:$0xf]
      %v693 = vld [vmem:[%s585 + $0x1ac] sm:$0xf]
      %v694 = vld [vmem:[%s585 + $0x1b0] sm:$0xf]
      %v695 = vld [vmem:[%s585 + $0x1b4] sm:$0xf]
      %v696 = vld [vmem:[%s585 + $0x1b8] sm:$0xf]
      %v697 = vld [vmem:[%s585 + $0x1bc] sm:$0xf]
      %v698 = vld [vmem:[%s585 + $0x1c0] sm:$0xf]
      %v699 = vld [vmem:[%s585 + $0x1c4] sm:$0xf]
      %v700 = vld [vmem:[%s585 + $0x1c8] sm:$0xf]
      %v701 = vld [vmem:[%s585 + $0x1cc] sm:$0xf]
      %v702 = vld [vmem:[%s585 + $0x1d0] sm:$0xf]
      %v703 = vld [vmem:[%s585 + $0x1d4] sm:$0xf]
      %v704 = vld [vmem:[%s585 + $0x1d8] sm:$0xf]
      %v705 = vld [vmem:[%s585 + $0x1dc] sm:$0xf]
      %v706 = vld [vmem:[%s585 + $0x1e0] sm:$0xf]
      %v707 = vld [vmem:[%s585 + $0x1e4] sm:$0xf]
      %v708 = vld [vmem:[%s585 + $0x1e8] sm:$0xf]
      %v709 = vld [vmem:[%s585 + $0x1ec] sm:$0xf]
      %v710 = vld [vmem:[%s585 + $0x1f0] sm:$0xf]
      %v711 = vld [vmem:[%s585 + $0x1f4] sm:$0xf]
      %v712 = vld [vmem:[%s585 + $0x1f8] sm:$0xf]
      %v713 = vld [vmem:[%s585 + $0x1fc] sm:$0xf]
      %v714 = vld [vmem:[%s585 + $0x200] sm:$0xf]
      %v715 = vld [vmem:[%s585 + $0x204] sm:$0xf]
      %v716 = vld [vmem:[%s585 + $0x208] sm:$0xf]
      %v717 = vld [vmem:[%s585 + $0x20c] sm:$0xf]
      %v718 = vld [vmem:[%s585 + $0x210] sm:$0xf]
      %v719 = vld [vmem:[%s585 + $0x214] sm:$0xf]
      %v720 = vld [vmem:[%s585 + $0x218] sm:$0xf]
      %v721 = vld [vmem:[%s585 + $0x21c] sm:$0xf]
      %v722 = vld [vmem:[%s585 + $0x220] sm:$0xf]
      %v723 = vld [vmem:[%s585 + $0x224] sm:$0xf]
      %v724 = vld [vmem:[%s585 + $0x228] sm:$0xf]
      %v725 = vld [vmem:[%s585 + $0x22c] sm:$0xf]
      %v726 = vld [vmem:[%s585 + $0x230] sm:$0xf]
      %v727 = vld [vmem:[%s585 + $0x234] sm:$0xf]
      %v728 = vld [vmem:[%s585 + $0x238] sm:$0xf]
      %v729 = vld [vmem:[%s585 + $0x23c] sm:$0xf]
      %v730 = vld [vmem:[%s245] sm:$0xff]
      %v731 = vld [vmem:[%s245 + $0x8] sm:$0xff]
      %v732 = vld [vmem:[%s245 + $0x10] sm:$0xff]
      %v733 = vld [vmem:[%s245 + $0x18] sm:$0xff]
      %v734 = vld [vmem:[%s245 + $0x20] sm:$0xff]
      %v735 = vld [vmem:[%s245 + $0x28] sm:$0xff]
      %v736 = vld [vmem:[%s245 + $0x30] sm:$0xff]
      %v737 = vld [vmem:[%s245 + $0x38] sm:$0xff]
      %v738 = vld [vmem:[%s245 + $0x40] sm:$0xff]
      %v739 = vld [vmem:[%s245 + $0x48] sm:$0xff]
      %v740 = vld [vmem:[%s245 + $0x50] sm:$0xff]
      %v741 = vld [vmem:[%s245 + $0x58] sm:$0xff]
      %v742 = vld [vmem:[%s245 + $0x60] sm:$0xff]
      %v743 = vld [vmem:[%s245 + $0x68] sm:$0xff]
      %v744 = vld [vmem:[%s245 + $0x70] sm:$0xff]
      %v745 = vld [vmem:[%s245 + $0x78] sm:$0xff]
      %v746 = vld [vmem:[%s245 + $0x80] sm:$0xff]
      %v747 = vld [vmem:[%s245 + $0x88] sm:$0xff]
      %v748 = vld [vmem:[%s245 + $0x90] sm:$0xff]
      %v749 = vld [vmem:[%s245 + $0x98] sm:$0xff]
      %v750 = vld [vmem:[%s245 + $0xa0] sm:$0xff]
      %v751 = vld [vmem:[%s245 + $0xa8] sm:$0xff]
      %v752 = vld [vmem:[%s245 + $0xb0] sm:$0xff]
      %v753 = vld [vmem:[%s245 + $0xb8] sm:$0xff]
      %v754 = vld [vmem:[%s245 + $0xc0] sm:$0xff]
      %v755 = vld [vmem:[%s245 + $0xc8] sm:$0xff]
      %v756 = vld [vmem:[%s245 + $0xd0] sm:$0xff]
      %v757 = vld [vmem:[%s245 + $0xd8] sm:$0xff]
      %v758 = vld [vmem:[%s245 + $0xe0] sm:$0xff]
      %v759 = vld [vmem:[%s245 + $0xe8] sm:$0xff]
      %v760 = vld [vmem:[%s245 + $0xf0] sm:$0xff]
      %v761 = vld [vmem:[%s245 + $0xf8] sm:$0xff]
      %v762 = vld [vmem:[%s245 + $0x100] sm:$0xff]
      %v763 = vld [vmem:[%s245 + $0x108] sm:$0xff]
      %v764 = vld [vmem:[%s245 + $0x110] sm:$0xff]
      %v765 = vld [vmem:[%s245 + $0x118] sm:$0xff]
      %v766 = vld [vmem:[%s245 + $0x120] sm:$0xff]
      %v767 = vld [vmem:[%s245 + $0x128] sm:$0xff]
      %v768 = vld [vmem:[%s245 + $0x130] sm:$0xff]
      %v769 = vld [vmem:[%s245 + $0x138] sm:$0xff]
      %v770 = vld [vmem:[%s245 + $0x140] sm:$0xff]
      %v771 = vld [vmem:[%s245 + $0x148] sm:$0xff]
      %v772 = vld [vmem:[%s245 + $0x150] sm:$0xff]
      %v773 = vld [vmem:[%s245 + $0x158] sm:$0xff]
      %v774 = vld [vmem:[%s245 + $0x160] sm:$0xff]
      %v775 = vld [vmem:[%s245 + $0x168] sm:$0xff]
      %v776 = vld [vmem:[%s245 + $0x170] sm:$0xff]
      %v777 = vld [vmem:[%s245 + $0x178] sm:$0xff]
      %v778 = vld [vmem:[%s245 + $0x180] sm:$0xff]
      %v779 = vld [vmem:[%s245 + $0x188] sm:$0xff]
      %v780 = vld [vmem:[%s245 + $0x190] sm:$0xff]
      %v781 = vld [vmem:[%s245 + $0x198] sm:$0xff]
      %v782 = vld [vmem:[%s245 + $0x1a0] sm:$0xff]
      %v783 = vld [vmem:[%s245 + $0x1a8] sm:$0xff]
      %v784 = vld [vmem:[%s245 + $0x1b0] sm:$0xff]
      %v785 = vld [vmem:[%s245 + $0x1b8] sm:$0xff]
      %v786 = vld [vmem:[%s245 + $0x1c0] sm:$0xff]
      %v787 = vld [vmem:[%s245 + $0x1c8] sm:$0xff]
      %v788 = vld [vmem:[%s245 + $0x1d0] sm:$0xff]
      %v789 = vld [vmem:[%s245 + $0x1d8] sm:$0xff]
      %v790 = vld [vmem:[%s245 + $0x1e0] sm:$0xff]
      %v791 = vld [vmem:[%s245 + $0x1e8] sm:$0xff]
      %v792 = vld [vmem:[%s245 + $0x1f0] sm:$0xff]
      %v793 = vld [vmem:[%s245 + $0x1f8] sm:$0xff]
      %v794 = vld [vmem:[%s245 + $0x200] sm:$0xff]
      %v795 = vld [vmem:[%s245 + $0x208] sm:$0xff]
      %v796 = vld [vmem:[%s245 + $0x210] sm:$0xff]
      %v797 = vld [vmem:[%s245 + $0x218] sm:$0xff]
      %v798 = vld [vmem:[%s245 + $0x220] sm:$0xff]
      %v799 = vld [vmem:[%s245 + $0x228] sm:$0xff]
      %v800 = vld [vmem:[%s245 + $0x230] sm:$0xff]
      %v801 = vld [vmem:[%s245 + $0x238] sm:$0xff]
      %v802 = vld [vmem:[%s245 + $0x240] sm:$0xff]
      %v803 = vld [vmem:[%s245 + $0x248] sm:$0xff]
      %v804 = vld [vmem:[%s245 + $0x250] sm:$0xff]
      %v805 = vld [vmem:[%s245 + $0x258] sm:$0xff]
      %v806 = vld [vmem:[%s245 + $0x260] sm:$0xff]
      %v807 = vld [vmem:[%s245 + $0x268] sm:$0xff]
      %v808 = vld [vmem:[%s245 + $0x270] sm:$0xff]
      %v809 = vld [vmem:[%s245 + $0x278] sm:$0xff]
      %v810 = vld [vmem:[%s245 + $0x280] sm:$0xff]
      %v811 = vld [vmem:[%s245 + $0x288] sm:$0xff]
      %v812 = vld [vmem:[%s245 + $0x290] sm:$0xff]
      %v813 = vld [vmem:[%s245 + $0x298] sm:$0xff]
      %v814 = vld [vmem:[%s245 + $0x2a0] sm:$0xff]
      %v815 = vld [vmem:[%s245 + $0x2a8] sm:$0xff]
      %v816 = vld [vmem:[%s245 + $0x2b0] sm:$0xff]
      %v817 = vld [vmem:[%s245 + $0x2b8] sm:$0xff]
      %v818 = vld [vmem:[%s245 + $0x2c0] sm:$0xff]
      %v819 = vld [vmem:[%s245 + $0x2c8] sm:$0xff]
      %v820 = vld [vmem:[%s245 + $0x2d0] sm:$0xff]
      %v821 = vld [vmem:[%s245 + $0x2d8] sm:$0xff]
      %v822 = vld [vmem:[%s245 + $0x2e0] sm:$0xff]
      %v823 = vld [vmem:[%s245 + $0x2e8] sm:$0xff]
      %v824 = vld [vmem:[%s245 + $0x2f0] sm:$0xff]
      %v825 = vld [vmem:[%s245 + $0x2f8] sm:$0xff]
      %v826 = vld [vmem:[%s245 + $0x300] sm:$0xff]
      %v827 = vld [vmem:[%s245 + $0x308] sm:$0xff]
      %v828 = vld [vmem:[%s245 + $0x310] sm:$0xff]
      %v829 = vld [vmem:[%s245 + $0x318] sm:$0xff]
      %v830 = vld [vmem:[%s245 + $0x320] sm:$0xff]
      %v831 = vld [vmem:[%s245 + $0x328] sm:$0xff]
      %v832 = vld [vmem:[%s245 + $0x330] sm:$0xff]
      %v833 = vld [vmem:[%s245 + $0x338] sm:$0xff]
      %v834 = vld [vmem:[%s245 + $0x340] sm:$0xff]
      %v835 = vld [vmem:[%s245 + $0x348] sm:$0xff]
      %v836 = vld [vmem:[%s245 + $0x350] sm:$0xff]
      %v837 = vld [vmem:[%s245 + $0x358] sm:$0xff]
      %v838 = vld [vmem:[%s245 + $0x360] sm:$0xff]
      %v839 = vld [vmem:[%s245 + $0x368] sm:$0xff]
      %v840 = vld [vmem:[%s245 + $0x370] sm:$0xff]
      %v841 = vld [vmem:[%s245 + $0x378] sm:$0xff]
      %v842 = vld [vmem:[%s245 + $0x380] sm:$0xff]
      %v843 = vld [vmem:[%s245 + $0x388] sm:$0xff]
      %v844 = vld [vmem:[%s245 + $0x390] sm:$0xff]
      %v845 = vld [vmem:[%s245 + $0x398] sm:$0xff]
      %v846 = vld [vmem:[%s245 + $0x3a0] sm:$0xff]
      %v847 = vld [vmem:[%s245 + $0x3a8] sm:$0xff]
      %v848 = vld [vmem:[%s245 + $0x3b0] sm:$0xff]
      %v849 = vld [vmem:[%s245 + $0x3b8] sm:$0xff]
      %v850 = vld [vmem:[%s245 + $0x3c0] sm:$0xff]
      %v851 = vld [vmem:[%s245 + $0x3c8] sm:$0xff]
      %v852 = vld [vmem:[%s245 + $0x3d0] sm:$0xff]
      %v853 = vld [vmem:[%s245 + $0x3d8] sm:$0xff]
      %v854 = vld [vmem:[%s245 + $0x3e0] sm:$0xff]
      %v855 = vld [vmem:[%s245 + $0x3e8] sm:$0xff]
      %v856 = vld [vmem:[%s245 + $0x3f0] sm:$0xff]
      %v857 = vld [vmem:[%s245 + $0x3f8] sm:$0xff]
      %v858 = vpack.c.bf16 %v731, %v730
      %v859 = vpack.c.bf16 %v733, %v732
      %v860 = vpack.c.bf16 %v735, %v734
      %v861 = vpack.c.bf16 %v737, %v736
      %v862 = vpack.c.bf16 %v739, %v738
      %v863 = vpack.c.bf16 %v741, %v740
      %v864 = vpack.c.bf16 %v743, %v742
      %v865 = vpack.c.bf16 %v745, %v744
      %v866 = vpack.c.bf16 %v747, %v746
      %v867 = vpack.c.bf16 %v749, %v748
      %v868 = vpack.c.bf16 %v751, %v750
      %v869 = vpack.c.bf16 %v753, %v752
      %v870 = vpack.c.bf16 %v755, %v754
      %v871 = vpack.c.bf16 %v757, %v756
      %v872 = vpack.c.bf16 %v759, %v758
      %v873 = vpack.c.bf16 %v761, %v760
      %v874 = vpack.c.bf16 %v763, %v762
      %v875 = vpack.c.bf16 %v765, %v764
      %v876 = vpack.c.bf16 %v767, %v766
      %v877 = vpack.c.bf16 %v769, %v768
      %v878 = vpack.c.bf16 %v771, %v770
      %v879 = vpack.c.bf16 %v773, %v772
      %v880 = vpack.c.bf16 %v775, %v774
      %v881 = vpack.c.bf16 %v777, %v776
      %v882 = vpack.c.bf16 %v779, %v778
      %v883 = vpack.c.bf16 %v781, %v780
      %v884 = vpack.c.bf16 %v783, %v782
      %v885 = vpack.c.bf16 %v785, %v784
      %v886 = vpack.c.bf16 %v787, %v786
      %v887 = vpack.c.bf16 %v789, %v788
      %v888 = vpack.c.bf16 %v791, %v790
      %v889 = vpack.c.bf16 %v793, %v792
      %v890 = vpack.c.bf16 %v795, %v794
      %v891 = vpack.c.bf16 %v797, %v796
      %v892 = vpack.c.bf16 %v799, %v798
      %v893 = vpack.c.bf16 %v801, %v800
      %v894 = vpack.c.bf16 %v803, %v802
      %v895 = vpack.c.bf16 %v805, %v804
      %v896 = vpack.c.bf16 %v807, %v806
      %v897 = vpack.c.bf16 %v809, %v808
      %v898 = vpack.c.bf16 %v811, %v810
      %v899 = vpack.c.bf16 %v813, %v812
      %v900 = vpack.c.bf16 %v815, %v814
      %v901 = vpack.c.bf16 %v817, %v816
      %v902 = vpack.c.bf16 %v819, %v818
      %v903 = vpack.c.bf16 %v821, %v820
      %v904 = vpack.c.bf16 %v823, %v822
      %v905 = vpack.c.bf16 %v825, %v824
      %v906 = vpack.c.bf16 %v827, %v826
      %v907 = vpack.c.bf16 %v829, %v828
      %v908 = vpack.c.bf16 %v831, %v830
      %v909 = vpack.c.bf16 %v833, %v832
      %v910 = vpack.c.bf16 %v835, %v834
      %v911 = vpack.c.bf16 %v837, %v836
      %v912 = vpack.c.bf16 %v839, %v838
      %v913 = vpack.c.bf16 %v841, %v840
      %v914 = vpack.c.bf16 %v843, %v842
      %v915 = vpack.c.bf16 %v845, %v844
      %v916 = vpack.c.bf16 %v847, %v846
      %v917 = vpack.c.bf16 %v849, %v848
      %v918 = vpack.c.bf16 %v851, %v850
      %v919 = vpack.c.bf16 %v853, %v852
      %v920 = vpack.c.bf16 %v855, %v854
      %v921 = vpack.c.bf16 %v857, %v856
      %v1050 = vunpack.c.l.b16 %v586
      %v1051 = vunpack.c.l.b16 %v587
      %v1052 = vunpack.c.l.b16 %v588
      %v1053 = vunpack.c.l.b16 %v589
      %v1054 = vunpack.c.l.b16 %v590
      %v1055 = vunpack.c.l.b16 %v591
      %v1056 = vunpack.c.l.b16 %v592
      %v1057 = vunpack.c.l.b16 %v593
      %v1058 = vunpack.c.l.b16 %v594
      %v1059 = vunpack.c.l.b16 %v595
      %v1060 = vunpack.c.l.b16 %v596
      %v1061 = vunpack.c.l.b16 %v597
      %v1062 = vunpack.c.l.b16 %v598
      %v1063 = vunpack.c.l.b16 %v599
      %v1064 = vunpack.c.l.b16 %v600
      %v1065 = vunpack.c.l.b16 %v601
      %v1066 = vunpack.c.l.b16 %v602
      %v1067 = vunpack.c.l.b16 %v603
      %v1068 = vunpack.c.l.b16 %v604
      %v1069 = vunpack.c.l.b16 %v605
      %v1070 = vunpack.c.l.b16 %v606
      %v1071 = vunpack.c.l.b16 %v607
      %v1072 = vunpack.c.l.b16 %v608
      %v1073 = vunpack.c.l.b16 %v609
      %v1074 = vunpack.c.l.b16 %v610
      %v1075 = vunpack.c.l.b16 %v611
      %v1076 = vunpack.c.l.b16 %v612
      %v1077 = vunpack.c.l.b16 %v613
      %v1078 = vunpack.c.l.b16 %v614
      %v1079 = vunpack.c.l.b16 %v615
      %v1080 = vunpack.c.l.b16 %v616
      %v1081 = vunpack.c.l.b16 %v617
      %v1082 = vunpack.c.l.b16 %v618
      %v1083 = vunpack.c.l.b16 %v619
      %v1084 = vunpack.c.l.b16 %v620
      %v1085 = vunpack.c.l.b16 %v621
      %v1086 = vunpack.c.l.b16 %v622
      %v1087 = vunpack.c.l.b16 %v623
      %v1088 = vunpack.c.l.b16 %v624
      %v1089 = vunpack.c.l.b16 %v625
      %v1090 = vunpack.c.l.b16 %v626
      %v1091 = vunpack.c.l.b16 %v627
      %v1092 = vunpack.c.l.b16 %v628
      %v1093 = vunpack.c.l.b16 %v629
      %v1094 = vunpack.c.l.b16 %v630
      %v1095 = vunpack.c.l.b16 %v631
      %v1096 = vunpack.c.l.b16 %v632
      %v1097 = vunpack.c.l.b16 %v633
      %v1098 = vunpack.c.l.b16 %v634
      %v1099 = vunpack.c.l.b16 %v635
      %v1100 = vunpack.c.l.b16 %v636
      %v1101 = vunpack.c.l.b16 %v637
      %v1102 = vunpack.c.l.b16 %v638
      %v1103 = vunpack.c.l.b16 %v639
      %v1104 = vunpack.c.l.b16 %v640
      %v1105 = vunpack.c.l.b16 %v641
      %v1106 = vunpack.c.l.b16 %v642
      %v1107 = vunpack.c.l.b16 %v643
      %v1108 = vunpack.c.l.b16 %v644
      %v1109 = vunpack.c.l.b16 %v645
      %v1110 = vunpack.c.l.b16 %v646
      %v1111 = vunpack.c.l.b16 %v647
      %v1112 = vunpack.c.l.b16 %v648
      %v1113 = vunpack.c.l.b16 %v649
      %v1114 = vunpack.c.l.b16 %v650
      %v1115 = vunpack.c.l.b16 %v651
      %v1116 = vunpack.c.l.b16 %v652
      %v1117 = vunpack.c.l.b16 %v653
      %v1118 = vunpack.c.l.b16 %v654
      %v1119 = vunpack.c.l.b16 %v655
      %v1120 = vunpack.c.l.b16 %v656
      %v1121 = vunpack.c.l.b16 %v657
      %v1122 = vunpack.c.l.b16 %v658
      %v1123 = vunpack.c.l.b16 %v659
      %v1124 = vunpack.c.l.b16 %v660
      %v1125 = vunpack.c.l.b16 %v661
      %v1126 = vunpack.c.l.b16 %v662
      %v1127 = vunpack.c.l.b16 %v663
      %v1128 = vunpack.c.l.b16 %v664
      %v1129 = vunpack.c.l.b16 %v665
      %v1130 = vunpack.c.l.b16 %v666
      %v1131 = vunpack.c.l.b16 %v667
      %v1132 = vunpack.c.l.b16 %v668
      %v1133 = vunpack.c.l.b16 %v669
      %v1134 = vunpack.c.l.b16 %v670
      %v1135 = vunpack.c.l.b16 %v671
      %v1136 = vunpack.c.l.b16 %v672
      %v1137 = vunpack.c.l.b16 %v673
      %v1138 = vunpack.c.l.b16 %v674
      %v1139 = vunpack.c.l.b16 %v675
      %v1140 = vunpack.c.l.b16 %v676
      %v1141 = vunpack.c.l.b16 %v677
      %v1142 = vunpack.c.l.b16 %v678
      %v1143 = vunpack.c.l.b16 %v679
      %v1144 = vunpack.c.l.b16 %v680
      %v1145 = vunpack.c.l.b16 %v681
      %v1146 = vunpack.c.l.b16 %v682
      %v1147 = vunpack.c.l.b16 %v683
      %v1148 = vunpack.c.l.b16 %v684
      %v1149 = vunpack.c.l.b16 %v685
      %v1150 = vunpack.c.l.b16 %v686
      %v1151 = vunpack.c.l.b16 %v687
      %v1152 = vunpack.c.l.b16 %v688
      %v1153 = vunpack.c.l.b16 %v689
      %v1154 = vunpack.c.l.b16 %v690
      %v1155 = vunpack.c.l.b16 %v691
      %v1156 = vunpack.c.l.b16 %v692
      %v1157 = vunpack.c.l.b16 %v693
      %v1158 = vunpack.c.l.b16 %v694
      %v1159 = vunpack.c.l.b16 %v695
      %v1160 = vunpack.c.l.b16 %v696
      %v1161 = vunpack.c.l.b16 %v697
      %v1162 = vunpack.c.l.b16 %v698
      %v1163 = vunpack.c.l.b16 %v699
      %v1164 = vunpack.c.l.b16 %v700
      %v1165 = vunpack.c.l.b16 %v701
      %v1166 = vunpack.c.l.b16 %v702
      %v1167 = vunpack.c.l.b16 %v703
      %v1168 = vunpack.c.l.b16 %v704
      %v1169 = vunpack.c.l.b16 %v705
      %v1170 = vunpack.c.l.b16 %v706
      %v1171 = vunpack.c.l.b16 %v707
      %v1172 = vunpack.c.l.b16 %v708
      %v1173 = vunpack.c.l.b16 %v709
      %v1174 = vunpack.c.l.b16 %v710
      %v1175 = vunpack.c.l.b16 %v711
      %v1176 = vunpack.c.l.b16 %v712
      %v1177 = vunpack.c.l.b16 %v713
      %v1178 = vpack.c.b16 %v1051, %v1050
      %v1179 = vpack.c.b16 %v1053, %v1052
      %v1180 = vpack.c.b16 %v1055, %v1054
      %v1181 = vpack.c.b16 %v1057, %v1056
      %v1182 = vpack.c.b16 %v1059, %v1058
      %v1183 = vpack.c.b16 %v1061, %v1060
      %v1184 = vpack.c.b16 %v1063, %v1062
      %v1185 = vpack.c.b16 %v1065, %v1064
      %v1186 = vpack.c.b16 %v1067, %v1066
      %v1187 = vpack.c.b16 %v1069, %v1068
      %v1188 = vpack.c.b16 %v1071, %v1070
      %v1189 = vpack.c.b16 %v1073, %v1072
      %v1190 = vpack.c.b16 %v1075, %v1074
      %v1191 = vpack.c.b16 %v1077, %v1076
      %v1192 = vpack.c.b16 %v1079, %v1078
      %v1193 = vpack.c.b16 %v1081, %v1080
      %v1194 = vpack.c.b16 %v1083, %v1082
      %v1195 = vpack.c.b16 %v1085, %v1084
      %v1196 = vpack.c.b16 %v1087, %v1086
      %v1197 = vpack.c.b16 %v1089, %v1088
      %v1198 = vpack.c.b16 %v1091, %v1090
      %v1199 = vpack.c.b16 %v1093, %v1092
      %v1200 = vpack.c.b16 %v1095, %v1094
      %v1201 = vpack.c.b16 %v1097, %v1096
      %v1202 = vpack.c.b16 %v1099, %v1098
      %v1203 = vpack.c.b16 %v1101, %v1100
      %v1204 = vpack.c.b16 %v1103, %v1102
      %v1205 = vpack.c.b16 %v1105, %v1104
      %v1206 = vpack.c.b16 %v1107, %v1106
      %v1207 = vpack.c.b16 %v1109, %v1108
      %v1208 = vpack.c.b16 %v1111, %v1110
      %v1209 = vpack.c.b16 %v1113, %v1112
      %v1210 = vpack.c.b16 %v1115, %v1114
      %v1211 = vpack.c.b16 %v1117, %v1116
      %v1212 = vpack.c.b16 %v1119, %v1118
      %v1213 = vpack.c.b16 %v1121, %v1120
      %v1214 = vpack.c.b16 %v1123, %v1122
      %v1215 = vpack.c.b16 %v1125, %v1124
      %v1216 = vpack.c.b16 %v1127, %v1126
      %v1217 = vpack.c.b16 %v1129, %v1128
      %v1218 = vpack.c.b16 %v1131, %v1130
      %v1219 = vpack.c.b16 %v1133, %v1132
      %v1220 = vpack.c.b16 %v1135, %v1134
      %v1221 = vpack.c.b16 %v1137, %v1136
      %v1222 = vpack.c.b16 %v1139, %v1138
      %v1223 = vpack.c.b16 %v1141, %v1140
      %v1224 = vpack.c.b16 %v1143, %v1142
      %v1225 = vpack.c.b16 %v1145, %v1144
      %v1226 = vpack.c.b16 %v1147, %v1146
      %v1227 = vpack.c.b16 %v1149, %v1148
      %v1228 = vpack.c.b16 %v1151, %v1150
      %v1229 = vpack.c.b16 %v1153, %v1152
      %v1230 = vpack.c.b16 %v1155, %v1154
      %v1231 = vpack.c.b16 %v1157, %v1156
      %v1232 = vpack.c.b16 %v1159, %v1158
      %v1233 = vpack.c.b16 %v1161, %v1160
      %v1234 = vpack.c.b16 %v1163, %v1162
      %v1235 = vpack.c.b16 %v1165, %v1164
      %v1236 = vpack.c.b16 %v1167, %v1166
      %v1237 = vpack.c.b16 %v1169, %v1168
      %v1238 = vpack.c.b16 %v1171, %v1170
      %v1239 = vpack.c.b16 %v1173, %v1172
      %v1240 = vpack.c.b16 %v1175, %v1174
      %v1241 = vpack.c.b16 %v1177, %v1176
      %v1244 = vunpack.c.l.b16 %v714
      %v1245 = vunpack.c.l.b16 %v715
      %v1246 = vpack.c.b16 %v1245, %v1244
      %1247 = vrot.lane.b32.xlu0 %v1179, 8
      %v1248 = vpop.permute.xlu0 %1247
      %1249 = vrot.lane.b32.xlu0 %v1180, 8
      %v1250 = vpop.permute.xlu0 %1249
      %1251 = vrot.lane.b32.xlu0 %v1181, 8
      %v1252 = vpop.permute.xlu0 %1251
      %1253 = vrot.lane.b32.xlu0 %v1182, 8
      %v1254 = vpop.permute.xlu0 %1253
      %1255 = vrot.lane.b32.xlu0 %v1183, 8
      %v1256 = vpop.permute.xlu0 %1255
      %1257 = vrot.lane.b32.xlu0 %v1184, 8
      %v1258 = vpop.permute.xlu0 %1257
      %1259 = vrot.lane.b32.xlu0 %v1185, 8
      %v1260 = vpop.permute.xlu0 %1259
      %1261 = vrot.lane.b32.xlu0 %v1186, 8
      %v1262 = vpop.permute.xlu0 %1261
      %1263 = vrot.lane.b32.xlu0 %v1187, 8
      %v1264 = vpop.permute.xlu0 %1263
      %1265 = vrot.lane.b32.xlu0 %v1188, 8
      %v1266 = vpop.permute.xlu0 %1265
      %1267 = vrot.lane.b32.xlu0 %v1189, 8
      %v1268 = vpop.permute.xlu0 %1267
      %1269 = vrot.lane.b32.xlu0 %v1190, 8
      %v1270 = vpop.permute.xlu0 %1269
      %1271 = vrot.lane.b32.xlu0 %v1191, 8
      %v1272 = vpop.permute.xlu0 %1271
      %1273 = vrot.lane.b32.xlu0 %v1192, 8
      %v1274 = vpop.permute.xlu0 %1273
      %1275 = vrot.lane.b32.xlu0 %v1193, 8
      %v1276 = vpop.permute.xlu0 %1275
      %1277 = vrot.lane.b32.xlu0 %v1194, 8
      %v1278 = vpop.permute.xlu0 %1277
      %1279 = vrot.lane.b32.xlu0 %v1195, 8
      %v1280 = vpop.permute.xlu0 %1279
      %1281 = vrot.lane.b32.xlu0 %v1196, 8
      %v1282 = vpop.permute.xlu0 %1281
      %1283 = vrot.lane.b32.xlu0 %v1197, 8
      %v1284 = vpop.permute.xlu0 %1283
      %1285 = vrot.lane.b32.xlu0 %v1198, 8
      %v1286 = vpop.permute.xlu0 %1285
      %1287 = vrot.lane.b32.xlu0 %v1199, 8
      %v1288 = vpop.permute.xlu0 %1287
      %1289 = vrot.lane.b32.xlu0 %v1200, 8
      %v1290 = vpop.permute.xlu0 %1289
      %1291 = vrot.lane.b32.xlu0 %v1201, 8
      %v1292 = vpop.permute.xlu0 %1291
      %1293 = vrot.lane.b32.xlu0 %v1202, 8
      %v1294 = vpop.permute.xlu0 %1293
      %1295 = vrot.lane.b32.xlu0 %v1203, 8
      %v1296 = vpop.permute.xlu0 %1295
      %1297 = vrot.lane.b32.xlu0 %v1204, 8
      %v1298 = vpop.permute.xlu0 %1297
      %1299 = vrot.lane.b32.xlu0 %v1205, 8
      %v1300 = vpop.permute.xlu0 %1299
      %1301 = vrot.lane.b32.xlu0 %v1206, 8
      %v1302 = vpop.permute.xlu0 %1301
      %1303 = vrot.lane.b32.xlu0 %v1207, 8
      %v1304 = vpop.permute.xlu0 %1303
      %1305 = vrot.lane.b32.xlu0 %v1208, 8
      %v1306 = vpop.permute.xlu0 %1305
      %1307 = vrot.lane.b32.xlu0 %v1209, 8
      %v1308 = vpop.permute.xlu0 %1307
      %1309 = vrot.lane.b32.xlu0 %v1210, 8
      %v1310 = vpop.permute.xlu0 %1309
      %1311 = vrot.lane.b32.xlu0 %v1211, 8
      %v1312 = vpop.permute.xlu0 %1311
      %1313 = vrot.lane.b32.xlu0 %v1212, 8
      %v1314 = vpop.permute.xlu0 %1313
      %1315 = vrot.lane.b32.xlu0 %v1213, 8
      %v1316 = vpop.permute.xlu0 %1315
      %1317 = vrot.lane.b32.xlu0 %v1214, 8
      %v1318 = vpop.permute.xlu0 %1317
      %1319 = vrot.lane.b32.xlu0 %v1215, 8
      %v1320 = vpop.permute.xlu0 %1319
      %1321 = vrot.lane.b32.xlu0 %v1216, 8
      %v1322 = vpop.permute.xlu0 %1321
      %1323 = vrot.lane.b32.xlu0 %v1217, 8
      %v1324 = vpop.permute.xlu0 %1323
      %1325 = vrot.lane.b32.xlu0 %v1218, 8
      %v1326 = vpop.permute.xlu0 %1325
      %1327 = vrot.lane.b32.xlu0 %v1219, 8
      %v1328 = vpop.permute.xlu0 %1327
      %1329 = vrot.lane.b32.xlu0 %v1220, 8
      %v1330 = vpop.permute.xlu0 %1329
      %1331 = vrot.lane.b32.xlu0 %v1221, 8
      %v1332 = vpop.permute.xlu0 %1331
      %1333 = vrot.lane.b32.xlu0 %v1222, 8
      %v1334 = vpop.permute.xlu0 %1333
      %1335 = vrot.lane.b32.xlu0 %v1223, 8
      %v1336 = vpop.permute.xlu0 %1335
      %1337 = vrot.lane.b32.xlu0 %v1224, 8
      %v1338 = vpop.permute.xlu0 %1337
      %1339 = vrot.lane.b32.xlu0 %v1225, 8
      %v1340 = vpop.permute.xlu0 %1339
      %1341 = vrot.lane.b32.xlu0 %v1226, 8
      %v1342 = vpop.permute.xlu0 %1341
      %1343 = vrot.lane.b32.xlu0 %v1227, 8
      %v1344 = vpop.permute.xlu0 %1343
      %1345 = vrot.lane.b32.xlu0 %v1228, 8
      %v1346 = vpop.permute.xlu0 %1345
      %1347 = vrot.lane.b32.xlu0 %v1229, 8
      %v1348 = vpop.permute.xlu0 %1347
      %1349 = vrot.lane.b32.xlu0 %v1230, 8
      %v1350 = vpop.permute.xlu0 %1349
      %1351 = vrot.lane.b32.xlu0 %v1231, 8
      %v1352 = vpop.permute.xlu0 %1351
      %1353 = vrot.lane.b32.xlu0 %v1232, 8
      %v1354 = vpop.permute.xlu0 %1353
      %1355 = vrot.lane.b32.xlu0 %v1233, 8
      %v1356 = vpop.permute.xlu0 %1355
      %1357 = vrot.lane.b32.xlu0 %v1234, 8
      %v1358 = vpop.permute.xlu0 %1357
      %1359 = vrot.lane.b32.xlu0 %v1235, 8
      %v1360 = vpop.permute.xlu0 %1359
      %1361 = vrot.lane.b32.xlu0 %v1236, 8
      %v1362 = vpop.permute.xlu0 %1361
      %1363 = vrot.lane.b32.xlu0 %v1237, 8
      %v1364 = vpop.permute.xlu0 %1363
      %1365 = vrot.lane.b32.xlu0 %v1238, 8
      %v1366 = vpop.permute.xlu0 %1365
      %1367 = vrot.lane.b32.xlu0 %v1239, 8
      %v1368 = vpop.permute.xlu0 %1367
      %1369 = vrot.lane.b32.xlu0 %v1240, 8
      %v1370 = vpop.permute.xlu0 %1369
      %1371 = vrot.lane.b32.xlu0 %v1241, 8
      %v1372 = vpop.permute.xlu0 %1371
      %1373 = vrot.lane.b32.xlu0 %v1246, 8
      %v1374 = vpop.permute.xlu0 %1373
      %v1377 = vunpack.c.l.b16 %v716
      %v1378 = vunpack.c.l.b16 %v717
      %v1379 = vpack.c.b16 %v1378, %v1377
      %1380 = vrot.lane.b32.xlu0 %v1180, 16
      %v1381 = vpop.permute.xlu0 %1380
      %1382 = vrot.lane.b32.xlu0 %v1181, 16
      %v1383 = vpop.permute.xlu0 %1382
      %1384 = vrot.lane.b32.xlu0 %v1182, 16
      %v1385 = vpop.permute.xlu0 %1384
      %1386 = vrot.lane.b32.xlu0 %v1183, 16
      %v1387 = vpop.permute.xlu0 %1386
      %1388 = vrot.lane.b32.xlu0 %v1184, 16
      %v1389 = vpop.permute.xlu0 %1388
      %1390 = vrot.lane.b32.xlu0 %v1185, 16
      %v1391 = vpop.permute.xlu0 %1390
      %1392 = vrot.lane.b32.xlu0 %v1186, 16
      %v1393 = vpop.permute.xlu0 %1392
      %1394 = vrot.lane.b32.xlu0 %v1187, 16
      %v1395 = vpop.permute.xlu0 %1394
      %1396 = vrot.lane.b32.xlu0 %v1188, 16
      %v1397 = vpop.permute.xlu0 %1396
      %1398 = vrot.lane.b32.xlu0 %v1189, 16
      %v1399 = vpop.permute.xlu0 %1398
      %1400 = vrot.lane.b32.xlu0 %v1190, 16
      %v1401 = vpop.permute.xlu0 %1400
      %1402 = vrot.lane.b32.xlu0 %v1191, 16
      %v1403 = vpop.permute.xlu0 %1402
      %1404 = vrot.lane.b32.xlu0 %v1192, 16
      %v1405 = vpop.permute.xlu0 %1404
      %1406 = vrot.lane.b32.xlu0 %v1193, 16
      %v1407 = vpop.permute.xlu0 %1406
      %1408 = vrot.lane.b32.xlu0 %v1194, 16
      %v1409 = vpop.permute.xlu0 %1408
      %1410 = vrot.lane.b32.xlu0 %v1195, 16
      %v1411 = vpop.permute.xlu0 %1410
      %1412 = vrot.lane.b32.xlu0 %v1196, 16
      %v1413 = vpop.permute.xlu0 %1412
      %1414 = vrot.lane.b32.xlu0 %v1197, 16
      %v1415 = vpop.permute.xlu0 %1414
      %1416 = vrot.lane.b32.xlu0 %v1198, 16
      %v1417 = vpop.permute.xlu0 %1416
      %1418 = vrot.lane.b32.xlu0 %v1199, 16
      %v1419 = vpop.permute.xlu0 %1418
      %1420 = vrot.lane.b32.xlu0 %v1200, 16
      %v1421 = vpop.permute.xlu0 %1420
      %1422 = vrot.lane.b32.xlu0 %v1201, 16
      %v1423 = vpop.permute.xlu0 %1422
      %1424 = vrot.lane.b32.xlu0 %v1202, 16
      %v1425 = vpop.permute.xlu0 %1424
      %1426 = vrot.lane.b32.xlu0 %v1203, 16
      %v1427 = vpop.permute.xlu0 %1426
      %1428 = vrot.lane.b32.xlu0 %v1204, 16
      %v1429 = vpop.permute.xlu0 %1428
      %1430 = vrot.lane.b32.xlu0 %v1205, 16
      %v1431 = vpop.permute.xlu0 %1430
      %1432 = vrot.lane.b32.xlu0 %v1206, 16
      %v1433 = vpop.permute.xlu0 %1432
      %1434 = vrot.lane.b32.xlu0 %v1207, 16
      %v1435 = vpop.permute.xlu0 %1434
      %1436 = vrot.lane.b32.xlu0 %v1208, 16
      %v1437 = vpop.permute.xlu0 %1436
      %1438 = vrot.lane.b32.xlu0 %v1209, 16
      %v1439 = vpop.permute.xlu0 %1438
      %1440 = vrot.lane.b32.xlu0 %v1210, 16
      %v1441 = vpop.permute.xlu0 %1440
      %1442 = vrot.lane.b32.xlu0 %v1211, 16
      %v1443 = vpop.permute.xlu0 %1442
      %1444 = vrot.lane.b32.xlu0 %v1212, 16
      %v1445 = vpop.permute.xlu0 %1444
      %1446 = vrot.lane.b32.xlu0 %v1213, 16
      %v1447 = vpop.permute.xlu0 %1446
      %1448 = vrot.lane.b32.xlu0 %v1214, 16
      %v1449 = vpop.permute.xlu0 %1448
      %1450 = vrot.lane.b32.xlu0 %v1215, 16
      %v1451 = vpop.permute.xlu0 %1450
      %1452 = vrot.lane.b32.xlu0 %v1216, 16
      %v1453 = vpop.permute.xlu0 %1452
      %1454 = vrot.lane.b32.xlu0 %v1217, 16
      %v1455 = vpop.permute.xlu0 %1454
      %1456 = vrot.lane.b32.xlu0 %v1218, 16
      %v1457 = vpop.permute.xlu0 %1456
      %1458 = vrot.lane.b32.xlu0 %v1219, 16
      %v1459 = vpop.permute.xlu0 %1458
      %1460 = vrot.lane.b32.xlu0 %v1220, 16
      %v1461 = vpop.permute.xlu0 %1460
      %1462 = vrot.lane.b32.xlu0 %v1221, 16
      %v1463 = vpop.permute.xlu0 %1462
      %1464 = vrot.lane.b32.xlu0 %v1222, 16
      %v1465 = vpop.permute.xlu0 %1464
      %1466 = vrot.lane.b32.xlu0 %v1223, 16
      %v1467 = vpop.permute.xlu0 %1466
      %1468 = vrot.lane.b32.xlu0 %v1224, 16
      %v1469 = vpop.permute.xlu0 %1468
      %1470 = vrot.lane.b32.xlu0 %v1225, 16
      %v1471 = vpop.permute.xlu0 %1470
      %1472 = vrot.lane.b32.xlu0 %v1226, 16
      %v1473 = vpop.permute.xlu0 %1472
      %1474 = vrot.lane.b32.xlu0 %v1227, 16
      %v1475 = vpop.permute.xlu0 %1474
      %1476 = vrot.lane.b32.xlu0 %v1228, 16
      %v1477 = vpop.permute.xlu0 %1476
      %1478 = vrot.lane.b32.xlu0 %v1229, 16
      %v1479 = vpop.permute.xlu0 %1478
      %1480 = vrot.lane.b32.xlu0 %v1230, 16
      %v1481 = vpop.permute.xlu0 %1480
      %1482 = vrot.lane.b32.xlu0 %v1231, 16
      %v1483 = vpop.permute.xlu0 %1482
      %1484 = vrot.lane.b32.xlu0 %v1232, 16
      %v1485 = vpop.permute.xlu0 %1484
      %1486 = vrot.lane.b32.xlu0 %v1233, 16
      %v1487 = vpop.permute.xlu0 %1486
      %1488 = vrot.lane.b32.xlu0 %v1234, 16
      %v1489 = vpop.permute.xlu0 %1488
      %1490 = vrot.lane.b32.xlu0 %v1235, 16
      %v1491 = vpop.permute.xlu0 %1490
      %1492 = vrot.lane.b32.xlu0 %v1236, 16
      %v1493 = vpop.permute.xlu0 %1492
      %1494 = vrot.lane.b32.xlu0 %v1237, 16
      %v1495 = vpop.permute.xlu0 %1494
      %1496 = vrot.lane.b32.xlu0 %v1238, 16
      %v1497 = vpop.permute.xlu0 %1496
      %1498 = vrot.lane.b32.xlu0 %v1239, 16
      %v1499 = vpop.permute.xlu0 %1498
      %1500 = vrot.lane.b32.xlu0 %v1240, 16
      %v1501 = vpop.permute.xlu0 %1500
      %1502 = vrot.lane.b32.xlu0 %v1241, 16
      %v1503 = vpop.permute.xlu0 %1502
      %1504 = vrot.lane.b32.xlu0 %v1246, 16
      %v1505 = vpop.permute.xlu0 %1504
      %1506 = vrot.lane.b32.xlu0 %v1379, 16
      %v1507 = vpop.permute.xlu0 %1506
      %v1510 = vunpack.c.l.b16 %v718
      %v1511 = vunpack.c.l.b16 %v719
      %v1512 = vpack.c.b16 %v1511, %v1510
      %1513 = vrot.lane.b32.xlu0 %v1181, 24
      %v1514 = vpop.permute.xlu0 %1513
      %1515 = vrot.lane.b32.xlu0 %v1182, 24
      %v1516 = vpop.permute.xlu0 %1515
      %1517 = vrot.lane.b32.xlu0 %v1183, 24
      %v1518 = vpop.permute.xlu0 %1517
      %1519 = vrot.lane.b32.xlu0 %v1184, 24
      %v1520 = vpop.permute.xlu0 %1519
      %1521 = vrot.lane.b32.xlu0 %v1185, 24
      %v1522 = vpop.permute.xlu0 %1521
      %1523 = vrot.lane.b32.xlu0 %v1186, 24
      %v1524 = vpop.permute.xlu0 %1523
      %1525 = vrot.lane.b32.xlu0 %v1187, 24
      %v1526 = vpop.permute.xlu0 %1525
      %1527 = vrot.lane.b32.xlu0 %v1188, 24
      %v1528 = vpop.permute.xlu0 %1527
      %1529 = vrot.lane.b32.xlu0 %v1189, 24
      %v1530 = vpop.permute.xlu0 %1529
      %1531 = vrot.lane.b32.xlu0 %v1190, 24
      %v1532 = vpop.permute.xlu0 %1531
      %1533 = vrot.lane.b32.xlu0 %v1191, 24
      %v1534 = vpop.permute.xlu0 %1533
      %1535 = vrot.lane.b32.xlu0 %v1192, 24
      %v1536 = vpop.permute.xlu0 %1535
      %1537 = vrot.lane.b32.xlu0 %v1193, 24
      %v1538 = vpop.permute.xlu0 %1537
      %1539 = vrot.lane.b32.xlu0 %v1194, 24
      %v1540 = vpop.permute.xlu0 %1539
      %1541 = vrot.lane.b32.xlu0 %v1195, 24
      %v1542 = vpop.permute.xlu0 %1541
      %1543 = vrot.lane.b32.xlu0 %v1196, 24
      %v1544 = vpop.permute.xlu0 %1543
      %1545 = vrot.lane.b32.xlu0 %v1197, 24
      %v1546 = vpop.permute.xlu0 %1545
      %1547 = vrot.lane.b32.xlu0 %v1198, 24
      %v1548 = vpop.permute.xlu0 %1547
      %1549 = vrot.lane.b32.xlu0 %v1199, 24
      %v1550 = vpop.permute.xlu0 %1549
      %1551 = vrot.lane.b32.xlu0 %v1200, 24
      %v1552 = vpop.permute.xlu0 %1551
      %1553 = vrot.lane.b32.xlu0 %v1201, 24
      %v1554 = vpop.permute.xlu0 %1553
      %1555 = vrot.lane.b32.xlu0 %v1202, 24
      %v1556 = vpop.permute.xlu0 %1555
      %1557 = vrot.lane.b32.xlu0 %v1203, 24
      %v1558 = vpop.permute.xlu0 %1557
      %1559 = vrot.lane.b32.xlu0 %v1204, 24
      %v1560 = vpop.permute.xlu0 %1559
      %1561 = vrot.lane.b32.xlu0 %v1205, 24
      %v1562 = vpop.permute.xlu0 %1561
      %1563 = vrot.lane.b32.xlu0 %v1206, 24
      %v1564 = vpop.permute.xlu0 %1563
      %1565 = vrot.lane.b32.xlu0 %v1207, 24
      %v1566 = vpop.permute.xlu0 %1565
      %1567 = vrot.lane.b32.xlu0 %v1208, 24
      %v1568 = vpop.permute.xlu0 %1567
      %1569 = vrot.lane.b32.xlu0 %v1209, 24
      %v1570 = vpop.permute.xlu0 %1569
      %1571 = vrot.lane.b32.xlu0 %v1210, 24
      %v1572 = vpop.permute.xlu0 %1571
      %1573 = vrot.lane.b32.xlu0 %v1211, 24
      %v1574 = vpop.permute.xlu0 %1573
      %1575 = vrot.lane.b32.xlu0 %v1212, 24
      %v1576 = vpop.permute.xlu0 %1575
      %1577 = vrot.lane.b32.xlu0 %v1213, 24
      %v1578 = vpop.permute.xlu0 %1577
      %1579 = vrot.lane.b32.xlu0 %v1214, 24
      %v1580 = vpop.permute.xlu0 %1579
      %1581 = vrot.lane.b32.xlu0 %v1215, 24
      %v1582 = vpop.permute.xlu0 %1581
      %1583 = vrot.lane.b32.xlu0 %v1216, 24
      %v1584 = vpop.permute.xlu0 %1583
      %1585 = vrot.lane.b32.xlu0 %v1217, 24
      %v1586 = vpop.permute.xlu0 %1585
      %1587 = vrot.lane.b32.xlu0 %v1218, 24
      %v1588 = vpop.permute.xlu0 %1587
      %1589 = vrot.lane.b32.xlu0 %v1219, 24
      %v1590 = vpop.permute.xlu0 %1589
      %1591 = vrot.lane.b32.xlu0 %v1220, 24
      %v1592 = vpop.permute.xlu0 %1591
      %1593 = vrot.lane.b32.xlu0 %v1221, 24
      %v1594 = vpop.permute.xlu0 %1593
      %1595 = vrot.lane.b32.xlu0 %v1222, 24
      %v1596 = vpop.permute.xlu0 %1595
      %1597 = vrot.lane.b32.xlu0 %v1223, 24
      %v1598 = vpop.permute.xlu0 %1597
      %1599 = vrot.lane.b32.xlu0 %v1224, 24
      %v1600 = vpop.permute.xlu0 %1599
      %1601 = vrot.lane.b32.xlu0 %v1225, 24
      %v1602 = vpop.permute.xlu0 %1601
      %1603 = vrot.lane.b32.xlu0 %v1226, 24
      %v1604 = vpop.permute.xlu0 %1603
      %1605 = vrot.lane.b32.xlu0 %v1227, 24
      %v1606 = vpop.permute.xlu0 %1605
      %1607 = vrot.lane.b32.xlu0 %v1228, 24
      %v1608 = vpop.permute.xlu0 %1607
      %1609 = vrot.lane.b32.xlu0 %v1229, 24
      %v1610 = vpop.permute.xlu0 %1609
      %1611 = vrot.lane.b32.xlu0 %v1230, 24
      %v1612 = vpop.permute.xlu0 %1611
      %1613 = vrot.lane.b32.xlu0 %v1231, 24
      %v1614 = vpop.permute.xlu0 %1613
      %1615 = vrot.lane.b32.xlu0 %v1232, 24
      %v1616 = vpop.permute.xlu0 %1615
      %1617 = vrot.lane.b32.xlu0 %v1233, 24
      %v1618 = vpop.permute.xlu0 %1617
      %1619 = vrot.lane.b32.xlu0 %v1234, 24
      %v1620 = vpop.permute.xlu0 %1619
      %1621 = vrot.lane.b32.xlu0 %v1235, 24
      %v1622 = vpop.permute.xlu0 %1621
      %1623 = vrot.lane.b32.xlu0 %v1236, 24
      %v1624 = vpop.permute.xlu0 %1623
      %1625 = vrot.lane.b32.xlu0 %v1237, 24
      %v1626 = vpop.permute.xlu0 %1625
      %1627 = vrot.lane.b32.xlu0 %v1238, 24
      %v1628 = vpop.permute.xlu0 %1627
      %1629 = vrot.lane.b32.xlu0 %v1239, 24
      %v1630 = vpop.permute.xlu0 %1629
      %1631 = vrot.lane.b32.xlu0 %v1240, 24
      %v1632 = vpop.permute.xlu0 %1631
      %1633 = vrot.lane.b32.xlu0 %v1241, 24
      %v1634 = vpop.permute.xlu0 %1633
      %1635 = vrot.lane.b32.xlu0 %v1246, 24
      %v1636 = vpop.permute.xlu0 %1635
      %1637 = vrot.lane.b32.xlu0 %v1379, 24
      %v1638 = vpop.permute.xlu0 %1637
      %1639 = vrot.lane.b32.xlu0 %v1512, 24
      %v1640 = vpop.permute.xlu0 %1639
      %v1643 = vunpack.c.l.b16 %v720
      %v1644 = vunpack.c.l.b16 %v721
      %v1645 = vpack.c.b16 %v1644, %v1643
      %1646 = vrot.lane.b32.xlu0 %v1182, 32
      %v1647 = vpop.permute.xlu0 %1646
      %1648 = vrot.lane.b32.xlu0 %v1183, 32
      %v1649 = vpop.permute.xlu0 %1648
      %1650 = vrot.lane.b32.xlu0 %v1184, 32
      %v1651 = vpop.permute.xlu0 %1650
      %1652 = vrot.lane.b32.xlu0 %v1185, 32
      %v1653 = vpop.permute.xlu0 %1652
      %1654 = vrot.lane.b32.xlu0 %v1186, 32
      %v1655 = vpop.permute.xlu0 %1654
      %1656 = vrot.lane.b32.xlu0 %v1187, 32
      %v1657 = vpop.permute.xlu0 %1656
      %1658 = vrot.lane.b32.xlu0 %v1188, 32
      %v1659 = vpop.permute.xlu0 %1658
      %1660 = vrot.lane.b32.xlu0 %v1189, 32
      %v1661 = vpop.permute.xlu0 %1660
      %1662 = vrot.lane.b32.xlu0 %v1190, 32
      %v1663 = vpop.permute.xlu0 %1662
      %1664 = vrot.lane.b32.xlu0 %v1191, 32
      %v1665 = vpop.permute.xlu0 %1664
      %1666 = vrot.lane.b32.xlu0 %v1192, 32
      %v1667 = vpop.permute.xlu0 %1666
      %1668 = vrot.lane.b32.xlu0 %v1193, 32
      %v1669 = vpop.permute.xlu0 %1668
      %1670 = vrot.lane.b32.xlu0 %v1194, 32
      %v1671 = vpop.permute.xlu0 %1670
      %1672 = vrot.lane.b32.xlu0 %v1195, 32
      %v1673 = vpop.permute.xlu0 %1672
      %1674 = vrot.lane.b32.xlu0 %v1196, 32
      %v1675 = vpop.permute.xlu0 %1674
      %1676 = vrot.lane.b32.xlu0 %v1197, 32
      %v1677 = vpop.permute.xlu0 %1676
      %1678 = vrot.lane.b32.xlu0 %v1198, 32
      %v1679 = vpop.permute.xlu0 %1678
      %1680 = vrot.lane.b32.xlu0 %v1199, 32
      %v1681 = vpop.permute.xlu0 %1680
      %1682 = vrot.lane.b32.xlu0 %v1200, 32
      %v1683 = vpop.permute.xlu0 %1682
      %1684 = vrot.lane.b32.xlu0 %v1201, 32
      %v1685 = vpop.permute.xlu0 %1684
      %1686 = vrot.lane.b32.xlu0 %v1202, 32
      %v1687 = vpop.permute.xlu0 %1686
      %1688 = vrot.lane.b32.xlu0 %v1203, 32
      %v1689 = vpop.permute.xlu0 %1688
      %1690 = vrot.lane.b32.xlu0 %v1204, 32
      %v1691 = vpop.permute.xlu0 %1690
      %1692 = vrot.lane.b32.xlu0 %v1205, 32
      %v1693 = vpop.permute.xlu0 %1692
      %1694 = vrot.lane.b32.xlu0 %v1206, 32
      %v1695 = vpop.permute.xlu0 %1694
      %1696 = vrot.lane.b32.xlu0 %v1207, 32
      %v1697 = vpop.permute.xlu0 %1696
      %1698 = vrot.lane.b32.xlu0 %v1208, 32
      %v1699 = vpop.permute.xlu0 %1698
      %1700 = vrot.lane.b32.xlu0 %v1209, 32
      %v1701 = vpop.permute.xlu0 %1700
      %1702 = vrot.lane.b32.xlu0 %v1210, 32
      %v1703 = vpop.permute.xlu0 %1702
      %1704 = vrot.lane.b32.xlu0 %v1211, 32
      %v1705 = vpop.permute.xlu0 %1704
      %1706 = vrot.lane.b32.xlu0 %v1212, 32
      %v1707 = vpop.permute.xlu0 %1706
      %1708 = vrot.lane.b32.xlu0 %v1213, 32
      %v1709 = vpop.permute.xlu0 %1708
      %1710 = vrot.lane.b32.xlu0 %v1214, 32
      %v1711 = vpop.permute.xlu0 %1710
      %1712 = vrot.lane.b32.xlu0 %v1215, 32
      %v1713 = vpop.permute.xlu0 %1712
      %1714 = vrot.lane.b32.xlu0 %v1216, 32
      %v1715 = vpop.permute.xlu0 %1714
      %1716 = vrot.lane.b32.xlu0 %v1217, 32
      %v1717 = vpop.permute.xlu0 %1716
      %1718 = vrot.lane.b32.xlu0 %v1218, 32
      %v1719 = vpop.permute.xlu0 %1718
      %1720 = vrot.lane.b32.xlu0 %v1219, 32
      %v1721 = vpop.permute.xlu0 %1720
      %1722 = vrot.lane.b32.xlu0 %v1220, 32
      %v1723 = vpop.permute.xlu0 %1722
      %1724 = vrot.lane.b32.xlu0 %v1221, 32
      %v1725 = vpop.permute.xlu0 %1724
      %1726 = vrot.lane.b32.xlu0 %v1222, 32
      %v1727 = vpop.permute.xlu0 %1726
      %1728 = vrot.lane.b32.xlu0 %v1223, 32
      %v1729 = vpop.permute.xlu0 %1728
      %1730 = vrot.lane.b32.xlu0 %v1224, 32
      %v1731 = vpop.permute.xlu0 %1730
      %1732 = vrot.lane.b32.xlu0 %v1225, 32
      %v1733 = vpop.permute.xlu0 %1732
      %1734 = vrot.lane.b32.xlu0 %v1226, 32
      %v1735 = vpop.permute.xlu0 %1734
      %1736 = vrot.lane.b32.xlu0 %v1227, 32
      %v1737 = vpop.permute.xlu0 %1736
      %1738 = vrot.lane.b32.xlu0 %v1228, 32
      %v1739 = vpop.permute.xlu0 %1738
      %1740 = vrot.lane.b32.xlu0 %v1229, 32
      %v1741 = vpop.permute.xlu0 %1740
      %1742 = vrot.lane.b32.xlu0 %v1230, 32
      %v1743 = vpop.permute.xlu0 %1742
      %1744 = vrot.lane.b32.xlu0 %v1231, 32
      %v1745 = vpop.permute.xlu0 %1744
      %1746 = vrot.lane.b32.xlu0 %v1232, 32
      %v1747 = vpop.permute.xlu0 %1746
      %1748 = vrot.lane.b32.xlu0 %v1233, 32
      %v1749 = vpop.permute.xlu0 %1748
      %1750 = vrot.lane.b32.xlu0 %v1234, 32
      %v1751 = vpop.permute.xlu0 %1750
      %1752 = vrot.lane.b32.xlu0 %v1235, 32
      %v1753 = vpop.permute.xlu0 %1752
      %1754 = vrot.lane.b32.xlu0 %v1236, 32
      %v1755 = vpop.permute.xlu0 %1754
      %1756 = vrot.lane.b32.xlu0 %v1237, 32
      %v1757 = vpop.permute.xlu0 %1756
      %1758 = vrot.lane.b32.xlu0 %v1238, 32
      %v1759 = vpop.permute.xlu0 %1758
      %1760 = vrot.lane.b32.xlu0 %v1239, 32
      %v1761 = vpop.permute.xlu0 %1760
      %1762 = vrot.lane.b32.xlu0 %v1240, 32
      %v1763 = vpop.permute.xlu0 %1762
      %1764 = vrot.lane.b32.xlu0 %v1241, 32
      %v1765 = vpop.permute.xlu0 %1764
      %1766 = vrot.lane.b32.xlu0 %v1246, 32
      %v1767 = vpop.permute.xlu0 %1766
      %1768 = vrot.lane.b32.xlu0 %v1379, 32
      %v1769 = vpop.permute.xlu0 %1768
      %1770 = vrot.lane.b32.xlu0 %v1512, 32
      %v1771 = vpop.permute.xlu0 %1770
      %1772 = vrot.lane.b32.xlu0 %v1645, 32
      %v1773 = vpop.permute.xlu0 %1772
      %v1776 = vunpack.c.l.b16 %v722
      %v1777 = vunpack.c.l.b16 %v723
      %v1778 = vpack.c.b16 %v1777, %v1776
      %1779 = vrot.lane.b32.xlu0 %v1183, 40
      %v1780 = vpop.permute.xlu0 %1779
      %1781 = vrot.lane.b32.xlu0 %v1184, 40
      %v1782 = vpop.permute.xlu0 %1781
      %1783 = vrot.lane.b32.xlu0 %v1185, 40
      %v1784 = vpop.permute.xlu0 %1783
      %1785 = vrot.lane.b32.xlu0 %v1186, 40
      %v1786 = vpop.permute.xlu0 %1785
      %1787 = vrot.lane.b32.xlu0 %v1187, 40
      %v1788 = vpop.permute.xlu0 %1787
      %1789 = vrot.lane.b32.xlu0 %v1188, 40
      %v1790 = vpop.permute.xlu0 %1789
      %1791 = vrot.lane.b32.xlu0 %v1189, 40
      %v1792 = vpop.permute.xlu0 %1791
      %1793 = vrot.lane.b32.xlu0 %v1190, 40
      %v1794 = vpop.permute.xlu0 %1793
      %1795 = vrot.lane.b32.xlu0 %v1191, 40
      %v1796 = vpop.permute.xlu0 %1795
      %1797 = vrot.lane.b32.xlu0 %v1192, 40
      %v1798 = vpop.permute.xlu0 %1797
      %1799 = vrot.lane.b32.xlu0 %v1193, 40
      %v1800 = vpop.permute.xlu0 %1799
      %1801 = vrot.lane.b32.xlu0 %v1194, 40
      %v1802 = vpop.permute.xlu0 %1801
      %1803 = vrot.lane.b32.xlu0 %v1195, 40
      %v1804 = vpop.permute.xlu0 %1803
      %1805 = vrot.lane.b32.xlu0 %v1196, 40
      %v1806 = vpop.permute.xlu0 %1805
      %1807 = vrot.lane.b32.xlu0 %v1197, 40
      %v1808 = vpop.permute.xlu0 %1807
      %1809 = vrot.lane.b32.xlu0 %v1198, 40
      %v1810 = vpop.permute.xlu0 %1809
      %1811 = vrot.lane.b32.xlu0 %v1199, 40
      %v1812 = vpop.permute.xlu0 %1811
      %1813 = vrot.lane.b32.xlu0 %v1200, 40
      %v1814 = vpop.permute.xlu0 %1813
      %1815 = vrot.lane.b32.xlu0 %v1201, 40
      %v1816 = vpop.permute.xlu0 %1815
      %1817 = vrot.lane.b32.xlu0 %v1202, 40
      %v1818 = vpop.permute.xlu0 %1817
      %1819 = vrot.lane.b32.xlu0 %v1203, 40
      %v1820 = vpop.permute.xlu0 %1819
      %1821 = vrot.lane.b32.xlu0 %v1204, 40
      %v1822 = vpop.permute.xlu0 %1821
      %1823 = vrot.lane.b32.xlu0 %v1205, 40
      %v1824 = vpop.permute.xlu0 %1823
      %1825 = vrot.lane.b32.xlu0 %v1206, 40
      %v1826 = vpop.permute.xlu0 %1825
      %1827 = vrot.lane.b32.xlu0 %v1207, 40
      %v1828 = vpop.permute.xlu0 %1827
      %1829 = vrot.lane.b32.xlu0 %v1208, 40
      %v1830 = vpop.permute.xlu0 %1829
      %1831 = vrot.lane.b32.xlu0 %v1209, 40
      %v1832 = vpop.permute.xlu0 %1831
      %1833 = vrot.lane.b32.xlu0 %v1210, 40
      %v1834 = vpop.permute.xlu0 %1833
      %1835 = vrot.lane.b32.xlu0 %v1211, 40
      %v1836 = vpop.permute.xlu0 %1835
      %1837 = vrot.lane.b32.xlu0 %v1212, 40
      %v1838 = vpop.permute.xlu0 %1837
      %1839 = vrot.lane.b32.xlu0 %v1213, 40
      %v1840 = vpop.permute.xlu0 %1839
      %1841 = vrot.lane.b32.xlu0 %v1214, 40
      %v1842 = vpop.permute.xlu0 %1841
      %1843 = vrot.lane.b32.xlu0 %v1215, 40
      %v1844 = vpop.permute.xlu0 %1843
      %1845 = vrot.lane.b32.xlu0 %v1216, 40
      %v1846 = vpop.permute.xlu0 %1845
      %1847 = vrot.lane.b32.xlu0 %v1217, 40
      %v1848 = vpop.permute.xlu0 %1847
      %1849 = vrot.lane.b32.xlu0 %v1218, 40
      %v1850 = vpop.permute.xlu0 %1849
      %1851 = vrot.lane.b32.xlu0 %v1219, 40
      %v1852 = vpop.permute.xlu0 %1851
      %1853 = vrot.lane.b32.xlu0 %v1220, 40
      %v1854 = vpop.permute.xlu0 %1853
      %1855 = vrot.lane.b32.xlu0 %v1221, 40
      %v1856 = vpop.permute.xlu0 %1855
      %1857 = vrot.lane.b32.xlu0 %v1222, 40
      %v1858 = vpop.permute.xlu0 %1857
      %1859 = vrot.lane.b32.xlu0 %v1223, 40
      %v1860 = vpop.permute.xlu0 %1859
      %1861 = vrot.lane.b32.xlu0 %v1224, 40
      %v1862 = vpop.permute.xlu0 %1861
      %1863 = vrot.lane.b32.xlu0 %v1225, 40
      %v1864 = vpop.permute.xlu0 %1863
      %1865 = vrot.lane.b32.xlu0 %v1226, 40
      %v1866 = vpop.permute.xlu0 %1865
      %1867 = vrot.lane.b32.xlu0 %v1227, 40
      %v1868 = vpop.permute.xlu0 %1867
      %1869 = vrot.lane.b32.xlu0 %v1228, 40
      %v1870 = vpop.permute.xlu0 %1869
      %1871 = vrot.lane.b32.xlu0 %v1229, 40
      %v1872 = vpop.permute.xlu0 %1871
      %1873 = vrot.lane.b32.xlu0 %v1230, 40
      %v1874 = vpop.permute.xlu0 %1873
      %1875 = vrot.lane.b32.xlu0 %v1231, 40
      %v1876 = vpop.permute.xlu0 %1875
      %1877 = vrot.lane.b32.xlu0 %v1232, 40
      %v1878 = vpop.permute.xlu0 %1877
      %1879 = vrot.lane.b32.xlu0 %v1233, 40
      %v1880 = vpop.permute.xlu0 %1879
      %1881 = vrot.lane.b32.xlu0 %v1234, 40
      %v1882 = vpop.permute.xlu0 %1881
      %1883 = vrot.lane.b32.xlu0 %v1235, 40
      %v1884 = vpop.permute.xlu0 %1883
      %1885 = vrot.lane.b32.xlu0 %v1236, 40
      %v1886 = vpop.permute.xlu0 %1885
      %1887 = vrot.lane.b32.xlu0 %v1237, 40
      %v1888 = vpop.permute.xlu0 %1887
      %1889 = vrot.lane.b32.xlu0 %v1238, 40
      %v1890 = vpop.permute.xlu0 %1889
      %1891 = vrot.lane.b32.xlu0 %v1239, 40
      %v1892 = vpop.permute.xlu0 %1891
      %1893 = vrot.lane.b32.xlu0 %v1240, 40
      %v1894 = vpop.permute.xlu0 %1893
      %1895 = vrot.lane.b32.xlu0 %v1241, 40
      %v1896 = vpop.permute.xlu0 %1895
      %1897 = vrot.lane.b32.xlu0 %v1246, 40
      %v1898 = vpop.permute.xlu0 %1897
      %1899 = vrot.lane.b32.xlu0 %v1379, 40
      %v1900 = vpop.permute.xlu0 %1899
      %1901 = vrot.lane.b32.xlu0 %v1512, 40
      %v1902 = vpop.permute.xlu0 %1901
      %1903 = vrot.lane.b32.xlu0 %v1645, 40
      %v1904 = vpop.permute.xlu0 %1903
      %1905 = vrot.lane.b32.xlu0 %v1778, 40
      %v1906 = vpop.permute.xlu0 %1905
      %v1909 = vunpack.c.l.b16 %v724
      %v1910 = vunpack.c.l.b16 %v725
      %v1911 = vpack.c.b16 %v1910, %v1909
      %1912 = vrot.lane.b32.xlu0 %v1184, 48
      %v1913 = vpop.permute.xlu0 %1912
      %1914 = vrot.lane.b32.xlu0 %v1185, 48
      %v1915 = vpop.permute.xlu0 %1914
      %1916 = vrot.lane.b32.xlu0 %v1186, 48
      %v1917 = vpop.permute.xlu0 %1916
      %1918 = vrot.lane.b32.xlu0 %v1187, 48
      %v1919 = vpop.permute.xlu0 %1918
      %1920 = vrot.lane.b32.xlu0 %v1188, 48
      %v1921 = vpop.permute.xlu0 %1920
      %1922 = vrot.lane.b32.xlu0 %v1189, 48
      %v1923 = vpop.permute.xlu0 %1922
      %1924 = vrot.lane.b32.xlu0 %v1190, 48
      %v1925 = vpop.permute.xlu0 %1924
      %1926 = vrot.lane.b32.xlu0 %v1191, 48
      %v1927 = vpop.permute.xlu0 %1926
      %1928 = vrot.lane.b32.xlu0 %v1192, 48
      %v1929 = vpop.permute.xlu0 %1928
      %1930 = vrot.lane.b32.xlu0 %v1193, 48
      %v1931 = vpop.permute.xlu0 %1930
      %1932 = vrot.lane.b32.xlu0 %v1194, 48
      %v1933 = vpop.permute.xlu0 %1932
      %1934 = vrot.lane.b32.xlu0 %v1195, 48
      %v1935 = vpop.permute.xlu0 %1934
      %1936 = vrot.lane.b32.xlu0 %v1196, 48
      %v1937 = vpop.permute.xlu0 %1936
      %1938 = vrot.lane.b32.xlu0 %v1197, 48
      %v1939 = vpop.permute.xlu0 %1938
      %1940 = vrot.lane.b32.xlu0 %v1198, 48
      %v1941 = vpop.permute.xlu0 %1940
      %1942 = vrot.lane.b32.xlu0 %v1199, 48
      %v1943 = vpop.permute.xlu0 %1942
      %1944 = vrot.lane.b32.xlu0 %v1200, 48
      %v1945 = vpop.permute.xlu0 %1944
      %1946 = vrot.lane.b32.xlu0 %v1201, 48
      %v1947 = vpop.permute.xlu0 %1946
      %1948 = vrot.lane.b32.xlu0 %v1202, 48
      %v1949 = vpop.permute.xlu0 %1948
      %1950 = vrot.lane.b32.xlu0 %v1203, 48
      %v1951 = vpop.permute.xlu0 %1950
      %1952 = vrot.lane.b32.xlu0 %v1204, 48
      %v1953 = vpop.permute.xlu0 %1952
      %1954 = vrot.lane.b32.xlu0 %v1205, 48
      %v1955 = vpop.permute.xlu0 %1954
      %1956 = vrot.lane.b32.xlu0 %v1206, 48
      %v1957 = vpop.permute.xlu0 %1956
      %1958 = vrot.lane.b32.xlu0 %v1207, 48
      %v1959 = vpop.permute.xlu0 %1958
      %1960 = vrot.lane.b32.xlu0 %v1208, 48
      %v1961 = vpop.permute.xlu0 %1960
      %1962 = vrot.lane.b32.xlu0 %v1209, 48
      %v1963 = vpop.permute.xlu0 %1962
      %1964 = vrot.lane.b32.xlu0 %v1210, 48
      %v1965 = vpop.permute.xlu0 %1964
      %1966 = vrot.lane.b32.xlu0 %v1211, 48
      %v1967 = vpop.permute.xlu0 %1966
      %1968 = vrot.lane.b32.xlu0 %v1212, 48
      %v1969 = vpop.permute.xlu0 %1968
      %1970 = vrot.lane.b32.xlu0 %v1213, 48
      %v1971 = vpop.permute.xlu0 %1970
      %1972 = vrot.lane.b32.xlu0 %v1214, 48
      %v1973 = vpop.permute.xlu0 %1972
      %1974 = vrot.lane.b32.xlu0 %v1215, 48
      %v1975 = vpop.permute.xlu0 %1974
      %1976 = vrot.lane.b32.xlu0 %v1216, 48
      %v1977 = vpop.permute.xlu0 %1976
      %1978 = vrot.lane.b32.xlu0 %v1217, 48
      %v1979 = vpop.permute.xlu0 %1978
      %1980 = vrot.lane.b32.xlu0 %v1218, 48
      %v1981 = vpop.permute.xlu0 %1980
      %1982 = vrot.lane.b32.xlu0 %v1219, 48
      %v1983 = vpop.permute.xlu0 %1982
      %1984 = vrot.lane.b32.xlu0 %v1220, 48
      %v1985 = vpop.permute.xlu0 %1984
      %1986 = vrot.lane.b32.xlu0 %v1221, 48
      %v1987 = vpop.permute.xlu0 %1986
      %1988 = vrot.lane.b32.xlu0 %v1222, 48
      %v1989 = vpop.permute.xlu0 %1988
      %1990 = vrot.lane.b32.xlu0 %v1223, 48
      %v1991 = vpop.permute.xlu0 %1990
      %1992 = vrot.lane.b32.xlu0 %v1224, 48
      %v1993 = vpop.permute.xlu0 %1992
      %1994 = vrot.lane.b32.xlu0 %v1225, 48
      %v1995 = vpop.permute.xlu0 %1994
      %1996 = vrot.lane.b32.xlu0 %v1226, 48
      %v1997 = vpop.permute.xlu0 %1996
      %1998 = vrot.lane.b32.xlu0 %v1227, 48
      %v1999 = vpop.permute.xlu0 %1998
      %2000 = vrot.lane.b32.xlu0 %v1228, 48
      %v2001 = vpop.permute.xlu0 %2000
      %2002 = vrot.lane.b32.xlu0 %v1229, 48
      %v2003 = vpop.permute.xlu0 %2002
      %2004 = vrot.lane.b32.xlu0 %v1230, 48
      %v2005 = vpop.permute.xlu0 %2004
      %2006 = vrot.lane.b32.xlu0 %v1231, 48
      %v2007 = vpop.permute.xlu0 %2006
      %2008 = vrot.lane.b32.xlu0 %v1232, 48
      %v2009 = vpop.permute.xlu0 %2008
      %2010 = vrot.lane.b32.xlu0 %v1233, 48
      %v2011 = vpop.permute.xlu0 %2010
      %2012 = vrot.lane.b32.xlu0 %v1234, 48
      %v2013 = vpop.permute.xlu0 %2012
      %2014 = vrot.lane.b32.xlu0 %v1235, 48
      %v2015 = vpop.permute.xlu0 %2014
      %2016 = vrot.lane.b32.xlu0 %v1236, 48
      %v2017 = vpop.permute.xlu0 %2016
      %2018 = vrot.lane.b32.xlu0 %v1237, 48
      %v2019 = vpop.permute.xlu0 %2018
      %2020 = vrot.lane.b32.xlu0 %v1238, 48
      %v2021 = vpop.permute.xlu0 %2020
      %2022 = vrot.lane.b32.xlu0 %v1239, 48
      %v2023 = vpop.permute.xlu0 %2022
      %2024 = vrot.lane.b32.xlu0 %v1240, 48
      %v2025 = vpop.permute.xlu0 %2024
      %2026 = vrot.lane.b32.xlu0 %v1241, 48
      %v2027 = vpop.permute.xlu0 %2026
      %2028 = vrot.lane.b32.xlu0 %v1246, 48
      %v2029 = vpop.permute.xlu0 %2028
      %2030 = vrot.lane.b32.xlu0 %v1379, 48
      %v2031 = vpop.permute.xlu0 %2030
      %2032 = vrot.lane.b32.xlu0 %v1512, 48
      %v2033 = vpop.permute.xlu0 %2032
      %2034 = vrot.lane.b32.xlu0 %v1645, 48
      %v2035 = vpop.permute.xlu0 %2034
      %2036 = vrot.lane.b32.xlu0 %v1778, 48
      %v2037 = vpop.permute.xlu0 %2036
      %2038 = vrot.lane.b32.xlu0 %v1911, 48
      %v2039 = vpop.permute.xlu0 %2038
      %v2042 = vunpack.c.l.b16 %v726
      %v2043 = vunpack.c.l.b16 %v727
      %v2044 = vpack.c.b16 %v2043, %v2042
      %2045 = vrot.lane.b32.xlu0 %v1185, 56
      %v2046 = vpop.permute.xlu0 %2045
      %2047 = vrot.lane.b32.xlu0 %v1186, 56
      %v2048 = vpop.permute.xlu0 %2047
      %2049 = vrot.lane.b32.xlu0 %v1187, 56
      %v2050 = vpop.permute.xlu0 %2049
      %2051 = vrot.lane.b32.xlu0 %v1188, 56
      %v2052 = vpop.permute.xlu0 %2051
      %2053 = vrot.lane.b32.xlu0 %v1189, 56
      %v2054 = vpop.permute.xlu0 %2053
      %2055 = vrot.lane.b32.xlu0 %v1190, 56
      %v2056 = vpop.permute.xlu0 %2055
      %2057 = vrot.lane.b32.xlu0 %v1191, 56
      %v2058 = vpop.permute.xlu0 %2057
      %2059 = vrot.lane.b32.xlu0 %v1192, 56
      %v2060 = vpop.permute.xlu0 %2059
      %2061 = vrot.lane.b32.xlu0 %v1193, 56
      %v2062 = vpop.permute.xlu0 %2061
      %2063 = vrot.lane.b32.xlu0 %v1194, 56
      %v2064 = vpop.permute.xlu0 %2063
      %2065 = vrot.lane.b32.xlu0 %v1195, 56
      %v2066 = vpop.permute.xlu0 %2065
      %2067 = vrot.lane.b32.xlu0 %v1196, 56
      %v2068 = vpop.permute.xlu0 %2067
      %2069 = vrot.lane.b32.xlu0 %v1197, 56
      %v2070 = vpop.permute.xlu0 %2069
      %2071 = vrot.lane.b32.xlu0 %v1198, 56
      %v2072 = vpop.permute.xlu0 %2071
      %2073 = vrot.lane.b32.xlu0 %v1199, 56
      %v2074 = vpop.permute.xlu0 %2073
      %2075 = vrot.lane.b32.xlu0 %v1200, 56
      %v2076 = vpop.permute.xlu0 %2075
      %2077 = vrot.lane.b32.xlu0 %v1201, 56
      %v2078 = vpop.permute.xlu0 %2077
      %2079 = vrot.lane.b32.xlu0 %v1202, 56
      %v2080 = vpop.permute.xlu0 %2079
      %2081 = vrot.lane.b32.xlu0 %v1203, 56
      %v2082 = vpop.permute.xlu0 %2081
      %2083 = vrot.lane.b32.xlu0 %v1204, 56
      %v2084 = vpop.permute.xlu0 %2083
      %2085 = vrot.lane.b32.xlu0 %v1205, 56
      %v2086 = vpop.permute.xlu0 %2085
      %2087 = vrot.lane.b32.xlu0 %v1206, 56
      %v2088 = vpop.permute.xlu0 %2087
      %2089 = vrot.lane.b32.xlu0 %v1207, 56
      %v2090 = vpop.permute.xlu0 %2089
      %2091 = vrot.lane.b32.xlu0 %v1208, 56
      %v2092 = vpop.permute.xlu0 %2091
      %2093 = vrot.lane.b32.xlu0 %v1209, 56
      %v2094 = vpop.permute.xlu0 %2093
      %2095 = vrot.lane.b32.xlu0 %v1210, 56
      %v2096 = vpop.permute.xlu0 %2095
      %2097 = vrot.lane.b32.xlu0 %v1211, 56
      %v2098 = vpop.permute.xlu0 %2097
      %2099 = vrot.lane.b32.xlu0 %v1212, 56
      %v2100 = vpop.permute.xlu0 %2099
      %2101 = vrot.lane.b32.xlu0 %v1213, 56
      %v2102 = vpop.permute.xlu0 %2101
      %2103 = vrot.lane.b32.xlu0 %v1214, 56
      %v2104 = vpop.permute.xlu0 %2103
      %2105 = vrot.lane.b32.xlu0 %v1215, 56
      %v2106 = vpop.permute.xlu0 %2105
      %2107 = vrot.lane.b32.xlu0 %v1216, 56
      %v2108 = vpop.permute.xlu0 %2107
      %2109 = vrot.lane.b32.xlu0 %v1217, 56
      %v2110 = vpop.permute.xlu0 %2109
      %2111 = vrot.lane.b32.xlu0 %v1218, 56
      %v2112 = vpop.permute.xlu0 %2111
      %2113 = vrot.lane.b32.xlu0 %v1219, 56
      %v2114 = vpop.permute.xlu0 %2113
      %2115 = vrot.lane.b32.xlu0 %v1220, 56
      %v2116 = vpop.permute.xlu0 %2115
      %2117 = vrot.lane.b32.xlu0 %v1221, 56
      %v2118 = vpop.permute.xlu0 %2117
      %2119 = vrot.lane.b32.xlu0 %v1222, 56
      %v2120 = vpop.permute.xlu0 %2119
      %2121 = vrot.lane.b32.xlu0 %v1223, 56
      %v2122 = vpop.permute.xlu0 %2121
      %2123 = vrot.lane.b32.xlu0 %v1224, 56
      %v2124 = vpop.permute.xlu0 %2123
      %2125 = vrot.lane.b32.xlu0 %v1225, 56
      %v2126 = vpop.permute.xlu0 %2125
      %2127 = vrot.lane.b32.xlu0 %v1226, 56
      %v2128 = vpop.permute.xlu0 %2127
      %2129 = vrot.lane.b32.xlu0 %v1227, 56
      %v2130 = vpop.permute.xlu0 %2129
      %2131 = vrot.lane.b32.xlu0 %v1228, 56
      %v2132 = vpop.permute.xlu0 %2131
      %2133 = vrot.lane.b32.xlu0 %v1229, 56
      %v2134 = vpop.permute.xlu0 %2133
      %2135 = vrot.lane.b32.xlu0 %v1230, 56
      %v2136 = vpop.permute.xlu0 %2135
      %2137 = vrot.lane.b32.xlu0 %v1231, 56
      %v2138 = vpop.permute.xlu0 %2137
      %2139 = vrot.lane.b32.xlu0 %v1232, 56
      %v2140 = vpop.permute.xlu0 %2139
      %2141 = vrot.lane.b32.xlu0 %v1233, 56
      %v2142 = vpop.permute.xlu0 %2141
      %2143 = vrot.lane.b32.xlu0 %v1234, 56
      %v2144 = vpop.permute.xlu0 %2143
      %2145 = vrot.lane.b32.xlu0 %v1235, 56
      %v2146 = vpop.permute.xlu0 %2145
      %2147 = vrot.lane.b32.xlu0 %v1236, 56
      %v2148 = vpop.permute.xlu0 %2147
      %2149 = vrot.lane.b32.xlu0 %v1237, 56
      %v2150 = vpop.permute.xlu0 %2149
      %2151 = vrot.lane.b32.xlu0 %v1238, 56
      %v2152 = vpop.permute.xlu0 %2151
      %2153 = vrot.lane.b32.xlu0 %v1239, 56
      %v2154 = vpop.permute.xlu0 %2153
      %2155 = vrot.lane.b32.xlu0 %v1240, 56
      %v2156 = vpop.permute.xlu0 %2155
      %2157 = vrot.lane.b32.xlu0 %v1241, 56
      %v2158 = vpop.permute.xlu0 %2157
      %2159 = vrot.lane.b32.xlu0 %v1246, 56
      %v2160 = vpop.permute.xlu0 %2159
      %2161 = vrot.lane.b32.xlu0 %v1379, 56
      %v2162 = vpop.permute.xlu0 %2161
      %2163 = vrot.lane.b32.xlu0 %v1512, 56
      %v2164 = vpop.permute.xlu0 %2163
      %2165 = vrot.lane.b32.xlu0 %v1645, 56
      %v2166 = vpop.permute.xlu0 %2165
      %2167 = vrot.lane.b32.xlu0 %v1778, 56
      %v2168 = vpop.permute.xlu0 %2167
      %2169 = vrot.lane.b32.xlu0 %v1911, 56
      %v2170 = vpop.permute.xlu0 %2169
      %2171 = vrot.lane.b32.xlu0 %v2044, 56
      %v2172 = vpop.permute.xlu0 %2171
      %v2175 = vunpack.c.l.b16 %v728
      %v2176 = vunpack.c.l.b16 %v729
      %v2177 = vpack.c.b16 %v2176, %v2175
      %2178 = vrot.lane.b32.xlu0 %v1186, 64
      %v2179 = vpop.permute.xlu0 %2178
      %2180 = vrot.lane.b32.xlu0 %v1187, 64
      %v2181 = vpop.permute.xlu0 %2180
      %2182 = vrot.lane.b32.xlu0 %v1188, 64
      %v2183 = vpop.permute.xlu0 %2182
      %2184 = vrot.lane.b32.xlu0 %v1189, 64
      %v2185 = vpop.permute.xlu0 %2184
      %2186 = vrot.lane.b32.xlu0 %v1190, 64
      %v2187 = vpop.permute.xlu0 %2186
      %2188 = vrot.lane.b32.xlu0 %v1191, 64
      %v2189 = vpop.permute.xlu0 %2188
      %2190 = vrot.lane.b32.xlu0 %v1192, 64
      %v2191 = vpop.permute.xlu0 %2190
      %2192 = vrot.lane.b32.xlu0 %v1193, 64
      %v2193 = vpop.permute.xlu0 %2192
      %2194 = vrot.lane.b32.xlu0 %v1194, 64
      %v2195 = vpop.permute.xlu0 %2194
      %2196 = vrot.lane.b32.xlu0 %v1195, 64
      %v2197 = vpop.permute.xlu0 %2196
      %2198 = vrot.lane.b32.xlu0 %v1196, 64
      %v2199 = vpop.permute.xlu0 %2198
      %2200 = vrot.lane.b32.xlu0 %v1197, 64
      %v2201 = vpop.permute.xlu0 %2200
      %2202 = vrot.lane.b32.xlu0 %v1198, 64
      %v2203 = vpop.permute.xlu0 %2202
      %2204 = vrot.lane.b32.xlu0 %v1199, 64
      %v2205 = vpop.permute.xlu0 %2204
      %2206 = vrot.lane.b32.xlu0 %v1200, 64
      %v2207 = vpop.permute.xlu0 %2206
      %2208 = vrot.lane.b32.xlu0 %v1201, 64
      %v2209 = vpop.permute.xlu0 %2208
      %2210 = vrot.lane.b32.xlu0 %v1202, 64
      %v2211 = vpop.permute.xlu0 %2210
      %2212 = vrot.lane.b32.xlu0 %v1203, 64
      %v2213 = vpop.permute.xlu0 %2212
      %2214 = vrot.lane.b32.xlu0 %v1204, 64
      %v2215 = vpop.permute.xlu0 %2214
      %2216 = vrot.lane.b32.xlu0 %v1205, 64
      %v2217 = vpop.permute.xlu0 %2216
      %2218 = vrot.lane.b32.xlu0 %v1206, 64
      %v2219 = vpop.permute.xlu0 %2218
      %2220 = vrot.lane.b32.xlu0 %v1207, 64
      %v2221 = vpop.permute.xlu0 %2220
      %2222 = vrot.lane.b32.xlu0 %v1208, 64
      %v2223 = vpop.permute.xlu0 %2222
      %2224 = vrot.lane.b32.xlu0 %v1209, 64
      %v2225 = vpop.permute.xlu0 %2224
      %2226 = vrot.lane.b32.xlu0 %v1210, 64
      %v2227 = vpop.permute.xlu0 %2226
      %2228 = vrot.lane.b32.xlu0 %v1211, 64
      %v2229 = vpop.permute.xlu0 %2228
      %2230 = vrot.lane.b32.xlu0 %v1212, 64
      %v2231 = vpop.permute.xlu0 %2230
      %2232 = vrot.lane.b32.xlu0 %v1213, 64
      %v2233 = vpop.permute.xlu0 %2232
      %2234 = vrot.lane.b32.xlu0 %v1214, 64
      %v2235 = vpop.permute.xlu0 %2234
      %2236 = vrot.lane.b32.xlu0 %v1215, 64
      %v2237 = vpop.permute.xlu0 %2236
      %2238 = vrot.lane.b32.xlu0 %v1216, 64
      %v2239 = vpop.permute.xlu0 %2238
      %2240 = vrot.lane.b32.xlu0 %v1217, 64
      %v2241 = vpop.permute.xlu0 %2240
      %2242 = vrot.lane.b32.xlu0 %v1218, 64
      %v2243 = vpop.permute.xlu0 %2242
      %2244 = vrot.lane.b32.xlu0 %v1219, 64
      %v2245 = vpop.permute.xlu0 %2244
      %2246 = vrot.lane.b32.xlu0 %v1220, 64
      %v2247 = vpop.permute.xlu0 %2246
      %2248 = vrot.lane.b32.xlu0 %v1221, 64
      %v2249 = vpop.permute.xlu0 %2248
      %2250 = vrot.lane.b32.xlu0 %v1222, 64
      %v2251 = vpop.permute.xlu0 %2250
      %2252 = vrot.lane.b32.xlu0 %v1223, 64
      %v2253 = vpop.permute.xlu0 %2252
      %2254 = vrot.lane.b32.xlu0 %v1224, 64
      %v2255 = vpop.permute.xlu0 %2254
      %2256 = vrot.lane.b32.xlu0 %v1225, 64
      %v2257 = vpop.permute.xlu0 %2256
      %2258 = vrot.lane.b32.xlu0 %v1226, 64
      %v2259 = vpop.permute.xlu0 %2258
      %2260 = vrot.lane.b32.xlu0 %v1227, 64
      %v2261 = vpop.permute.xlu0 %2260
      %2262 = vrot.lane.b32.xlu0 %v1228, 64
      %v2263 = vpop.permute.xlu0 %2262
      %2264 = vrot.lane.b32.xlu0 %v1229, 64
      %v2265 = vpop.permute.xlu0 %2264
      %2266 = vrot.lane.b32.xlu0 %v1230, 64
      %v2267 = vpop.permute.xlu0 %2266
      %2268 = vrot.lane.b32.xlu0 %v1231, 64
      %v2269 = vpop.permute.xlu0 %2268
      %2270 = vrot.lane.b32.xlu0 %v1232, 64
      %v2271 = vpop.permute.xlu0 %2270
      %2272 = vrot.lane.b32.xlu0 %v1233, 64
      %v2273 = vpop.permute.xlu0 %2272
      %2274 = vrot.lane.b32.xlu0 %v1234, 64
      %v2275 = vpop.permute.xlu0 %2274
      %2276 = vrot.lane.b32.xlu0 %v1235, 64
      %v2277 = vpop.permute.xlu0 %2276
      %2278 = vrot.lane.b32.xlu0 %v1236, 64
      %v2279 = vpop.permute.xlu0 %2278
      %2280 = vrot.lane.b32.xlu0 %v1237, 64
      %v2281 = vpop.permute.xlu0 %2280
      %2282 = vrot.lane.b32.xlu0 %v1238, 64
      %v2283 = vpop.permute.xlu0 %2282
      %2284 = vrot.lane.b32.xlu0 %v1239, 64
      %v2285 = vpop.permute.xlu0 %2284
      %2286 = vrot.lane.b32.xlu0 %v1240, 64
      %v2287 = vpop.permute.xlu0 %2286
      %2288 = vrot.lane.b32.xlu0 %v1241, 64
      %v2289 = vpop.permute.xlu0 %2288
      %2290 = vrot.lane.b32.xlu0 %v1246, 64
      %v2291 = vpop.permute.xlu0 %2290
      %2292 = vrot.lane.b32.xlu0 %v1379, 64
      %v2293 = vpop.permute.xlu0 %2292
      %2294 = vrot.lane.b32.xlu0 %v1512, 64
      %v2295 = vpop.permute.xlu0 %2294
      %2296 = vrot.lane.b32.xlu0 %v1645, 64
      %v2297 = vpop.permute.xlu0 %2296
      %2298 = vrot.lane.b32.xlu0 %v1778, 64
      %v2299 = vpop.permute.xlu0 %2298
      %2300 = vrot.lane.b32.xlu0 %v1911, 64
      %v2301 = vpop.permute.xlu0 %2300
      %2302 = vrot.lane.b32.xlu0 %v2044, 64
      %v2303 = vpop.permute.xlu0 %2302
      %2304 = vrot.lane.b32.xlu0 %v2177, 64
      %v2305 = vpop.permute.xlu0 %2304
      %2370 = vrot.lane.b32.xlu0 %v858, 72
      %v2371 = vpop.permute.xlu0 %2370
      %2372 = vrot.lane.b32.xlu0 %v859, 72
      %v2373 = vpop.permute.xlu0 %2372
      %2374 = vrot.lane.b32.xlu0 %v860, 72
      %v2375 = vpop.permute.xlu0 %2374
      %2376 = vrot.lane.b32.xlu0 %v861, 72
      %v2377 = vpop.permute.xlu0 %2376
      %2378 = vrot.lane.b32.xlu0 %v862, 72
      %v2379 = vpop.permute.xlu0 %2378
      %2380 = vrot.lane.b32.xlu0 %v863, 72
      %v2381 = vpop.permute.xlu0 %2380
      %2382 = vrot.lane.b32.xlu0 %v864, 72
      %v2383 = vpop.permute.xlu0 %2382
      %2384 = vrot.lane.b32.xlu0 %v865, 72
      %v2385 = vpop.permute.xlu0 %2384
      %2386 = vrot.lane.b32.xlu0 %v866, 72
      %v2387 = vpop.permute.xlu0 %2386
      %2388 = vrot.lane.b32.xlu0 %v867, 72
      %v2389 = vpop.permute.xlu0 %2388
      %2390 = vrot.lane.b32.xlu0 %v868, 72
      %v2391 = vpop.permute.xlu0 %2390
      %2392 = vrot.lane.b32.xlu0 %v869, 72
      %v2393 = vpop.permute.xlu0 %2392
      %2394 = vrot.lane.b32.xlu0 %v870, 72
      %v2395 = vpop.permute.xlu0 %2394
      %2396 = vrot.lane.b32.xlu0 %v871, 72
      %v2397 = vpop.permute.xlu0 %2396
      %2398 = vrot.lane.b32.xlu0 %v872, 72
      %v2399 = vpop.permute.xlu0 %2398
      %2400 = vrot.lane.b32.xlu0 %v873, 72
      %v2401 = vpop.permute.xlu0 %2400
      %2402 = vrot.lane.b32.xlu0 %v874, 72
      %v2403 = vpop.permute.xlu0 %2402
      %2404 = vrot.lane.b32.xlu0 %v875, 72
      %v2405 = vpop.permute.xlu0 %2404
      %2406 = vrot.lane.b32.xlu0 %v876, 72
      %v2407 = vpop.permute.xlu0 %2406
      %2408 = vrot.lane.b32.xlu0 %v877, 72
      %v2409 = vpop.permute.xlu0 %2408
      %2410 = vrot.lane.b32.xlu0 %v878, 72
      %v2411 = vpop.permute.xlu0 %2410
      %2412 = vrot.lane.b32.xlu0 %v879, 72
      %v2413 = vpop.permute.xlu0 %2412
      %2414 = vrot.lane.b32.xlu0 %v880, 72
      %v2415 = vpop.permute.xlu0 %2414
      %2416 = vrot.lane.b32.xlu0 %v881, 72
      %v2417 = vpop.permute.xlu0 %2416
      %2418 = vrot.lane.b32.xlu0 %v882, 72
      %v2419 = vpop.permute.xlu0 %2418
      %2420 = vrot.lane.b32.xlu0 %v883, 72
      %v2421 = vpop.permute.xlu0 %2420
      %2422 = vrot.lane.b32.xlu0 %v884, 72
      %v2423 = vpop.permute.xlu0 %2422
      %2424 = vrot.lane.b32.xlu0 %v885, 72
      %v2425 = vpop.permute.xlu0 %2424
      %2426 = vrot.lane.b32.xlu0 %v886, 72
      %v2427 = vpop.permute.xlu0 %2426
      %2428 = vrot.lane.b32.xlu0 %v887, 72
      %v2429 = vpop.permute.xlu0 %2428
      %2430 = vrot.lane.b32.xlu0 %v888, 72
      %v2431 = vpop.permute.xlu0 %2430
      %2432 = vrot.lane.b32.xlu0 %v889, 72
      %v2433 = vpop.permute.xlu0 %2432
      %2434 = vrot.lane.b32.xlu0 %v890, 72
      %v2435 = vpop.permute.xlu0 %2434
      %2436 = vrot.lane.b32.xlu0 %v891, 72
      %v2437 = vpop.permute.xlu0 %2436
      %2438 = vrot.lane.b32.xlu0 %v892, 72
      %v2439 = vpop.permute.xlu0 %2438
      %2440 = vrot.lane.b32.xlu0 %v893, 72
      %v2441 = vpop.permute.xlu0 %2440
      %2442 = vrot.lane.b32.xlu0 %v894, 72
      %v2443 = vpop.permute.xlu0 %2442
      %2444 = vrot.lane.b32.xlu0 %v895, 72
      %v2445 = vpop.permute.xlu0 %2444
      %2446 = vrot.lane.b32.xlu0 %v896, 72
      %v2447 = vpop.permute.xlu0 %2446
      %2448 = vrot.lane.b32.xlu0 %v897, 72
      %v2449 = vpop.permute.xlu0 %2448
      %2450 = vrot.lane.b32.xlu0 %v898, 72
      %v2451 = vpop.permute.xlu0 %2450
      %2452 = vrot.lane.b32.xlu0 %v899, 72
      %v2453 = vpop.permute.xlu0 %2452
      %2454 = vrot.lane.b32.xlu0 %v900, 72
      %v2455 = vpop.permute.xlu0 %2454
      %2456 = vrot.lane.b32.xlu0 %v901, 72
      %v2457 = vpop.permute.xlu0 %2456
      %2458 = vrot.lane.b32.xlu0 %v902, 72
      %v2459 = vpop.permute.xlu0 %2458
      %2460 = vrot.lane.b32.xlu0 %v903, 72
      %v2461 = vpop.permute.xlu0 %2460
      %2462 = vrot.lane.b32.xlu0 %v904, 72
      %v2463 = vpop.permute.xlu0 %2462
      %2464 = vrot.lane.b32.xlu0 %v905, 72
      %v2465 = vpop.permute.xlu0 %2464
      %2466 = vrot.lane.b32.xlu0 %v906, 72
      %v2467 = vpop.permute.xlu0 %2466
      %2468 = vrot.lane.b32.xlu0 %v907, 72
      %v2469 = vpop.permute.xlu0 %2468
      %2470 = vrot.lane.b32.xlu0 %v908, 72
      %v2471 = vpop.permute.xlu0 %2470
      %2472 = vrot.lane.b32.xlu0 %v909, 72
      %v2473 = vpop.permute.xlu0 %2472
      %2474 = vrot.lane.b32.xlu0 %v910, 72
      %v2475 = vpop.permute.xlu0 %2474
      %2476 = vrot.lane.b32.xlu0 %v911, 72
      %v2477 = vpop.permute.xlu0 %2476
      %2478 = vrot.lane.b32.xlu0 %v912, 72
      %v2479 = vpop.permute.xlu0 %2478
      %2480 = vrot.lane.b32.xlu0 %v913, 72
      %v2481 = vpop.permute.xlu0 %2480
      %2482 = vrot.lane.b32.xlu0 %v914, 72
      %v2483 = vpop.permute.xlu0 %2482
      %2484 = vrot.lane.b32.xlu0 %v915, 72
      %v2485 = vpop.permute.xlu0 %2484
      %2486 = vrot.lane.b32.xlu0 %v916, 72
      %v2487 = vpop.permute.xlu0 %2486
      %2488 = vrot.lane.b32.xlu0 %v917, 72
      %v2489 = vpop.permute.xlu0 %2488
      %2490 = vrot.lane.b32.xlu0 %v918, 72
      %v2491 = vpop.permute.xlu0 %2490
      %2492 = vrot.lane.b32.xlu0 %v919, 72
      %v2493 = vpop.permute.xlu0 %2492
      %2494 = vrot.lane.b32.xlu0 %v920, 72
      %v2495 = vpop.permute.xlu0 %2494
      %2496 = vrot.lane.b32.xlu0 %v921, 72
      %v2497 = vpop.permute.xlu0 %2496
      %vm2498 = vcmask 64512
      %v2501 = vsel %vm2498, %v1178, %v1248
      %v2504 = vsel %vm2498, %v1179, %v1250
      %v2507 = vsel %vm2498, %v1180, %v1252
      %v2510 = vsel %vm2498, %v1181, %v1254
      %v2513 = vsel %vm2498, %v1182, %v1256
      %v2516 = vsel %vm2498, %v1183, %v1258
      %v2519 = vsel %vm2498, %v1184, %v1260
      %v2522 = vsel %vm2498, %v1185, %v1262
      %v2525 = vsel %vm2498, %v1186, %v1264
      %v2528 = vsel %vm2498, %v1187, %v1266
      %v2531 = vsel %vm2498, %v1188, %v1268
      %v2534 = vsel %vm2498, %v1189, %v1270
      %v2537 = vsel %vm2498, %v1190, %v1272
      %v2540 = vsel %vm2498, %v1191, %v1274
      %v2543 = vsel %vm2498, %v1192, %v1276
      %v2546 = vsel %vm2498, %v1193, %v1278
      %v2549 = vsel %vm2498, %v1194, %v1280
      %v2552 = vsel %vm2498, %v1195, %v1282
      %v2555 = vsel %vm2498, %v1196, %v1284
      %v2558 = vsel %vm2498, %v1197, %v1286
      %v2561 = vsel %vm2498, %v1198, %v1288
      %v2564 = vsel %vm2498, %v1199, %v1290
      %v2567 = vsel %vm2498, %v1200, %v1292
      %v2570 = vsel %vm2498, %v1201, %v1294
      %v2573 = vsel %vm2498, %v1202, %v1296
      %v2576 = vsel %vm2498, %v1203, %v1298
      %v2579 = vsel %vm2498, %v1204, %v1300
      %v2582 = vsel %vm2498, %v1205, %v1302
      %v2585 = vsel %vm2498, %v1206, %v1304
      %v2588 = vsel %vm2498, %v1207, %v1306
      %v2591 = vsel %vm2498, %v1208, %v1308
      %v2594 = vsel %vm2498, %v1209, %v1310
      %v2597 = vsel %vm2498, %v1210, %v1312
      %v2600 = vsel %vm2498, %v1211, %v1314
      %v2603 = vsel %vm2498, %v1212, %v1316
      %v2606 = vsel %vm2498, %v1213, %v1318
      %v2609 = vsel %vm2498, %v1214, %v1320
      %v2612 = vsel %vm2498, %v1215, %v1322
      %v2615 = vsel %vm2498, %v1216, %v1324
      %v2618 = vsel %vm2498, %v1217, %v1326
      %v2621 = vsel %vm2498, %v1218, %v1328
      %v2624 = vsel %vm2498, %v1219, %v1330
      %v2627 = vsel %vm2498, %v1220, %v1332
      %v2630 = vsel %vm2498, %v1221, %v1334
      %v2633 = vsel %vm2498, %v1222, %v1336
      %v2636 = vsel %vm2498, %v1223, %v1338
      %v2639 = vsel %vm2498, %v1224, %v1340
      %v2642 = vsel %vm2498, %v1225, %v1342
      %v2645 = vsel %vm2498, %v1226, %v1344
      %v2648 = vsel %vm2498, %v1227, %v1346
      %v2651 = vsel %vm2498, %v1228, %v1348
      %v2654 = vsel %vm2498, %v1229, %v1350
      %v2657 = vsel %vm2498, %v1230, %v1352
      %v2660 = vsel %vm2498, %v1231, %v1354
      %v2663 = vsel %vm2498, %v1232, %v1356
      %v2666 = vsel %vm2498, %v1233, %v1358
      %v2669 = vsel %vm2498, %v1234, %v1360
      %v2672 = vsel %vm2498, %v1235, %v1362
      %v2675 = vsel %vm2498, %v1236, %v1364
      %v2678 = vsel %vm2498, %v1237, %v1366
      %v2681 = vsel %vm2498, %v1238, %v1368
      %v2684 = vsel %vm2498, %v1239, %v1370
      %v2687 = vsel %vm2498, %v1240, %v1372
      %v2690 = vsel %vm2498, %v1241, %v1374
      %vm2691 = vcmask 130048
      %v2693 = vsel %vm2691, %v2501, %v1381
      %v2695 = vsel %vm2691, %v2504, %v1383
      %v2697 = vsel %vm2691, %v2507, %v1385
      %v2699 = vsel %vm2691, %v2510, %v1387
      %v2701 = vsel %vm2691, %v2513, %v1389
      %v2703 = vsel %vm2691, %v2516, %v1391
      %v2705 = vsel %vm2691, %v2519, %v1393
      %v2707 = vsel %vm2691, %v2522, %v1395
      %v2709 = vsel %vm2691, %v2525, %v1397
      %v2711 = vsel %vm2691, %v2528, %v1399
      %v2713 = vsel %vm2691, %v2531, %v1401
      %v2715 = vsel %vm2691, %v2534, %v1403
      %v2717 = vsel %vm2691, %v2537, %v1405
      %v2719 = vsel %vm2691, %v2540, %v1407
      %v2721 = vsel %vm2691, %v2543, %v1409
      %v2723 = vsel %vm2691, %v2546, %v1411
      %v2725 = vsel %vm2691, %v2549, %v1413
      %v2727 = vsel %vm2691, %v2552, %v1415
      %v2729 = vsel %vm2691, %v2555, %v1417
      %v2731 = vsel %vm2691, %v2558, %v1419
      %v2733 = vsel %vm2691, %v2561, %v1421
      %v2735 = vsel %vm2691, %v2564, %v1423
      %v2737 = vsel %vm2691, %v2567, %v1425
      %v2739 = vsel %vm2691, %v2570, %v1427
      %v2741 = vsel %vm2691, %v2573, %v1429
      %v2743 = vsel %vm2691, %v2576, %v1431
      %v2745 = vsel %vm2691, %v2579, %v1433
      %v2747 = vsel %vm2691, %v2582, %v1435
      %v2749 = vsel %vm2691, %v2585, %v1437
      %v2751 = vsel %vm2691, %v2588, %v1439
      %v2753 = vsel %vm2691, %v2591, %v1441
      %v2755 = vsel %vm2691, %v2594, %v1443
      %v2757 = vsel %vm2691, %v2597, %v1445
      %v2759 = vsel %vm2691, %v2600, %v1447
      %v2761 = vsel %vm2691, %v2603, %v1449
      %v2763 = vsel %vm2691, %v2606, %v1451
      %v2765 = vsel %vm2691, %v2609, %v1453
      %v2767 = vsel %vm2691, %v2612, %v1455
      %v2769 = vsel %vm2691, %v2615, %v1457
      %v2771 = vsel %vm2691, %v2618, %v1459
      %v2773 = vsel %vm2691, %v2621, %v1461
      %v2775 = vsel %vm2691, %v2624, %v1463
      %v2777 = vsel %vm2691, %v2627, %v1465
      %v2779 = vsel %vm2691, %v2630, %v1467
      %v2781 = vsel %vm2691, %v2633, %v1469
      %v2783 = vsel %vm2691, %v2636, %v1471
      %v2785 = vsel %vm2691, %v2639, %v1473
      %v2787 = vsel %vm2691, %v2642, %v1475
      %v2789 = vsel %vm2691, %v2645, %v1477
      %v2791 = vsel %vm2691, %v2648, %v1479
      %v2793 = vsel %vm2691, %v2651, %v1481
      %v2795 = vsel %vm2691, %v2654, %v1483
      %v2797 = vsel %vm2691, %v2657, %v1485
      %v2799 = vsel %vm2691, %v2660, %v1487
      %v2801 = vsel %vm2691, %v2663, %v1489
      %v2803 = vsel %vm2691, %v2666, %v1491
      %v2805 = vsel %vm2691, %v2669, %v1493
      %v2807 = vsel %vm2691, %v2672, %v1495
      %v2809 = vsel %vm2691, %v2675, %v1497
      %v2811 = vsel %vm2691, %v2678, %v1499
      %v2813 = vsel %vm2691, %v2681, %v1501
      %v2815 = vsel %vm2691, %v2684, %v1503
      %v2817 = vsel %vm2691, %v2687, %v1505
      %v2819 = vsel %vm2691, %v2690, %v1507
      %vm2820 = vcmask 195584
      %v2822 = vsel %vm2820, %v2693, %v1514
      %v2824 = vsel %vm2820, %v2695, %v1516
      %v2826 = vsel %vm2820, %v2697, %v1518
      %v2828 = vsel %vm2820, %v2699, %v1520
      %v2830 = vsel %vm2820, %v2701, %v1522
      %v2832 = vsel %vm2820, %v2703, %v1524
      %v2834 = vsel %vm2820, %v2705, %v1526
      %v2836 = vsel %vm2820, %v2707, %v1528
      %v2838 = vsel %vm2820, %v2709, %v1530
      %v2840 = vsel %vm2820, %v2711, %v1532
      %v2842 = vsel %vm2820, %v2713, %v1534
      %v2844 = vsel %vm2820, %v2715, %v1536
      %v2846 = vsel %vm2820, %v2717, %v1538
      %v2848 = vsel %vm2820, %v2719, %v1540
      %v2850 = vsel %vm2820, %v2721, %v1542
      %v2852 = vsel %vm2820, %v2723, %v1544
      %v2854 = vsel %vm2820, %v2725, %v1546
      %v2856 = vsel %vm2820, %v2727, %v1548
      %v2858 = vsel %vm2820, %v2729, %v1550
      %v2860 = vsel %vm2820, %v2731, %v1552
      %v2862 = vsel %vm2820, %v2733, %v1554
      %v2864 = vsel %vm2820, %v2735, %v1556
      %v2866 = vsel %vm2820, %v2737, %v1558
      %v2868 = vsel %vm2820, %v2739, %v1560
      %v2870 = vsel %vm2820, %v2741, %v1562
      %v2872 = vsel %vm2820, %v2743, %v1564
      %v2874 = vsel %vm2820, %v2745, %v1566
      %v2876 = vsel %vm2820, %v2747, %v1568
      %v2878 = vsel %vm2820, %v2749, %v1570
      %v2880 = vsel %vm2820, %v2751, %v1572
      %v2882 = vsel %vm2820, %v2753, %v1574
      %v2884 = vsel %vm2820, %v2755, %v1576
      %v2886 = vsel %vm2820, %v2757, %v1578
      %v2888 = vsel %vm2820, %v2759, %v1580
      %v2890 = vsel %vm2820, %v2761, %v1582
      %v2892 = vsel %vm2820, %v2763, %v1584
      %v2894 = vsel %vm2820, %v2765, %v1586
      %v2896 = vsel %vm2820, %v2767, %v1588
      %v2898 = vsel %vm2820, %v2769, %v1590
      %v2900 = vsel %vm2820, %v2771, %v1592
      %v2902 = vsel %vm2820, %v2773, %v1594
      %v2904 = vsel %vm2820, %v2775, %v1596
      %v2906 = vsel %vm2820, %v2777, %v1598
      %v2908 = vsel %vm2820, %v2779, %v1600
      %v2910 = vsel %vm2820, %v2781, %v1602
      %v2912 = vsel %vm2820, %v2783, %v1604
      %v2914 = vsel %vm2820, %v2785, %v1606
      %v2916 = vsel %vm2820, %v2787, %v1608
      %v2918 = vsel %vm2820, %v2789, %v1610
      %v2920 = vsel %vm2820, %v2791, %v1612
      %v2922 = vsel %vm2820, %v2793, %v1614
      %v2924 = vsel %vm2820, %v2795, %v1616
      %v2926 = vsel %vm2820, %v2797, %v1618
      %v2928 = vsel %vm2820, %v2799, %v1620
      %v2930 = vsel %vm2820, %v2801, %v1622
      %v2932 = vsel %vm2820, %v2803, %v1624
      %v2934 = vsel %vm2820, %v2805, %v1626
      %v2936 = vsel %vm2820, %v2807, %v1628
      %v2938 = vsel %vm2820, %v2809, %v1630
      %v2940 = vsel %vm2820, %v2811, %v1632
      %v2942 = vsel %vm2820, %v2813, %v1634
      %v2944 = vsel %vm2820, %v2815, %v1636
      %v2946 = vsel %vm2820, %v2817, %v1638
      %v2948 = vsel %vm2820, %v2819, %v1640
      %vm2949 = vcmask 261120
      %v2951 = vsel %vm2949, %v2822, %v1647
      %v2953 = vsel %vm2949, %v2824, %v1649
      %v2955 = vsel %vm2949, %v2826, %v1651
      %v2957 = vsel %vm2949, %v2828, %v1653
      %v2959 = vsel %vm2949, %v2830, %v1655
      %v2961 = vsel %vm2949, %v2832, %v1657
      %v2963 = vsel %vm2949, %v2834, %v1659
      %v2965 = vsel %vm2949, %v2836, %v1661
      %v2967 = vsel %vm2949, %v2838, %v1663
      %v2969 = vsel %vm2949, %v2840, %v1665
      %v2971 = vsel %vm2949, %v2842, %v1667
      %v2973 = vsel %vm2949, %v2844, %v1669
      %v2975 = vsel %vm2949, %v2846, %v1671
      %v2977 = vsel %vm2949, %v2848, %v1673
      %v2979 = vsel %vm2949, %v2850, %v1675
      %v2981 = vsel %vm2949, %v2852, %v1677
      %v2983 = vsel %vm2949, %v2854, %v1679
      %v2985 = vsel %vm2949, %v2856, %v1681
      %v2987 = vsel %vm2949, %v2858, %v1683
      %v2989 = vsel %vm2949, %v2860, %v1685
      %v2991 = vsel %vm2949, %v2862, %v1687
      %v2993 = vsel %vm2949, %v2864, %v1689
      %v2995 = vsel %vm2949, %v2866, %v1691
      %v2997 = vsel %vm2949, %v2868, %v1693
      %v2999 = vsel %vm2949, %v2870, %v1695
      %v3001 = vsel %vm2949, %v2872, %v1697
      %v3003 = vsel %vm2949, %v2874, %v1699
      %v3005 = vsel %vm2949, %v2876, %v1701
      %v3007 = vsel %vm2949, %v2878, %v1703
      %v3009 = vsel %vm2949, %v2880, %v1705
      %v3011 = vsel %vm2949, %v2882, %v1707
      %v3013 = vsel %vm2949, %v2884, %v1709
      %v3015 = vsel %vm2949, %v2886, %v1711
      %v3017 = vsel %vm2949, %v2888, %v1713
      %v3019 = vsel %vm2949, %v2890, %v1715
      %v3021 = vsel %vm2949, %v2892, %v1717
      %v3023 = vsel %vm2949, %v2894, %v1719
      %v3025 = vsel %vm2949, %v2896, %v1721
      %v3027 = vsel %vm2949, %v2898, %v1723
      %v3029 = vsel %vm2949, %v2900, %v1725
      %v3031 = vsel %vm2949, %v2902, %v1727
      %v3033 = vsel %vm2949, %v2904, %v1729
      %v3035 = vsel %vm2949, %v2906, %v1731
      %v3037 = vsel %vm2949, %v2908, %v1733
      %v3039 = vsel %vm2949, %v2910, %v1735
      %v3041 = vsel %vm2949, %v2912, %v1737
      %v3043 = vsel %vm2949, %v2914, %v1739
      %v3045 = vsel %vm2949, %v2916, %v1741
      %v3047 = vsel %vm2949, %v2918, %v1743
      %v3049 = vsel %vm2949, %v2920, %v1745
      %v3051 = vsel %vm2949, %v2922, %v1747
      %v3053 = vsel %vm2949, %v2924, %v1749
      %v3055 = vsel %vm2949, %v2926, %v1751
      %v3057 = vsel %vm2949, %v2928, %v1753
      %v3059 = vsel %vm2949, %v2930, %v1755
      %v3061 = vsel %vm2949, %v2932, %v1757
      %v3063 = vsel %vm2949, %v2934, %v1759
      %v3065 = vsel %vm2949, %v2936, %v1761
      %v3067 = vsel %vm2949, %v2938, %v1763
      %v3069 = vsel %vm2949, %v2940, %v1765
      %v3071 = vsel %vm2949, %v2942, %v1767
      %v3073 = vsel %vm2949, %v2944, %v1769
      %v3075 = vsel %vm2949, %v2946, %v1771
      %v3077 = vsel %vm2949, %v2948, %v1773
      %vm3078 = vcmask 326656
      %v3080 = vsel %vm3078, %v2951, %v1780
      %v3082 = vsel %vm3078, %v2953, %v1782
      %v3084 = vsel %vm3078, %v2955, %v1784
      %v3086 = vsel %vm3078, %v2957, %v1786
      %v3088 = vsel %vm3078, %v2959, %v1788
      %v3090 = vsel %vm3078, %v2961, %v1790
      %v3092 = vsel %vm3078, %v2963, %v1792
      %v3094 = vsel %vm3078, %v2965, %v1794
      %v3096 = vsel %vm3078, %v2967, %v1796
      %v3098 = vsel %vm3078, %v2969, %v1798
      %v3100 = vsel %vm3078, %v2971, %v1800
      %v3102 = vsel %vm3078, %v2973, %v1802
      %v3104 = vsel %vm3078, %v2975, %v1804
      %v3106 = vsel %vm3078, %v2977, %v1806
      %v3108 = vsel %vm3078, %v2979, %v1808
      %v3110 = vsel %vm3078, %v2981, %v1810
      %v3112 = vsel %vm3078, %v2983, %v1812
      %v3114 = vsel %vm3078, %v2985, %v1814
      %v3116 = vsel %vm3078, %v2987, %v1816
      %v3118 = vsel %vm3078, %v2989, %v1818
      %v3120 = vsel %vm3078, %v2991, %v1820
      %v3122 = vsel %vm3078, %v2993, %v1822
      %v3124 = vsel %vm3078, %v2995, %v1824
      %v3126 = vsel %vm3078, %v2997, %v1826
      %v3128 = vsel %vm3078, %v2999, %v1828
      %v3130 = vsel %vm3078, %v3001, %v1830
      %v3132 = vsel %vm3078, %v3003, %v1832
      %v3134 = vsel %vm3078, %v3005, %v1834
      %v3136 = vsel %vm3078, %v3007, %v1836
      %v3138 = vsel %vm3078, %v3009, %v1838
      %v3140 = vsel %vm3078, %v3011, %v1840
      %v3142 = vsel %vm3078, %v3013, %v1842
      %v3144 = vsel %vm3078, %v3015, %v1844
      %v3146 = vsel %vm3078, %v3017, %v1846
      %v3148 = vsel %vm3078, %v3019, %v1848
      %v3150 = vsel %vm3078, %v3021, %v1850
      %v3152 = vsel %vm3078, %v3023, %v1852
      %v3154 = vsel %vm3078, %v3025, %v1854
      %v3156 = vsel %vm3078, %v3027, %v1856
      %v3158 = vsel %vm3078, %v3029, %v1858
      %v3160 = vsel %vm3078, %v3031, %v1860
      %v3162 = vsel %vm3078, %v3033, %v1862
      %v3164 = vsel %vm3078, %v3035, %v1864
      %v3166 = vsel %vm3078, %v3037, %v1866
      %v3168 = vsel %vm3078, %v3039, %v1868
      %v3170 = vsel %vm3078, %v3041, %v1870
      %v3172 = vsel %vm3078, %v3043, %v1872
      %v3174 = vsel %vm3078, %v3045, %v1874
      %v3176 = vsel %vm3078, %v3047, %v1876
      %v3178 = vsel %vm3078, %v3049, %v1878
      %v3180 = vsel %vm3078, %v3051, %v1880
      %v3182 = vsel %vm3078, %v3053, %v1882
      %v3184 = vsel %vm3078, %v3055, %v1884
      %v3186 = vsel %vm3078, %v3057, %v1886
      %v3188 = vsel %vm3078, %v3059, %v1888
      %v3190 = vsel %vm3078, %v3061, %v1890
      %v3192 = vsel %vm3078, %v3063, %v1892
      %v3194 = vsel %vm3078, %v3065, %v1894
      %v3196 = vsel %vm3078, %v3067, %v1896
      %v3198 = vsel %vm3078, %v3069, %v1898
      %v3200 = vsel %vm3078, %v3071, %v1900
      %v3202 = vsel %vm3078, %v3073, %v1902
      %v3204 = vsel %vm3078, %v3075, %v1904
      %v3206 = vsel %vm3078, %v3077, %v1906
      %vm3207 = vcmask 392192
      %v3209 = vsel %vm3207, %v3080, %v1913
      %v3211 = vsel %vm3207, %v3082, %v1915
      %v3213 = vsel %vm3207, %v3084, %v1917
      %v3215 = vsel %vm3207, %v3086, %v1919
      %v3217 = vsel %vm3207, %v3088, %v1921
      %v3219 = vsel %vm3207, %v3090, %v1923
      %v3221 = vsel %vm3207, %v3092, %v1925
      %v3223 = vsel %vm3207, %v3094, %v1927
      %v3225 = vsel %vm3207, %v3096, %v1929
      %v3227 = vsel %vm3207, %v3098, %v1931
      %v3229 = vsel %vm3207, %v3100, %v1933
      %v3231 = vsel %vm3207, %v3102, %v1935
      %v3233 = vsel %vm3207, %v3104, %v1937
      %v3235 = vsel %vm3207, %v3106, %v1939
      %v3237 = vsel %vm3207, %v3108, %v1941
      %v3239 = vsel %vm3207, %v3110, %v1943
      %v3241 = vsel %vm3207, %v3112, %v1945
      %v3243 = vsel %vm3207, %v3114, %v1947
      %v3245 = vsel %vm3207, %v3116, %v1949
      %v3247 = vsel %vm3207, %v3118, %v1951
      %v3249 = vsel %vm3207, %v3120, %v1953
      %v3251 = vsel %vm3207, %v3122, %v1955
      %v3253 = vsel %vm3207, %v3124, %v1957
      %v3255 = vsel %vm3207, %v3126, %v1959
      %v3257 = vsel %vm3207, %v3128, %v1961
      %v3259 = vsel %vm3207, %v3130, %v1963
      %v3261 = vsel %vm3207, %v3132, %v1965
      %v3263 = vsel %vm3207, %v3134, %v1967
      %v3265 = vsel %vm3207, %v3136, %v1969
      %v3267 = vsel %vm3207, %v3138, %v1971
      %v3269 = vsel %vm3207, %v3140, %v1973
      %v3271 = vsel %vm3207, %v3142, %v1975
      %v3273 = vsel %vm3207, %v3144, %v1977
      %v3275 = vsel %vm3207, %v3146, %v1979
      %v3277 = vsel %vm3207, %v3148, %v1981
      %v3279 = vsel %vm3207, %v3150, %v1983
      %v3281 = vsel %vm3207, %v3152, %v1985
      %v3283 = vsel %vm3207, %v3154, %v1987
      %v3285 = vsel %vm3207, %v3156, %v1989
      %v3287 = vsel %vm3207, %v3158, %v1991
      %v3289 = vsel %vm3207, %v3160, %v1993
      %v3291 = vsel %vm3207, %v3162, %v1995
      %v3293 = vsel %vm3207, %v3164, %v1997
      %v3295 = vsel %vm3207, %v3166, %v1999
      %v3297 = vsel %vm3207, %v3168, %v2001
      %v3299 = vsel %vm3207, %v3170, %v2003
      %v3301 = vsel %vm3207, %v3172, %v2005
      %v3303 = vsel %vm3207, %v3174, %v2007
      %v3305 = vsel %vm3207, %v3176, %v2009
      %v3307 = vsel %vm3207, %v3178, %v2011
      %v3309 = vsel %vm3207, %v3180, %v2013
      %v3311 = vsel %vm3207, %v3182, %v2015
      %v3313 = vsel %vm3207, %v3184, %v2017
      %v3315 = vsel %vm3207, %v3186, %v2019
      %v3317 = vsel %vm3207, %v3188, %v2021
      %v3319 = vsel %vm3207, %v3190, %v2023
      %v3321 = vsel %vm3207, %v3192, %v2025
      %v3323 = vsel %vm3207, %v3194, %v2027
      %v3325 = vsel %vm3207, %v3196, %v2029
      %v3327 = vsel %vm3207, %v3198, %v2031
      %v3329 = vsel %vm3207, %v3200, %v2033
      %v3331 = vsel %vm3207, %v3202, %v2035
      %v3333 = vsel %vm3207, %v3204, %v2037
      %v3335 = vsel %vm3207, %v3206, %v2039
      %vm3336 = vcmask 457728
      %v3338 = vsel %vm3336, %v3209, %v2046
      %v3340 = vsel %vm3336, %v3211, %v2048
      %v3342 = vsel %vm3336, %v3213, %v2050
      %v3344 = vsel %vm3336, %v3215, %v2052
      %v3346 = vsel %vm3336, %v3217, %v2054
      %v3348 = vsel %vm3336, %v3219, %v2056
      %v3350 = vsel %vm3336, %v3221, %v2058
      %v3352 = vsel %vm3336, %v3223, %v2060
      %v3354 = vsel %vm3336, %v3225, %v2062
      %v3356 = vsel %vm3336, %v3227, %v2064
      %v3358 = vsel %vm3336, %v3229, %v2066
      %v3360 = vsel %vm3336, %v3231, %v2068
      %v3362 = vsel %vm3336, %v3233, %v2070
      %v3364 = vsel %vm3336, %v3235, %v2072
      %v3366 = vsel %vm3336, %v3237, %v2074
      %v3368 = vsel %vm3336, %v3239, %v2076
      %v3370 = vsel %vm3336, %v3241, %v2078
      %v3372 = vsel %vm3336, %v3243, %v2080
      %v3374 = vsel %vm3336, %v3245, %v2082
      %v3376 = vsel %vm3336, %v3247, %v2084
      %v3378 = vsel %vm3336, %v3249, %v2086
      %v3380 = vsel %vm3336, %v3251, %v2088
      %v3382 = vsel %vm3336, %v3253, %v2090
      %v3384 = vsel %vm3336, %v3255, %v2092
      %v3386 = vsel %vm3336, %v3257, %v2094
      %v3388 = vsel %vm3336, %v3259, %v2096
      %v3390 = vsel %vm3336, %v3261, %v2098
      %v3392 = vsel %vm3336, %v3263, %v2100
      %v3394 = vsel %vm3336, %v3265, %v2102
      %v3396 = vsel %vm3336, %v3267, %v2104
      %v3398 = vsel %vm3336, %v3269, %v2106
      %v3400 = vsel %vm3336, %v3271, %v2108
      %v3402 = vsel %vm3336, %v3273, %v2110
      %v3404 = vsel %vm3336, %v3275, %v2112
      %v3406 = vsel %vm3336, %v3277, %v2114
      %v3408 = vsel %vm3336, %v3279, %v2116
      %v3410 = vsel %vm3336, %v3281, %v2118
      %v3412 = vsel %vm3336, %v3283, %v2120
      %v3414 = vsel %vm3336, %v3285, %v2122
      %v3416 = vsel %vm3336, %v3287, %v2124
      %v3418 = vsel %vm3336, %v3289, %v2126
      %v3420 = vsel %vm3336, %v3291, %v2128
      %v3422 = vsel %vm3336, %v3293, %v2130
      %v3424 = vsel %vm3336, %v3295, %v2132
      %v3426 = vsel %vm3336, %v3297, %v2134
      %v3428 = vsel %vm3336, %v3299, %v2136
      %v3430 = vsel %vm3336, %v3301, %v2138
      %v3432 = vsel %vm3336, %v3303, %v2140
      %v3434 = vsel %vm3336, %v3305, %v2142
      %v3436 = vsel %vm3336, %v3307, %v2144
      %v3438 = vsel %vm3336, %v3309, %v2146
      %v3440 = vsel %vm3336, %v3311, %v2148
      %v3442 = vsel %vm3336, %v3313, %v2150
      %v3444 = vsel %vm3336, %v3315, %v2152
      %v3446 = vsel %vm3336, %v3317, %v2154
      %v3448 = vsel %vm3336, %v3319, %v2156
      %v3450 = vsel %vm3336, %v3321, %v2158
      %v3452 = vsel %vm3336, %v3323, %v2160
      %v3454 = vsel %vm3336, %v3325, %v2162
      %v3456 = vsel %vm3336, %v3327, %v2164
      %v3458 = vsel %vm3336, %v3329, %v2166
      %v3460 = vsel %vm3336, %v3331, %v2168
      %v3462 = vsel %vm3336, %v3333, %v2170
      %v3464 = vsel %vm3336, %v3335, %v2172
      %vm3465 = vcmask 523264
      %v3467 = vsel %vm3465, %v3338, %v2179
      %v3469 = vsel %vm3465, %v3340, %v2181
      %v3471 = vsel %vm3465, %v3342, %v2183
      %v3473 = vsel %vm3465, %v3344, %v2185
      %v3475 = vsel %vm3465, %v3346, %v2187
      %v3477 = vsel %vm3465, %v3348, %v2189
      %v3479 = vsel %vm3465, %v3350, %v2191
      %v3481 = vsel %vm3465, %v3352, %v2193
      %v3483 = vsel %vm3465, %v3354, %v2195
      %v3485 = vsel %vm3465, %v3356, %v2197
      %v3487 = vsel %vm3465, %v3358, %v2199
      %v3489 = vsel %vm3465, %v3360, %v2201
      %v3491 = vsel %vm3465, %v3362, %v2203
      %v3493 = vsel %vm3465, %v3364, %v2205
      %v3495 = vsel %vm3465, %v3366, %v2207
      %v3497 = vsel %vm3465, %v3368, %v2209
      %v3499 = vsel %vm3465, %v3370, %v2211
      %v3501 = vsel %vm3465, %v3372, %v2213
      %v3503 = vsel %vm3465, %v3374, %v2215
      %v3505 = vsel %vm3465, %v3376, %v2217
      %v3507 = vsel %vm3465, %v3378, %v2219
      %v3509 = vsel %vm3465, %v3380, %v2221
      %v3511 = vsel %vm3465, %v3382, %v2223
      %v3513 = vsel %vm3465, %v3384, %v2225
      %v3515 = vsel %vm3465, %v3386, %v2227
      %v3517 = vsel %vm3465, %v3388, %v2229
      %v3519 = vsel %vm3465, %v3390, %v2231
      %v3521 = vsel %vm3465, %v3392, %v2233
      %v3523 = vsel %vm3465, %v3394, %v2235
      %v3525 = vsel %vm3465, %v3396, %v2237
      %v3527 = vsel %vm3465, %v3398, %v2239
      %v3529 = vsel %vm3465, %v3400, %v2241
      %v3531 = vsel %vm3465, %v3402, %v2243
      %v3533 = vsel %vm3465, %v3404, %v2245
      %v3535 = vsel %vm3465, %v3406, %v2247
      %v3537 = vsel %vm3465, %v3408, %v2249
      %v3539 = vsel %vm3465, %v3410, %v2251
      %v3541 = vsel %vm3465, %v3412, %v2253
      %v3543 = vsel %vm3465, %v3414, %v2255
      %v3545 = vsel %vm3465, %v3416, %v2257
      %v3547 = vsel %vm3465, %v3418, %v2259
      %v3549 = vsel %vm3465, %v3420, %v2261
      %v3551 = vsel %vm3465, %v3422, %v2263
      %v3553 = vsel %vm3465, %v3424, %v2265
      %v3555 = vsel %vm3465, %v3426, %v2267
      %v3557 = vsel %vm3465, %v3428, %v2269
      %v3559 = vsel %vm3465, %v3430, %v2271
      %v3561 = vsel %vm3465, %v3432, %v2273
      %v3563 = vsel %vm3465, %v3434, %v2275
      %v3565 = vsel %vm3465, %v3436, %v2277
      %v3567 = vsel %vm3465, %v3438, %v2279
      %v3569 = vsel %vm3465, %v3440, %v2281
      %v3571 = vsel %vm3465, %v3442, %v2283
      %v3573 = vsel %vm3465, %v3444, %v2285
      %v3575 = vsel %vm3465, %v3446, %v2287
      %v3577 = vsel %vm3465, %v3448, %v2289
      %v3579 = vsel %vm3465, %v3450, %v2291
      %v3581 = vsel %vm3465, %v3452, %v2293
      %v3583 = vsel %vm3465, %v3454, %v2295
      %v3585 = vsel %vm3465, %v3456, %v2297
      %v3587 = vsel %vm3465, %v3458, %v2299
      %v3589 = vsel %vm3465, %v3460, %v2301
      %v3591 = vsel %vm3465, %v3462, %v2303
      %v3593 = vsel %vm3465, %v3464, %v2305
      %vm3594 = vcmask 588800
      %v3596 = vsel %vm3594, %v3467, %v2371
      %v3598 = vsel %vm3594, %v3469, %v2373
      %v3600 = vsel %vm3594, %v3471, %v2375
      %v3602 = vsel %vm3594, %v3473, %v2377
      %v3604 = vsel %vm3594, %v3475, %v2379
      %v3606 = vsel %vm3594, %v3477, %v2381
      %v3608 = vsel %vm3594, %v3479, %v2383
      %v3610 = vsel %vm3594, %v3481, %v2385
      %v3612 = vsel %vm3594, %v3483, %v2387
      %v3614 = vsel %vm3594, %v3485, %v2389
      %v3616 = vsel %vm3594, %v3487, %v2391
      %v3618 = vsel %vm3594, %v3489, %v2393
      %v3620 = vsel %vm3594, %v3491, %v2395
      %v3622 = vsel %vm3594, %v3493, %v2397
      %v3624 = vsel %vm3594, %v3495, %v2399
      %v3626 = vsel %vm3594, %v3497, %v2401
      %v3628 = vsel %vm3594, %v3499, %v2403
      %v3630 = vsel %vm3594, %v3501, %v2405
      %v3632 = vsel %vm3594, %v3503, %v2407
      %v3634 = vsel %vm3594, %v3505, %v2409
      %v3636 = vsel %vm3594, %v3507, %v2411
      %v3638 = vsel %vm3594, %v3509, %v2413
      %v3640 = vsel %vm3594, %v3511, %v2415
      %v3642 = vsel %vm3594, %v3513, %v2417
      %v3644 = vsel %vm3594, %v3515, %v2419
      %v3646 = vsel %vm3594, %v3517, %v2421
      %v3648 = vsel %vm3594, %v3519, %v2423
      %v3650 = vsel %vm3594, %v3521, %v2425
      %v3652 = vsel %vm3594, %v3523, %v2427
      %v3654 = vsel %vm3594, %v3525, %v2429
      %v3656 = vsel %vm3594, %v3527, %v2431
      %v3658 = vsel %vm3594, %v3529, %v2433
      %v3660 = vsel %vm3594, %v3531, %v2435
      %v3662 = vsel %vm3594, %v3533, %v2437
      %v3664 = vsel %vm3594, %v3535, %v2439
      %v3666 = vsel %vm3594, %v3537, %v2441
      %v3668 = vsel %vm3594, %v3539, %v2443
      %v3670 = vsel %vm3594, %v3541, %v2445
      %v3672 = vsel %vm3594, %v3543, %v2447
      %v3674 = vsel %vm3594, %v3545, %v2449
      %v3676 = vsel %vm3594, %v3547, %v2451
      %v3678 = vsel %vm3594, %v3549, %v2453
      %v3680 = vsel %vm3594, %v3551, %v2455
      %v3682 = vsel %vm3594, %v3553, %v2457
      %v3684 = vsel %vm3594, %v3555, %v2459
      %v3686 = vsel %vm3594, %v3557, %v2461
      %v3688 = vsel %vm3594, %v3559, %v2463
      %v3690 = vsel %vm3594, %v3561, %v2465
      %v3692 = vsel %vm3594, %v3563, %v2467
      %v3694 = vsel %vm3594, %v3565, %v2469
      %v3696 = vsel %vm3594, %v3567, %v2471
      %v3698 = vsel %vm3594, %v3569, %v2473
      %v3700 = vsel %vm3594, %v3571, %v2475
      %v3702 = vsel %vm3594, %v3573, %v2477
      %v3704 = vsel %vm3594, %v3575, %v2479
      %v3706 = vsel %vm3594, %v3577, %v2481
      %v3708 = vsel %vm3594, %v3579, %v2483
      %v3710 = vsel %vm3594, %v3581, %v2485
      %v3712 = vsel %vm3594, %v3583, %v2487
      %v3714 = vsel %vm3594, %v3585, %v2489
      %v3716 = vsel %vm3594, %v3587, %v2491
      %v3718 = vsel %vm3594, %v3589, %v2493
      %v3720 = vsel %vm3594, %v3591, %v2495
      %v3722 = vsel %vm3594, %v3593, %v2497
      %v3723 = vld [vmem:[%s2] sm:$0xf]
      %v3724 = vld [vmem:[%s2 + $0x4] sm:$0xf]
      %v3725 = vld [vmem:[%s2 + $0x8] sm:$0xf]
      %v3726 = vld [vmem:[%s2 + $0xc] sm:$0xf]
      %v3727 = vld [vmem:[%s2 + $0x10] sm:$0xf]
      %v3728 = vld [vmem:[%s2 + $0x14] sm:$0xf]
      %v3729 = vld [vmem:[%s2 + $0x18] sm:$0xf]
      %v3730 = vld [vmem:[%s2 + $0x1c] sm:$0xf]
      %v3731 = vld [vmem:[%s2 + $0x20] sm:$0xf]
      %v3732 = vld [vmem:[%s2 + $0x24] sm:$0x3]
      %v3733 = vld [vmem:[%s3] sm:$0x1]
      %v3735 = vlaneseq
      %v3736 = vshrl.u32 %v3735, 7
      %v3737 = vsub.s32 0, %v3736
      %v3738 = vrot.slane %v3733, %v3737
      %v3750 = vunpack.c.l.b16 %v3723
      %v3751 = vunpack.c.l.b16 %v3724
      %v3752 = vunpack.c.l.b16 %v3725
      %v3753 = vunpack.c.l.b16 %v3726
      %v3754 = vunpack.c.l.b16 %v3727
      %v3755 = vunpack.c.l.b16 %v3728
      %v3756 = vunpack.c.l.b16 %v3729
      %v3757 = vunpack.c.l.b16 %v3730
      %v3758 = vunpack.c.l.b16 %v3731
      %v3759 = vunpack.c.l.b16 %v3732
      %v3760 = vpack.c.b16 %v3751, %v3750
      %v3761 = vpack.c.b16 %v3753, %v3752
      %v3762 = vpack.c.b16 %v3755, %v3754
      %v3763 = vpack.c.b16 %v3757, %v3756
      %v3764 = vpack.c.b16 %v3759, %v3758
      %vm3769 = vcmask 621568
      %v3770 = vsel %vm3769, %v3596, 0
      %v3772 = vsel %vm3769, %v3598, 0
      %v3774 = vsel %vm3769, %v3600, 0
      %v3776 = vsel %vm3769, %v3602, 0
      %v3778 = vsel %vm3769, %v3604, 0
      %v3780 = vsel %vm3769, %v3606, 0
      %v3782 = vsel %vm3769, %v3608, 0
      %v3784 = vsel %vm3769, %v3610, 0
      %v3786 = vsel %vm3769, %v3612, 0
      %v3788 = vsel %vm3769, %v3614, 0
      %v3790 = vsel %vm3769, %v3616, 0
      %v3792 = vsel %vm3769, %v3618, 0
      %v3794 = vsel %vm3769, %v3620, 0
      %v3796 = vsel %vm3769, %v3622, 0
      %v3798 = vsel %vm3769, %v3624, 0
      %v3800 = vsel %vm3769, %v3626, 0
      %v3802 = vsel %vm3769, %v3628, 0
      %v3804 = vsel %vm3769, %v3630, 0
      %v3806 = vsel %vm3769, %v3632, 0
      %v3808 = vsel %vm3769, %v3634, 0
      %v3810 = vsel %vm3769, %v3636, 0
      %v3812 = vsel %vm3769, %v3638, 0
      %v3814 = vsel %vm3769, %v3640, 0
      %v3816 = vsel %vm3769, %v3642, 0
      %v3818 = vsel %vm3769, %v3644, 0
      %v3820 = vsel %vm3769, %v3646, 0
      %v3822 = vsel %vm3769, %v3648, 0
      %v3824 = vsel %vm3769, %v3650, 0
      %v3826 = vsel %vm3769, %v3652, 0
      %v3828 = vsel %vm3769, %v3654, 0
      %v3830 = vsel %vm3769, %v3656, 0
      %v3832 = vsel %vm3769, %v3658, 0
      %v3834 = vsel %vm3769, %v3660, 0
      %v3836 = vsel %vm3769, %v3662, 0
      %v3838 = vsel %vm3769, %v3664, 0
      %v3840 = vsel %vm3769, %v3666, 0
      %v3842 = vsel %vm3769, %v3668, 0
      %v3844 = vsel %vm3769, %v3670, 0
      %v3846 = vsel %vm3769, %v3672, 0
      %v3848 = vsel %vm3769, %v3674, 0
      %v3850 = vsel %vm3769, %v3676, 0
      %v3852 = vsel %vm3769, %v3678, 0
      %v3854 = vsel %vm3769, %v3680, 0
      %v3856 = vsel %vm3769, %v3682, 0
      %v3858 = vsel %vm3769, %v3684, 0
      %v3860 = vsel %vm3769, %v3686, 0
      %v3862 = vsel %vm3769, %v3688, 0
      %v3864 = vsel %vm3769, %v3690, 0
      %v3866 = vsel %vm3769, %v3692, 0
      %v3868 = vsel %vm3769, %v3694, 0
      %v3870 = vsel %vm3769, %v3696, 0
      %v3872 = vsel %vm3769, %v3698, 0
      %v3874 = vsel %vm3769, %v3700, 0
      %v3876 = vsel %vm3769, %v3702, 0
      %v3878 = vsel %vm3769, %v3704, 0
      %v3880 = vsel %vm3769, %v3706, 0
      %v3882 = vsel %vm3769, %v3708, 0
      %v3884 = vsel %vm3769, %v3710, 0
      %v3886 = vsel %vm3769, %v3712, 0
      %v3888 = vsel %vm3769, %v3714, 0
      %v3890 = vsel %vm3769, %v3716, 0
      %v3892 = vsel %vm3769, %v3718, 0
      %v3894 = vsel %vm3769, %v3720, 0
      %v3896 = vsel %vm3769, %v3722, 0
      %vm3898 = vcmask 1045504
      %v3900 = vsel %vm3898, %v3764, 0
      %3902 = vmatprep.subr.bf16.mxu0 0
      %3903 = vmatpush1.bf16.msra.mxu0 0
      %3904 = vmatprep.subr.bf16.mxu0 0
      %3905 = vmatpush1.bf16.msra.mxu0 0
      %3906 = vmatprep.subr.bf16.mxu0 0
      %3907 = vmatpush1.bf16.msra.mxu0 0
      %3908 = vmatprep.subr.bf16.mxu0 0
      %3909 = vmatpush1.bf16.msra.mxu0 %v3900
      %3910 = vmatprep.subr.bf16.mxu0 0
      %3911 = vmatpush1.bf16.msra.mxu0 %v3763
      %3912 = vmatprep.subr.bf16.mxu0 0
      %3913 = vmatpush1.bf16.msra.mxu0 %v3762
      %3914 = vmatprep.subr.bf16.mxu0 0
      %3915 = vmatpush1.bf16.msra.mxu0 %v3761
      %3916 = vmatprep.subr.bf16.mxu0 0
      %3917 = vmatpush1.bf16.msra.mxu0 %v3760
      %3918 = vmatprep.subr.bf16.mxu0 0
      %3919 = vmatpush2.bf16.msra.mxu0 0
      %3920 = vmatprep.subr.bf16.mxu0 0
      %3921 = vmatpush2.bf16.msra.mxu0 0
      %3922 = vmatprep.subr.bf16.mxu0 0
      %3923 = vmatpush2.bf16.msra.mxu0 0
      %3924 = vmatprep.subr.bf16.mxu0 0
      %3925 = vmatpush2.bf16.msra.mxu0 0
      %3926 = vmatprep.subr.bf16.mxu0 0
      %3927 = vmatpush2.bf16.msra.mxu0 0
      %3928 = vmatprep.subr.bf16.mxu0 0
      %3929 = vmatpush2.bf16.msra.mxu0 0
      %3930 = vmatprep.subr.bf16.mxu0 0
      %3931 = vmatpush2.bf16.msra.mxu0 0
      %3932 = vmatprep.subr.bf16.mxu0 0
      %3933 = vmatpush2.bf16.msra.mxu0 0
      %3934 = vmatprep.mubr.bf16.mxu0 0
      %3935 = vmatmul.mubr.bf16.gmra.mxu0 %v3770
      %v3936 = vpop.f32.mrf.mxu0
      %v3937 = vadd.f32 %v3738, %v3936
      %v3938 = vpop.f32.mrf.mxu0
      %v3939 = vpop.f32.mrf.mxu0
      %v3940 = vadd.f32 %v3738, %v3939
      %v3941 = vpop.f32.mrf.mxu0
      %3942 = vmatprep.mubr.bf16.mxu0 0
      %3943 = vmatmul.mubr.bf16.gmra.mxu0 %v3772
      %v3944 = vpop.f32.mrf.mxu0
      %v3945 = vadd.f32 %v3738, %v3944
      %v3946 = vpop.f32.mrf.mxu0
      %v3947 = vpop.f32.mrf.mxu0
      %v3948 = vadd.f32 %v3738, %v3947
      %v3949 = vpop.f32.mrf.mxu0
      %3950 = vmatprep.mubr.bf16.mxu0 0
      %3951 = vmatmul.mubr.bf16.gmra.mxu0 %v3774
      %v3952 = vpop.f32.mrf.mxu0
      %v3953 = vadd.f32 %v3738, %v3952
      %v3954 = vpop.f32.mrf.mxu0
      %v3955 = vpop.f32.mrf.mxu0
      %v3956 = vadd.f32 %v3738, %v3955
      %v3957 = vpop.f32.mrf.mxu0
      %3958 = vmatprep.mubr.bf16.mxu0 0
      %3959 = vmatmul.mubr.bf16.gmra.mxu0 %v3776
      %v3960 = vpop.f32.mrf.mxu0
      %v3961 = vadd.f32 %v3738, %v3960
      %v3962 = vpop.f32.mrf.mxu0
      %v3963 = vpop.f32.mrf.mxu0
      %v3964 = vadd.f32 %v3738, %v3963
      %v3965 = vpop.f32.mrf.mxu0
      %3966 = vmatprep.mubr.bf16.mxu0 0
      %3967 = vmatmul.mubr.bf16.gmra.mxu0 %v3778
      %v3968 = vpop.f32.mrf.mxu0
      %v3969 = vadd.f32 %v3738, %v3968
      %v3970 = vpop.f32.mrf.mxu0
      %v3971 = vpop.f32.mrf.mxu0
      %v3972 = vadd.f32 %v3738, %v3971
      %v3973 = vpop.f32.mrf.mxu0
      %3974 = vmatprep.mubr.bf16.mxu0 0
      %3975 = vmatmul.mubr.bf16.gmra.mxu0 %v3780
      %v3976 = vpop.f32.mrf.mxu0
      %v3977 = vadd.f32 %v3738, %v3976
      %v3978 = vpop.f32.mrf.mxu0
      %v3979 = vpop.f32.mrf.mxu0
      %v3980 = vadd.f32 %v3738, %v3979
      %v3981 = vpop.f32.mrf.mxu0
      %3982 = vmatprep.mubr.bf16.mxu0 0
      %3983 = vmatmul.mubr.bf16.gmra.mxu0 %v3782
      %v3984 = vpop.f32.mrf.mxu0
      %v3985 = vadd.f32 %v3738, %v3984
      %v3986 = vpop.f32.mrf.mxu0
      %v3987 = vpop.f32.mrf.mxu0
      %v3988 = vadd.f32 %v3738, %v3987
      %v3989 = vpop.f32.mrf.mxu0
      %3990 = vmatprep.mubr.bf16.mxu0 0
      %3991 = vmatmul.mubr.bf16.gmra.mxu0 %v3784
      %v3992 = vpop.f32.mrf.mxu0
      %v3993 = vadd.f32 %v3738, %v3992
      %v3994 = vpop.f32.mrf.mxu0
      %v3995 = vpop.f32.mrf.mxu0
      %v3996 = vadd.f32 %v3738, %v3995
      %v3997 = vpop.f32.mrf.mxu0
      %3998 = vmatprep.mubr.bf16.mxu0 0
      %3999 = vmatmul.mubr.bf16.gmra.mxu0 %v3786
      %v4000 = vpop.f32.mrf.mxu0
      %v4001 = vadd.f32 %v3738, %v4000
      %v4002 = vpop.f32.mrf.mxu0
      %v4003 = vpop.f32.mrf.mxu0
      %v4004 = vadd.f32 %v3738, %v4003
      %v4005 = vpop.f32.mrf.mxu0
      %4006 = vmatprep.mubr.bf16.mxu0 0
      %4007 = vmatmul.mubr.bf16.gmra.mxu0 %v3788
      %v4008 = vpop.f32.mrf.mxu0
      %v4009 = vadd.f32 %v3738, %v4008
      %v4010 = vpop.f32.mrf.mxu0
      %v4011 = vpop.f32.mrf.mxu0
      %v4012 = vadd.f32 %v3738, %v4011
      %v4013 = vpop.f32.mrf.mxu0
      %4014 = vmatprep.mubr.bf16.mxu0 0
      %4015 = vmatmul.mubr.bf16.gmra.mxu0 %v3790
      %v4016 = vpop.f32.mrf.mxu0
      %v4017 = vadd.f32 %v3738, %v4016
      %v4018 = vpop.f32.mrf.mxu0
      %v4019 = vpop.f32.mrf.mxu0
      %v4020 = vadd.f32 %v3738, %v4019
      %v4021 = vpop.f32.mrf.mxu0
      %4022 = vmatprep.mubr.bf16.mxu0 0
      %4023 = vmatmul.mubr.bf16.gmra.mxu0 %v3792
      %v4024 = vpop.f32.mrf.mxu0
      %v4025 = vadd.f32 %v3738, %v4024
      %v4026 = vpop.f32.mrf.mxu0
      %v4027 = vpop.f32.mrf.mxu0
      %v4028 = vadd.f32 %v3738, %v4027
      %v4029 = vpop.f32.mrf.mxu0
      %4030 = vmatprep.mubr.bf16.mxu0 0
      %4031 = vmatmul.mubr.bf16.gmra.mxu0 %v3794
      %v4032 = vpop.f32.mrf.mxu0
      %v4033 = vadd.f32 %v3738, %v4032
      %v4034 = vpop.f32.mrf.mxu0
      %v4035 = vpop.f32.mrf.mxu0
      %v4036 = vadd.f32 %v3738, %v4035
      %v4037 = vpop.f32.mrf.mxu0
      %4038 = vmatprep.mubr.bf16.mxu0 0
      %4039 = vmatmul.mubr.bf16.gmra.mxu0 %v3796
      %v4040 = vpop.f32.mrf.mxu0
      %v4041 = vadd.f32 %v3738, %v4040
      %v4042 = vpop.f32.mrf.mxu0
      %v4043 = vpop.f32.mrf.mxu0
      %v4044 = vadd.f32 %v3738, %v4043
      %v4045 = vpop.f32.mrf.mxu0
      %4046 = vmatprep.mubr.bf16.mxu0 0
      %4047 = vmatmul.mubr.bf16.gmra.mxu0 %v3798
      %v4048 = vpop.f32.mrf.mxu0
      %v4049 = vadd.f32 %v3738, %v4048
      %v4050 = vpop.f32.mrf.mxu0
      %v4051 = vpop.f32.mrf.mxu0
      %v4052 = vadd.f32 %v3738, %v4051
      %v4053 = vpop.f32.mrf.mxu0
      %4054 = vmatprep.mubr.bf16.mxu0 0
      %4055 = vmatmul.mubr.bf16.gmra.mxu0 %v3800
      %v4056 = vpop.f32.mrf.mxu0
      %v4057 = vadd.f32 %v3738, %v4056
      %v4058 = vpop.f32.mrf.mxu0
      %v4059 = vpop.f32.mrf.mxu0
      %v4060 = vadd.f32 %v3738, %v4059
      %v4061 = vpop.f32.mrf.mxu0
      %4062 = vmatprep.mubr.bf16.mxu0 0
      %4063 = vmatmul.mubr.bf16.gmra.mxu0 %v3802
      %v4064 = vpop.f32.mrf.mxu0
      %v4065 = vadd.f32 %v3738, %v4064
      %v4066 = vpop.f32.mrf.mxu0
      %v4067 = vpop.f32.mrf.mxu0
      %v4068 = vadd.f32 %v3738, %v4067
      %v4069 = vpop.f32.mrf.mxu0
      %4070 = vmatprep.mubr.bf16.mxu0 0
      %4071 = vmatmul.mubr.bf16.gmra.mxu0 %v3804
      %v4072 = vpop.f32.mrf.mxu0
      %v4073 = vadd.f32 %v3738, %v4072
      %v4074 = vpop.f32.mrf.mxu0
      %v4075 = vpop.f32.mrf.mxu0
      %v4076 = vadd.f32 %v3738, %v4075
      %v4077 = vpop.f32.mrf.mxu0
      %4078 = vmatprep.mubr.bf16.mxu0 0
      %4079 = vmatmul.mubr.bf16.gmra.mxu0 %v3806
      %v4080 = vpop.f32.mrf.mxu0
      %v4081 = vadd.f32 %v3738, %v4080
      %v4082 = vpop.f32.mrf.mxu0
      %v4083 = vpop.f32.mrf.mxu0
      %v4084 = vadd.f32 %v3738, %v4083
      %v4085 = vpop.f32.mrf.mxu0
      %4086 = vmatprep.mubr.bf16.mxu0 0
      %4087 = vmatmul.mubr.bf16.gmra.mxu0 %v3808
      %v4088 = vpop.f32.mrf.mxu0
      %v4089 = vadd.f32 %v3738, %v4088
      %v4090 = vpop.f32.mrf.mxu0
      %v4091 = vpop.f32.mrf.mxu0
      %v4092 = vadd.f32 %v3738, %v4091
      %v4093 = vpop.f32.mrf.mxu0
      %4094 = vmatprep.mubr.bf16.mxu0 0
      %4095 = vmatmul.mubr.bf16.gmra.mxu0 %v3810
      %v4096 = vpop.f32.mrf.mxu0
      %v4097 = vadd.f32 %v3738, %v4096
      %v4098 = vpop.f32.mrf.mxu0
      %v4099 = vpop.f32.mrf.mxu0
      %v4100 = vadd.f32 %v3738, %v4099
      %v4101 = vpop.f32.mrf.mxu0
      %4102 = vmatprep.mubr.bf16.mxu0 0
      %4103 = vmatmul.mubr.bf16.gmra.mxu0 %v3812
      %v4104 = vpop.f32.mrf.mxu0
      %v4105 = vadd.f32 %v3738, %v4104
      %v4106 = vpop.f32.mrf.mxu0
      %v4107 = vpop.f32.mrf.mxu0
      %v4108 = vadd.f32 %v3738, %v4107
      %v4109 = vpop.f32.mrf.mxu0
      %4110 = vmatprep.mubr.bf16.mxu0 0
      %4111 = vmatmul.mubr.bf16.gmra.mxu0 %v3814
      %v4112 = vpop.f32.mrf.mxu0
      %v4113 = vadd.f32 %v3738, %v4112
      %v4114 = vpop.f32.mrf.mxu0
      %v4115 = vpop.f32.mrf.mxu0
      %v4116 = vadd.f32 %v3738, %v4115
      %v4117 = vpop.f32.mrf.mxu0
      %4118 = vmatprep.mubr.bf16.mxu0 0
      %4119 = vmatmul.mubr.bf16.gmra.mxu0 %v3816
      %v4120 = vpop.f32.mrf.mxu0
      %v4121 = vadd.f32 %v3738, %v4120
      %v4122 = vpop.f32.mrf.mxu0
      %v4123 = vpop.f32.mrf.mxu0
      %v4124 = vadd.f32 %v3738, %v4123
      %v4125 = vpop.f32.mrf.mxu0
      %4126 = vmatprep.mubr.bf16.mxu0 0
      %4127 = vmatmul.mubr.bf16.gmra.mxu0 %v3818
      %v4128 = vpop.f32.mrf.mxu0
      %v4129 = vadd.f32 %v3738, %v4128
      %v4130 = vpop.f32.mrf.mxu0
      %v4131 = vpop.f32.mrf.mxu0
      %v4132 = vadd.f32 %v3738, %v4131
      %v4133 = vpop.f32.mrf.mxu0
      %4134 = vmatprep.mubr.bf16.mxu0 0
      %4135 = vmatmul.mubr.bf16.gmra.mxu0 %v3820
      %v4136 = vpop.f32.mrf.mxu0
      %v4137 = vadd.f32 %v3738, %v4136
      %v4138 = vpop.f32.mrf.mxu0
      %v4139 = vpop.f32.mrf.mxu0
      %v4140 = vadd.f32 %v3738, %v4139
      %v4141 = vpop.f32.mrf.mxu0
      %4142 = vmatprep.mubr.bf16.mxu0 0
      %4143 = vmatmul.mubr.bf16.gmra.mxu0 %v3822
      %v4144 = vpop.f32.mrf.mxu0
      %v4145 = vadd.f32 %v3738, %v4144
      %v4146 = vpop.f32.mrf.mxu0
      %v4147 = vpop.f32.mrf.mxu0
      %v4148 = vadd.f32 %v3738, %v4147
      %v4149 = vpop.f32.mrf.mxu0
      %4150 = vmatprep.mubr.bf16.mxu0 0
      %4151 = vmatmul.mubr.bf16.gmra.mxu0 %v3824
      %v4152 = vpop.f32.mrf.mxu0
      %v4153 = vadd.f32 %v3738, %v4152
      %v4154 = vpop.f32.mrf.mxu0
      %v4155 = vpop.f32.mrf.mxu0
      %v4156 = vadd.f32 %v3738, %v4155
      %v4157 = vpop.f32.mrf.mxu0
      %4158 = vmatprep.mubr.bf16.mxu0 0
      %4159 = vmatmul.mubr.bf16.gmra.mxu0 %v3826
      %v4160 = vpop.f32.mrf.mxu0
      %v4161 = vadd.f32 %v3738, %v4160
      %v4162 = vpop.f32.mrf.mxu0
      %v4163 = vpop.f32.mrf.mxu0
      %v4164 = vadd.f32 %v3738, %v4163
      %v4165 = vpop.f32.mrf.mxu0
      %4166 = vmatprep.mubr.bf16.mxu0 0
      %4167 = vmatmul.mubr.bf16.gmra.mxu0 %v3828
      %v4168 = vpop.f32.mrf.mxu0
      %v4169 = vadd.f32 %v3738, %v4168
      %v4170 = vpop.f32.mrf.mxu0
      %v4171 = vpop.f32.mrf.mxu0
      %v4172 = vadd.f32 %v3738, %v4171
      %v4173 = vpop.f32.mrf.mxu0
      %4174 = vmatprep.mubr.bf16.mxu0 0
      %4175 = vmatmul.mubr.bf16.gmra.mxu0 %v3830
      %v4176 = vpop.f32.mrf.mxu0
      %v4177 = vadd.f32 %v3738, %v4176
      %v4178 = vpop.f32.mrf.mxu0
      %v4179 = vpop.f32.mrf.mxu0
      %v4180 = vadd.f32 %v3738, %v4179
      %v4181 = vpop.f32.mrf.mxu0
      %4182 = vmatprep.mubr.bf16.mxu0 0
      %4183 = vmatmul.mubr.bf16.gmra.mxu0 %v3832
      %v4184 = vpop.f32.mrf.mxu0
      %v4185 = vadd.f32 %v3738, %v4184
      %v4186 = vpop.f32.mrf.mxu0
      %v4187 = vpop.f32.mrf.mxu0
      %v4188 = vadd.f32 %v3738, %v4187
      %v4189 = vpop.f32.mrf.mxu0
      %4190 = vmatprep.mubr.bf16.mxu0 0
      %4191 = vmatmul.mubr.bf16.gmra.mxu0 %v3834
      %v4192 = vpop.f32.mrf.mxu0
      %v4193 = vadd.f32 %v3738, %v4192
      %v4194 = vpop.f32.mrf.mxu0
      %v4195 = vpop.f32.mrf.mxu0
      %v4196 = vadd.f32 %v3738, %v4195
      %v4197 = vpop.f32.mrf.mxu0
      %4198 = vmatprep.mubr.bf16.mxu0 0
      %4199 = vmatmul.mubr.bf16.gmra.mxu0 %v3836
      %v4200 = vpop.f32.mrf.mxu0
      %v4201 = vadd.f32 %v3738, %v4200
      %v4202 = vpop.f32.mrf.mxu0
      %v4203 = vpop.f32.mrf.mxu0
      %v4204 = vadd.f32 %v3738, %v4203
      %v4205 = vpop.f32.mrf.mxu0
      %4206 = vmatprep.mubr.bf16.mxu0 0
      %4207 = vmatmul.mubr.bf16.gmra.mxu0 %v3838
      %v4208 = vpop.f32.mrf.mxu0
      %v4209 = vadd.f32 %v3738, %v4208
      %v4210 = vpop.f32.mrf.mxu0
      %v4211 = vpop.f32.mrf.mxu0
      %v4212 = vadd.f32 %v3738, %v4211
      %v4213 = vpop.f32.mrf.mxu0
      %4214 = vmatprep.mubr.bf16.mxu0 0
      %4215 = vmatmul.mubr.bf16.gmra.mxu0 %v3840
      %v4216 = vpop.f32.mrf.mxu0
      %v4217 = vadd.f32 %v3738, %v4216
      %v4218 = vpop.f32.mrf.mxu0
      %v4219 = vpop.f32.mrf.mxu0
      %v4220 = vadd.f32 %v3738, %v4219
      %v4221 = vpop.f32.mrf.mxu0
      %4222 = vmatprep.mubr.bf16.mxu0 0
      %4223 = vmatmul.mubr.bf16.gmra.mxu0 %v3842
      %v4224 = vpop.f32.mrf.mxu0
      %v4225 = vadd.f32 %v3738, %v4224
      %v4226 = vpop.f32.mrf.mxu0
      %v4227 = vpop.f32.mrf.mxu0
      %v4228 = vadd.f32 %v3738, %v4227
      %v4229 = vpop.f32.mrf.mxu0
      %4230 = vmatprep.mubr.bf16.mxu0 0
      %4231 = vmatmul.mubr.bf16.gmra.mxu0 %v3844
      %v4232 = vpop.f32.mrf.mxu0
      %v4233 = vadd.f32 %v3738, %v4232
      %v4234 = vpop.f32.mrf.mxu0
      %v4235 = vpop.f32.mrf.mxu0
      %v4236 = vadd.f32 %v3738, %v4235
      %v4237 = vpop.f32.mrf.mxu0
      %4238 = vmatprep.mubr.bf16.mxu0 0
      %4239 = vmatmul.mubr.bf16.gmra.mxu0 %v3846
      %v4240 = vpop.f32.mrf.mxu0
      %v4241 = vadd.f32 %v3738, %v4240
      %v4242 = vpop.f32.mrf.mxu0
      %v4243 = vpop.f32.mrf.mxu0
      %v4244 = vadd.f32 %v3738, %v4243
      %v4245 = vpop.f32.mrf.mxu0
      %4246 = vmatprep.mubr.bf16.mxu0 0
      %4247 = vmatmul.mubr.bf16.gmra.mxu0 %v3848
      %v4248 = vpop.f32.mrf.mxu0
      %v4249 = vadd.f32 %v3738, %v4248
      %v4250 = vpop.f32.mrf.mxu0
      %v4251 = vpop.f32.mrf.mxu0
      %v4252 = vadd.f32 %v3738, %v4251
      %v4253 = vpop.f32.mrf.mxu0
      %4254 = vmatprep.mubr.bf16.mxu0 0
      %4255 = vmatmul.mubr.bf16.gmra.mxu0 %v3850
      %v4256 = vpop.f32.mrf.mxu0
      %v4257 = vadd.f32 %v3738, %v4256
      %v4258 = vpop.f32.mrf.mxu0
      %v4259 = vpop.f32.mrf.mxu0
      %v4260 = vadd.f32 %v3738, %v4259
      %v4261 = vpop.f32.mrf.mxu0
      %4262 = vmatprep.mubr.bf16.mxu0 0
      %4263 = vmatmul.mubr.bf16.gmra.mxu0 %v3852
      %v4264 = vpop.f32.mrf.mxu0
      %v4265 = vadd.f32 %v3738, %v4264
      %v4266 = vpop.f32.mrf.mxu0
      %v4267 = vpop.f32.mrf.mxu0
      %v4268 = vadd.f32 %v3738, %v4267
      %v4269 = vpop.f32.mrf.mxu0
      %4270 = vmatprep.mubr.bf16.mxu0 0
      %4271 = vmatmul.mubr.bf16.gmra.mxu0 %v3854
      %v4272 = vpop.f32.mrf.mxu0
      %v4273 = vadd.f32 %v3738, %v4272
      %v4274 = vpop.f32.mrf.mxu0
      %v4275 = vpop.f32.mrf.mxu0
      %v4276 = vadd.f32 %v3738, %v4275
      %v4277 = vpop.f32.mrf.mxu0
      %4278 = vmatprep.mubr.bf16.mxu0 0
      %4279 = vmatmul.mubr.bf16.gmra.mxu0 %v3856
      %v4280 = vpop.f32.mrf.mxu0
      %v4281 = vadd.f32 %v3738, %v4280
      %v4282 = vpop.f32.mrf.mxu0
      %v4283 = vpop.f32.mrf.mxu0
      %v4284 = vadd.f32 %v3738, %v4283
      %v4285 = vpop.f32.mrf.mxu0
      %4286 = vmatprep.mubr.bf16.mxu0 0
      %4287 = vmatmul.mubr.bf16.gmra.mxu0 %v3858
      %v4288 = vpop.f32.mrf.mxu0
      %v4289 = vadd.f32 %v3738, %v4288
      %v4290 = vpop.f32.mrf.mxu0
      %v4291 = vpop.f32.mrf.mxu0
      %v4292 = vadd.f32 %v3738, %v4291
      %v4293 = vpop.f32.mrf.mxu0
      %4294 = vmatprep.mubr.bf16.mxu0 0
      %4295 = vmatmul.mubr.bf16.gmra.mxu0 %v3860
      %v4296 = vpop.f32.mrf.mxu0
      %v4297 = vadd.f32 %v3738, %v4296
      %v4298 = vpop.f32.mrf.mxu0
      %v4299 = vpop.f32.mrf.mxu0
      %v4300 = vadd.f32 %v3738, %v4299
      %v4301 = vpop.f32.mrf.mxu0
      %4302 = vmatprep.mubr.bf16.mxu0 0
      %4303 = vmatmul.mubr.bf16.gmra.mxu0 %v3862
      %v4304 = vpop.f32.mrf.mxu0
      %v4305 = vadd.f32 %v3738, %v4304
      %v4306 = vpop.f32.mrf.mxu0
      %v4307 = vpop.f32.mrf.mxu0
      %v4308 = vadd.f32 %v3738, %v4307
      %v4309 = vpop.f32.mrf.mxu0
      %4310 = vmatprep.mubr.bf16.mxu0 0
      %4311 = vmatmul.mubr.bf16.gmra.mxu0 %v3864
      %v4312 = vpop.f32.mrf.mxu0
      %v4313 = vadd.f32 %v3738, %v4312
      %v4314 = vpop.f32.mrf.mxu0
      %v4315 = vpop.f32.mrf.mxu0
      %v4316 = vadd.f32 %v3738, %v4315
      %v4317 = vpop.f32.mrf.mxu0
      %4318 = vmatprep.mubr.bf16.mxu0 0
      %4319 = vmatmul.mubr.bf16.gmra.mxu0 %v3866
      %v4320 = vpop.f32.mrf.mxu0
      %v4321 = vadd.f32 %v3738, %v4320
      %v4322 = vpop.f32.mrf.mxu0
      %v4323 = vpop.f32.mrf.mxu0
      %v4324 = vadd.f32 %v3738, %v4323
      %v4325 = vpop.f32.mrf.mxu0
      %4326 = vmatprep.mubr.bf16.mxu0 0
      %4327 = vmatmul.mubr.bf16.gmra.mxu0 %v3868
      %v4328 = vpop.f32.mrf.mxu0
      %v4329 = vadd.f32 %v3738, %v4328
      %v4330 = vpop.f32.mrf.mxu0
      %v4331 = vpop.f32.mrf.mxu0
      %v4332 = vadd.f32 %v3738, %v4331
      %v4333 = vpop.f32.mrf.mxu0
      %4334 = vmatprep.mubr.bf16.mxu0 0
      %4335 = vmatmul.mubr.bf16.gmra.mxu0 %v3870
      %v4336 = vpop.f32.mrf.mxu0
      %v4337 = vadd.f32 %v3738, %v4336
      %v4338 = vpop.f32.mrf.mxu0
      %v4339 = vpop.f32.mrf.mxu0
      %v4340 = vadd.f32 %v3738, %v4339
      %v4341 = vpop.f32.mrf.mxu0
      %4342 = vmatprep.mubr.bf16.mxu0 0
      %4343 = vmatmul.mubr.bf16.gmra.mxu0 %v3872
      %v4344 = vpop.f32.mrf.mxu0
      %v4345 = vadd.f32 %v3738, %v4344
      %v4346 = vpop.f32.mrf.mxu0
      %v4347 = vpop.f32.mrf.mxu0
      %v4348 = vadd.f32 %v3738, %v4347
      %v4349 = vpop.f32.mrf.mxu0
      %4350 = vmatprep.mubr.bf16.mxu0 0
      %4351 = vmatmul.mubr.bf16.gmra.mxu0 %v3874
      %v4352 = vpop.f32.mrf.mxu0
      %v4353 = vadd.f32 %v3738, %v4352
      %v4354 = vpop.f32.mrf.mxu0
      %v4355 = vpop.f32.mrf.mxu0
      %v4356 = vadd.f32 %v3738, %v4355
      %v4357 = vpop.f32.mrf.mxu0
      %4358 = vmatprep.mubr.bf16.mxu0 0
      %4359 = vmatmul.mubr.bf16.gmra.mxu0 %v3876
      %v4360 = vpop.f32.mrf.mxu0
      %v4361 = vadd.f32 %v3738, %v4360
      %v4362 = vpop.f32.mrf.mxu0
      %v4363 = vpop.f32.mrf.mxu0
      %v4364 = vadd.f32 %v3738, %v4363
      %v4365 = vpop.f32.mrf.mxu0
      %4366 = vmatprep.mubr.bf16.mxu0 0
      %4367 = vmatmul.mubr.bf16.gmra.mxu0 %v3878
      %v4368 = vpop.f32.mrf.mxu0
      %v4369 = vadd.f32 %v3738, %v4368
      %v4370 = vpop.f32.mrf.mxu0
      %v4371 = vpop.f32.mrf.mxu0
      %v4372 = vadd.f32 %v3738, %v4371
      %v4373 = vpop.f32.mrf.mxu0
      %4374 = vmatprep.mubr.bf16.mxu0 0
      %4375 = vmatmul.mubr.bf16.gmra.mxu0 %v3880
      %v4376 = vpop.f32.mrf.mxu0
      %v4377 = vadd.f32 %v3738, %v4376
      %v4378 = vpop.f32.mrf.mxu0
      %v4379 = vpop.f32.mrf.mxu0
      %v4380 = vadd.f32 %v3738, %v4379
      %v4381 = vpop.f32.mrf.mxu0
      %4382 = vmatprep.mubr.bf16.mxu0 0
      %4383 = vmatmul.mubr.bf16.gmra.mxu0 %v3882
      %v4384 = vpop.f32.mrf.mxu0
      %v4385 = vadd.f32 %v3738, %v4384
      %v4386 = vpop.f32.mrf.mxu0
      %v4387 = vpop.f32.mrf.mxu0
      %v4388 = vadd.f32 %v3738, %v4387
      %v4389 = vpop.f32.mrf.mxu0
      %4390 = vmatprep.mubr.bf16.mxu0 0
      %4391 = vmatmul.mubr.bf16.gmra.mxu0 %v3884
      %v4392 = vpop.f32.mrf.mxu0
      %v4393 = vadd.f32 %v3738, %v4392
      %v4394 = vpop.f32.mrf.mxu0
      %v4395 = vpop.f32.mrf.mxu0
      %v4396 = vadd.f32 %v3738, %v4395
      %v4397 = vpop.f32.mrf.mxu0
      %4398 = vmatprep.mubr.bf16.mxu0 0
      %4399 = vmatmul.mubr.bf16.gmra.mxu0 %v3886
      %v4400 = vpop.f32.mrf.mxu0
      %v4401 = vadd.f32 %v3738, %v4400
      %v4402 = vpop.f32.mrf.mxu0
      %v4403 = vpop.f32.mrf.mxu0
      %v4404 = vadd.f32 %v3738, %v4403
      %v4405 = vpop.f32.mrf.mxu0
      %4406 = vmatprep.mubr.bf16.mxu0 0
      %4407 = vmatmul.mubr.bf16.gmra.mxu0 %v3888
      %v4408 = vpop.f32.mrf.mxu0
      %v4409 = vadd.f32 %v3738, %v4408
      %v4410 = vpop.f32.mrf.mxu0
      %v4411 = vpop.f32.mrf.mxu0
      %v4412 = vadd.f32 %v3738, %v4411
      %v4413 = vpop.f32.mrf.mxu0
      %4414 = vmatprep.mubr.bf16.mxu0 0
      %4415 = vmatmul.mubr.bf16.gmra.mxu0 %v3890
      %v4416 = vpop.f32.mrf.mxu0
      %v4417 = vadd.f32 %v3738, %v4416
      %v4418 = vpop.f32.mrf.mxu0
      %v4419 = vpop.f32.mrf.mxu0
      %v4420 = vadd.f32 %v3738, %v4419
      %v4421 = vpop.f32.mrf.mxu0
      %4422 = vmatprep.mubr.bf16.mxu0 0
      %4423 = vmatmul.mubr.bf16.gmra.mxu0 %v3892
      %v4424 = vpop.f32.mrf.mxu0
      %v4425 = vadd.f32 %v3738, %v4424
      %v4426 = vpop.f32.mrf.mxu0
      %v4427 = vpop.f32.mrf.mxu0
      %v4428 = vadd.f32 %v3738, %v4427
      %v4429 = vpop.f32.mrf.mxu0
      %4430 = vmatprep.mubr.bf16.mxu0 0
      %4431 = vmatmul.mubr.bf16.gmra.mxu0 %v3894
      %v4432 = vpop.f32.mrf.mxu0
      %v4433 = vadd.f32 %v3738, %v4432
      %v4434 = vpop.f32.mrf.mxu0
      %v4435 = vpop.f32.mrf.mxu0
      %v4436 = vadd.f32 %v3738, %v4435
      %v4437 = vpop.f32.mrf.mxu0
      %4438 = vmatprep.mubr.bf16.mxu0 0
      %4439 = vmatmul.mubr.bf16.gmra.mxu0 %v3896
      %v4440 = vpop.f32.mrf.mxu0
      %v4441 = vadd.f32 %v3738, %v4440
      %v4442 = vpop.f32.mrf.mxu0
      %v4443 = vpop.f32.mrf.mxu0
      %v4444 = vadd.f32 %v3738, %v4443
      %v4445 = vpop.f32.mrf.mxu0
      %4446 = vdwg.mxu0
      %v4447 = vmax.f32 %v3937, 0.0
      %v4448 = vmax.f32 %v3940, 0.0
      %v4449 = vmax.f32 %v3945, 0.0
      %v4450 = vmax.f32 %v3948, 0.0
      %v4451 = vmax.f32 %v3953, 0.0
      %v4452 = vmax.f32 %v3956, 0.0
      %v4453 = vmax.f32 %v3961, 0.0
      %v4454 = vmax.f32 %v3964, 0.0
      %v4455 = vmax.f32 %v3969, 0.0
      %v4456 = vmax.f32 %v3972, 0.0
      %v4457 = vmax.f32 %v3977, 0.0
      %v4458 = vmax.f32 %v3980, 0.0
      %v4459 = vmax.f32 %v3985, 0.0
      %v4460 = vmax.f32 %v3988, 0.0
      %v4461 = vmax.f32 %v3993, 0.0
      %v4462 = vmax.f32 %v3996, 0.0
      %v4463 = vmax.f32 %v4001, 0.0
      %v4464 = vmax.f32 %v4004, 0.0
      %v4465 = vmax.f32 %v4009, 0.0
      %v4466 = vmax.f32 %v4012, 0.0
      %v4467 = vmax.f32 %v4017, 0.0
      %v4468 = vmax.f32 %v4020, 0.0
      %v4469 = vmax.f32 %v4025, 0.0
      %v4470 = vmax.f32 %v4028, 0.0
      %v4471 = vmax.f32 %v4033, 0.0
      %v4472 = vmax.f32 %v4036, 0.0
      %v4473 = vmax.f32 %v4041, 0.0
      %v4474 = vmax.f32 %v4044, 0.0
      %v4475 = vmax.f32 %v4049, 0.0
      %v4476 = vmax.f32 %v4052, 0.0
      %v4477 = vmax.f32 %v4057, 0.0
      %v4478 = vmax.f32 %v4060, 0.0
      %v4479 = vmax.f32 %v4065, 0.0
      %v4480 = vmax.f32 %v4068, 0.0
      %v4481 = vmax.f32 %v4073, 0.0
      %v4482 = vmax.f32 %v4076, 0.0
      %v4483 = vmax.f32 %v4081, 0.0
      %v4484 = vmax.f32 %v4084, 0.0
      %v4485 = vmax.f32 %v4089, 0.0
      %v4486 = vmax.f32 %v4092, 0.0
      %v4487 = vmax.f32 %v4097, 0.0
      %v4488 = vmax.f32 %v4100, 0.0
      %v4489 = vmax.f32 %v4105, 0.0
      %v4490 = vmax.f32 %v4108, 0.0
      %v4491 = vmax.f32 %v4113, 0.0
      %v4492 = vmax.f32 %v4116, 0.0
      %v4493 = vmax.f32 %v4121, 0.0
      %v4494 = vmax.f32 %v4124, 0.0
      %v4495 = vmax.f32 %v4129, 0.0
      %v4496 = vmax.f32 %v4132, 0.0
      %v4497 = vmax.f32 %v4137, 0.0
      %v4498 = vmax.f32 %v4140, 0.0
      %v4499 = vmax.f32 %v4145, 0.0
      %v4500 = vmax.f32 %v4148, 0.0
      %v4501 = vmax.f32 %v4153, 0.0
      %v4502 = vmax.f32 %v4156, 0.0
      %v4503 = vmax.f32 %v4161, 0.0
      %v4504 = vmax.f32 %v4164, 0.0
      %v4505 = vmax.f32 %v4169, 0.0
      %v4506 = vmax.f32 %v4172, 0.0
      %v4507 = vmax.f32 %v4177, 0.0
      %v4508 = vmax.f32 %v4180, 0.0
      %v4509 = vmax.f32 %v4185, 0.0
      %v4510 = vmax.f32 %v4188, 0.0
      %v4511 = vmax.f32 %v4193, 0.0
      %v4512 = vmax.f32 %v4196, 0.0
      %v4513 = vmax.f32 %v4201, 0.0
      %v4514 = vmax.f32 %v4204, 0.0
      %v4515 = vmax.f32 %v4209, 0.0
      %v4516 = vmax.f32 %v4212, 0.0
      %v4517 = vmax.f32 %v4217, 0.0
      %v4518 = vmax.f32 %v4220, 0.0
      %v4519 = vmax.f32 %v4225, 0.0
      %v4520 = vmax.f32 %v4228, 0.0
      %v4521 = vmax.f32 %v4233, 0.0
      %v4522 = vmax.f32 %v4236, 0.0
      %v4523 = vmax.f32 %v4241, 0.0
      %v4524 = vmax.f32 %v4244, 0.0
      %v4525 = vmax.f32 %v4249, 0.0
      %v4526 = vmax.f32 %v4252, 0.0
      %v4527 = vmax.f32 %v4257, 0.0
      %v4528 = vmax.f32 %v4260, 0.0
      %v4529 = vmax.f32 %v4265, 0.0
      %v4530 = vmax.f32 %v4268, 0.0
      %v4531 = vmax.f32 %v4273, 0.0
      %v4532 = vmax.f32 %v4276, 0.0
      %v4533 = vmax.f32 %v4281, 0.0
      %v4534 = vmax.f32 %v4284, 0.0
      %v4535 = vmax.f32 %v4289, 0.0
      %v4536 = vmax.f32 %v4292, 0.0
      %v4537 = vmax.f32 %v4297, 0.0
      %v4538 = vmax.f32 %v4300, 0.0
      %v4539 = vmax.f32 %v4305, 0.0
      %v4540 = vmax.f32 %v4308, 0.0
      %v4541 = vmax.f32 %v4313, 0.0
      %v4542 = vmax.f32 %v4316, 0.0
      %v4543 = vmax.f32 %v4321, 0.0
      %v4544 = vmax.f32 %v4324, 0.0
      %v4545 = vmax.f32 %v4329, 0.0
      %v4546 = vmax.f32 %v4332, 0.0
      %v4547 = vmax.f32 %v4337, 0.0
      %v4548 = vmax.f32 %v4340, 0.0
      %v4549 = vmax.f32 %v4345, 0.0
      %v4550 = vmax.f32 %v4348, 0.0
      %v4551 = vmax.f32 %v4353, 0.0
      %v4552 = vmax.f32 %v4356, 0.0
      %v4553 = vmax.f32 %v4361, 0.0
      %v4554 = vmax.f32 %v4364, 0.0
      %v4555 = vmax.f32 %v4369, 0.0
      %v4556 = vmax.f32 %v4372, 0.0
      %v4557 = vmax.f32 %v4377, 0.0
      %v4558 = vmax.f32 %v4380, 0.0
      %v4559 = vmax.f32 %v4385, 0.0
      %v4560 = vmax.f32 %v4388, 0.0
      %v4561 = vmax.f32 %v4393, 0.0
      %v4562 = vmax.f32 %v4396, 0.0
      %v4563 = vmax.f32 %v4401, 0.0
      %v4564 = vmax.f32 %v4404, 0.0
      %v4565 = vmax.f32 %v4409, 0.0
      %v4566 = vmax.f32 %v4412, 0.0
      %v4567 = vmax.f32 %v4417, 0.0
      %v4568 = vmax.f32 %v4420, 0.0
      %v4569 = vmax.f32 %v4425, 0.0
      %v4570 = vmax.f32 %v4428, 0.0
      %v4571 = vmax.f32 %v4433, 0.0
      %v4572 = vmax.f32 %v4436, 0.0
      %v4573 = vmax.f32 %v4441, 0.0
      %v4574 = vmax.f32 %v4444, 0.0
      %4575 = vst.msk [vmem:[%s255] sm:$0xff] %vm2498, %v4447
      %4576 = vst.msk [vmem:[%s255 + $0x8] sm:$0xff] %vm2498, %v4448
      %4577 = vst.msk [vmem:[%s255 + $0x10] sm:$0xff] %vm2498, %v4449
      %4578 = vst.msk [vmem:[%s255 + $0x18] sm:$0xff] %vm2498, %v4450
      %4579 = vst.msk [vmem:[%s255 + $0x20] sm:$0xff] %vm2498, %v4451
      %4580 = vst.msk [vmem:[%s255 + $0x28] sm:$0xff] %vm2498, %v4452
      %4581 = vst.msk [vmem:[%s255 + $0x30] sm:$0xff] %vm2498, %v4453
      %4582 = vst.msk [vmem:[%s255 + $0x38] sm:$0xff] %vm2498, %v4454
      %4583 = vst.msk [vmem:[%s255 + $0x40] sm:$0xff] %vm2498, %v4455
      %4584 = vst.msk [vmem:[%s255 + $0x48] sm:$0xff] %vm2498, %v4456
      %4585 = vst.msk [vmem:[%s255 + $0x50] sm:$0xff] %vm2498, %v4457
      %4586 = vst.msk [vmem:[%s255 + $0x58] sm:$0xff] %vm2498, %v4458
      %4587 = vst.msk [vmem:[%s255 + $0x60] sm:$0xff] %vm2498, %v4459
      %4588 = vst.msk [vmem:[%s255 + $0x68] sm:$0xff] %vm2498, %v4460
      %4589 = vst.msk [vmem:[%s255 + $0x70] sm:$0xff] %vm2498, %v4461
      %4590 = vst.msk [vmem:[%s255 + $0x78] sm:$0xff] %vm2498, %v4462
      %4591 = vst.msk [vmem:[%s255 + $0x80] sm:$0xff] %vm2498, %v4463
      %4592 = vst.msk [vmem:[%s255 + $0x88] sm:$0xff] %vm2498, %v4464
      %4593 = vst.msk [vmem:[%s255 + $0x90] sm:$0xff] %vm2498, %v4465
      %4594 = vst.msk [vmem:[%s255 + $0x98] sm:$0xff] %vm2498, %v4466
      %4595 = vst.msk [vmem:[%s255 + $0xa0] sm:$0xff] %vm2498, %v4467
      %4596 = vst.msk [vmem:[%s255 + $0xa8] sm:$0xff] %vm2498, %v4468
      %4597 = vst.msk [vmem:[%s255 + $0xb0] sm:$0xff] %vm2498, %v4469
      %4598 = vst.msk [vmem:[%s255 + $0xb8] sm:$0xff] %vm2498, %v4470
      %4599 = vst.msk [vmem:[%s255 + $0xc0] sm:$0xff] %vm2498, %v4471
      %4600 = vst.msk [vmem:[%s255 + $0xc8] sm:$0xff] %vm2498, %v4472
      %4601 = vst.msk [vmem:[%s255 + $0xd0] sm:$0xff] %vm2498, %v4473
      %4602 = vst.msk [vmem:[%s255 + $0xd8] sm:$0xff] %vm2498, %v4474
      %4603 = vst.msk [vmem:[%s255 + $0xe0] sm:$0xff] %vm2498, %v4475
      %4604 = vst.msk [vmem:[%s255 + $0xe8] sm:$0xff] %vm2498, %v4476
      %4605 = vst.msk [vmem:[%s255 + $0xf0] sm:$0xff] %vm2498, %v4477
      %4606 = vst.msk [vmem:[%s255 + $0xf8] sm:$0xff] %vm2498, %v4478
      %4607 = vst.msk [vmem:[%s255 + $0x100] sm:$0xff] %vm2498, %v4479
      %4608 = vst.msk [vmem:[%s255 + $0x108] sm:$0xff] %vm2498, %v4480
      %4609 = vst.msk [vmem:[%s255 + $0x110] sm:$0xff] %vm2498, %v4481
      %4610 = vst.msk [vmem:[%s255 + $0x118] sm:$0xff] %vm2498, %v4482
      %4611 = vst.msk [vmem:[%s255 + $0x120] sm:$0xff] %vm2498, %v4483
      %4612 = vst.msk [vmem:[%s255 + $0x128] sm:$0xff] %vm2498, %v4484
      %4613 = vst.msk [vmem:[%s255 + $0x130] sm:$0xff] %vm2498, %v4485
      %4614 = vst.msk [vmem:[%s255 + $0x138] sm:$0xff] %vm2498, %v4486
      %4615 = vst.msk [vmem:[%s255 + $0x140] sm:$0xff] %vm2498, %v4487
      %4616 = vst.msk [vmem:[%s255 + $0x148] sm:$0xff] %vm2498, %v4488
      %4617 = vst.msk [vmem:[%s255 + $0x150] sm:$0xff] %vm2498, %v4489
      %4618 = vst.msk [vmem:[%s255 + $0x158] sm:$0xff] %vm2498, %v4490
      %4619 = vst.msk [vmem:[%s255 + $0x160] sm:$0xff] %vm2498, %v4491
      %4620 = vst.msk [vmem:[%s255 + $0x168] sm:$0xff] %vm2498, %v4492
      %4621 = vst.msk [vmem:[%s255 + $0x170] sm:$0xff] %vm2498, %v4493
      %4622 = vst.msk [vmem:[%s255 + $0x178] sm:$0xff] %vm2498, %v4494
      %4623 = vst.msk [vmem:[%s255 + $0x180] sm:$0xff] %vm2498, %v4495
      %4624 = vst.msk [vmem:[%s255 + $0x188] sm:$0xff] %vm2498, %v4496
      %4625 = vst.msk [vmem:[%s255 + $0x190] sm:$0xff] %vm2498, %v4497
      %4626 = vst.msk [vmem:[%s255 + $0x198] sm:$0xff] %vm2498, %v4498
      %4627 = vst.msk [vmem:[%s255 + $0x1a0] sm:$0xff] %vm2498, %v4499
      %4628 = vst.msk [vmem:[%s255 + $0x1a8] sm:$0xff] %vm2498, %v4500
      %4629 = vst.msk [vmem:[%s255 + $0x1b0] sm:$0xff] %vm2498, %v4501
      %4630 = vst.msk [vmem:[%s255 + $0x1b8] sm:$0xff] %vm2498, %v4502
      %4631 = vst.msk [vmem:[%s255 + $0x1c0] sm:$0xff] %vm2498, %v4503
      %4632 = vst.msk [vmem:[%s255 + $0x1c8] sm:$0xff] %vm2498, %v4504
      %4633 = vst.msk [vmem:[%s255 + $0x1d0] sm:$0xff] %vm2498, %v4505
      %4634 = vst.msk [vmem:[%s255 + $0x1d8] sm:$0xff] %vm2498, %v4506
      %4635 = vst.msk [vmem:[%s255 + $0x1e0] sm:$0xff] %vm2498, %v4507
      %4636 = vst.msk [vmem:[%s255 + $0x1e8] sm:$0xff] %vm2498, %v4508
      %4637 = vst.msk [vmem:[%s255 + $0x1f0] sm:$0xff] %vm2498, %v4509
      %4638 = vst.msk [vmem:[%s255 + $0x1f8] sm:$0xff] %vm2498, %v4510
      %4639 = vst.msk [vmem:[%s255 + $0x200] sm:$0xff] %vm2498, %v4511
      %4640 = vst.msk [vmem:[%s255 + $0x208] sm:$0xff] %vm2498, %v4512
      %4641 = vst.msk [vmem:[%s255 + $0x210] sm:$0xff] %vm2498, %v4513
      %4642 = vst.msk [vmem:[%s255 + $0x218] sm:$0xff] %vm2498, %v4514
      %4643 = vst.msk [vmem:[%s255 + $0x220] sm:$0xff] %vm2498, %v4515
      %4644 = vst.msk [vmem:[%s255 + $0x228] sm:$0xff] %vm2498, %v4516
      %4645 = vst.msk [vmem:[%s255 + $0x230] sm:$0xff] %vm2498, %v4517
      %4646 = vst.msk [vmem:[%s255 + $0x238] sm:$0xff] %vm2498, %v4518
      %4647 = vst.msk [vmem:[%s255 + $0x240] sm:$0xff] %vm2498, %v4519
      %4648 = vst.msk [vmem:[%s255 + $0x248] sm:$0xff] %vm2498, %v4520
      %4649 = vst.msk [vmem:[%s255 + $0x250] sm:$0xff] %vm2498, %v4521
      %4650 = vst.msk [vmem:[%s255 + $0x258] sm:$0xff] %vm2498, %v4522
      %4651 = vst.msk [vmem:[%s255 + $0x260] sm:$0xff] %vm2498, %v4523
      %4652 = vst.msk [vmem:[%s255 + $0x268] sm:$0xff] %vm2498, %v4524
      %4653 = vst.msk [vmem:[%s255 + $0x270] sm:$0xff] %vm2498, %v4525
      %4654 = vst.msk [vmem:[%s255 + $0x278] sm:$0xff] %vm2498, %v4526
      %4655 = vst.msk [vmem:[%s255 + $0x280] sm:$0xff] %vm2498, %v4527
      %4656 = vst.msk [vmem:[%s255 + $0x288] sm:$0xff] %vm2498, %v4528
      %4657 = vst.msk [vmem:[%s255 + $0x290] sm:$0xff] %vm2498, %v4529
      %4658 = vst.msk [vmem:[%s255 + $0x298] sm:$0xff] %vm2498, %v4530
      %4659 = vst.msk [vmem:[%s255 + $0x2a0] sm:$0xff] %vm2498, %v4531
      %4660 = vst.msk [vmem:[%s255 + $0x2a8] sm:$0xff] %vm2498, %v4532
      %4661 = vst.msk [vmem:[%s255 + $0x2b0] sm:$0xff] %vm2498, %v4533
      %4662 = vst.msk [vmem:[%s255 + $0x2b8] sm:$0xff] %vm2498, %v4534
      %4663 = vst.msk [vmem:[%s255 + $0x2c0] sm:$0xff] %vm2498, %v4535
      %4664 = vst.msk [vmem:[%s255 + $0x2c8] sm:$0xff] %vm2498, %v4536
      %4665 = vst.msk [vmem:[%s255 + $0x2d0] sm:$0xff] %vm2498, %v4537
      %4666 = vst.msk [vmem:[%s255 + $0x2d8] sm:$0xff] %vm2498, %v4538
      %4667 = vst.msk [vmem:[%s255 + $0x2e0] sm:$0xff] %vm2498, %v4539
      %4668 = vst.msk [vmem:[%s255 + $0x2e8] sm:$0xff] %vm2498, %v4540
      %4669 = vst.msk [vmem:[%s255 + $0x2f0] sm:$0xff] %vm2498, %v4541
      %4670 = vst.msk [vmem:[%s255 + $0x2f8] sm:$0xff] %vm2498, %v4542
      %4671 = vst.msk [vmem:[%s255 + $0x300] sm:$0xff] %vm2498, %v4543
      %4672 = vst.msk [vmem:[%s255 + $0x308] sm:$0xff] %vm2498, %v4544
      %4673 = vst.msk [vmem:[%s255 + $0x310] sm:$0xff] %vm2498, %v4545
      %4674 = vst.msk [vmem:[%s255 + $0x318] sm:$0xff] %vm2498, %v4546
      %4675 = vst.msk [vmem:[%s255 + $0x320] sm:$0xff] %vm2498, %v4547
      %4676 = vst.msk [vmem:[%s255 + $0x328] sm:$0xff] %vm2498, %v4548
      %4677 = vst.msk [vmem:[%s255 + $0x330] sm:$0xff] %vm2498, %v4549
      %4678 = vst.msk [vmem:[%s255 + $0x338] sm:$0xff] %vm2498, %v4550
      %4679 = vst.msk [vmem:[%s255 + $0x340] sm:$0xff] %vm2498, %v4551
      %4680 = vst.msk [vmem:[%s255 + $0x348] sm:$0xff] %vm2498, %v4552
      %4681 = vst.msk [vmem:[%s255 + $0x350] sm:$0xff] %vm2498, %v4553
      %4682 = vst.msk [vmem:[%s255 + $0x358] sm:$0xff] %vm2498, %v4554
      %4683 = vst.msk [vmem:[%s255 + $0x360] sm:$0xff] %vm2498, %v4555
      %4684 = vst.msk [vmem:[%s255 + $0x368] sm:$0xff] %vm2498, %v4556
      %4685 = vst.msk [vmem:[%s255 + $0x370] sm:$0xff] %vm2498, %v4557
      %4686 = vst.msk [vmem:[%s255 + $0x378] sm:$0xff] %vm2498, %v4558
      %4687 = vst.msk [vmem:[%s255 + $0x380] sm:$0xff] %vm2498, %v4559
      %4688 = vst.msk [vmem:[%s255 + $0x388] sm:$0xff] %vm2498, %v4560
      %4689 = vst.msk [vmem:[%s255 + $0x390] sm:$0xff] %vm2498, %v4561
      %4690 = vst.msk [vmem:[%s255 + $0x398] sm:$0xff] %vm2498, %v4562
      %4691 = vst.msk [vmem:[%s255 + $0x3a0] sm:$0xff] %vm2498, %v4563
      %4692 = vst.msk [vmem:[%s255 + $0x3a8] sm:$0xff] %vm2498, %v4564
      %4693 = vst.msk [vmem:[%s255 + $0x3b0] sm:$0xff] %vm2498, %v4565
      %4694 = vst.msk [vmem:[%s255 + $0x3b8] sm:$0xff] %vm2498, %v4566
      %4695 = vst.msk [vmem:[%s255 + $0x3c0] sm:$0xff] %vm2498, %v4567
      %4696 = vst.msk [vmem:[%s255 + $0x3c8] sm:$0xff] %vm2498, %v4568
      %4697 = vst.msk [vmem:[%s255 + $0x3d0] sm:$0xff] %vm2498, %v4569
      %4698 = vst.msk [vmem:[%s255 + $0x3d8] sm:$0xff] %vm2498, %v4570
      %4699 = vst.msk [vmem:[%s255 + $0x3e0] sm:$0xff] %vm2498, %v4571
      %4700 = vst.msk [vmem:[%s255 + $0x3e8] sm:$0xff] %vm2498, %v4572
      %4701 = vst.msk [vmem:[%s255 + $0x3f0] sm:$0xff] %vm2498, %v4573
      %4702 = vst.msk [vmem:[%s255 + $0x3f8] sm:$0xff] %vm2498, %v4574
      %s4703 = smul.u32 128, %s20
      %p4704 = scmp.lt.s32.totalorder %s19, 1
      %s4705 = scalar_select %p4704, %s19, 1
      %p4706 = scmp.lt.s32.totalorder %s4703, 255
      %s4707 = scalar_select %p4706, %s4703, 255
      %s4708 = smul.addr %s4705, 256
      %s4709 = sadd.s32 %s4707, %s4708
      %s4710 = smul.addr %s4709, 8
      %s4711 = scalar_lea.vmem %s4, %s4710
      // Predicated region
      $region76: #{stgkn_block_forward.3} parent=35 // pred_check
        %p4712 = pneg %p143
      $region77: #{stgkn_block_forward.3} parent=35 // pred_check_branch
        %4714 = sbr.rel (%p4712) target = $region79
      $region78: #{stgkn_block_forward.3} parent=35 // pred_region
        %s4715 = smul.u32 128, %s20
      $region79: #{stgkn_block_forward.3} parent=35 // pred_fallthru
        _
    $region36: #{stgkn_block_forward.3} parent=5 // pred_fallthru
      _
    %p4716 = scmp.le.s32.totalorder 2, %s10
    // Predicated region
    $region80: #{stgkn_block_forward.3} parent=5 // pred_check
      %p4717 = pneg %p4716
    $region81: #{stgkn_block_forward.3} parent=5 // pred_check_branch
      %4719 = sbr.rel (%p4717) target = $region83
    $region82: #{stgkn_block_forward.3} parent=5 // pred_region
      %s4720 = ssub.s32 %s10, 2
      // Predicated region
      $region84: #{stgkn_block_forward.3} parent=82 // pred_check
        %p4721 = pneg %p149
      $region85: #{stgkn_block_forward.3} parent=82 // pred_check_branch
        %4723 = sbr.rel (%p4721) target = $region87
      $region86: #{stgkn_block_forward.3} parent=82 // pred_region
        %s4724 = smul.u32 128, %s22
        %p4725 = scmp.lt.s32.totalorder %s21, 1
        %s4726 = scalar_select %p4725, %s21, 1
        %p4727 = scmp.lt.s32.totalorder %s4724, 255
        %s4728 = scalar_select %p4727, %s4724, 255
        %s4729 = smul.addr %s4726, 256
        %s4730 = sadd.s32 %s4728, %s4729
        %s4731 = smul.addr %s4730, 8
        %s4732 = scalar_lea.vmem %s4, %s4731
      $region87: #{stgkn_block_forward.3} parent=82 // pred_fallthru
        _
    $region83: #{stgkn_block_forward.3} parent=5 // pred_fallthru
      _
  $region6: #{stgkn_block_forward.3} parent=0 // loop_footer
    %s14 = sadd.s32 1, %s10
  $region7: #{stgkn_block_forward.3} parent=0 // loop_footer_branch
    %9 = sbr.rel target = $region3
  $region8: #{stgkn_block_forward.3} parent=0 // loop_exit
    _

</llo_original>
